<compile_context>
chip_gen: v5e
topology: v5e:2x2
jax: 0.10.0
libtpu: 0.0.40
codegen_flags: <defaults>
</compile_context>

<pallas_src>
import jax
import jax.numpy as jnp
import numpy as np
from jax import lax
from jax.experimental import pallas as pl
from jax.experimental.pallas import tpu as pltpu


# ----------------------------------------------------------------------------- kernel
def lenet_kernel(x_ref, m1_ref, b1_ref, m2_ref, b2_ref, cs1_ref, cs2_ref,
                 wf1_ref, bf1_ref, wf2_ref, bf2_ref, wf3_ref, bf3_ref,
                 o_ref, xpad_ref, s1_ref, v2_ref):
    # x_ref   : (Bt, 28, 28)        input images (Cin = 1)
    # m1_ref  : (5, 28, 168) bf16   conv1 banded weights, one (W_in, W_out*6) slab per kh
    # b1_ref  : (1, 168) f32        conv1 bias tiled over the 28 output columns
    # m2_ref  : (5, 84, 160) bf16   conv2 banded weights (W_in*6, W_out*16) per kh
    # b2_ref  : (1, 160) f32        conv2 bias tiled over the 10 output columns
    # cs*_ref : bf16                0/1 column-compaction selectors for 2x2 max-pool
    # wf1_ref : (5, 80, 120) bf16   fc1 weights split per pooled row
    # wf2_ref : (120, 84) bf16 ; wf3_ref : (84, 128) bf16 (classes padded to 128 lanes)
    # o_ref   : (Bt, 128) f32       softmax probabilities, lanes 10..127 exactly 0
    # xpad_ref: (Bt*32+8, 28) f32   per-image H-padded input slab (stride 32 per image)
    # s1_ref  : (Bt*32+8, 84) f32   col-pooled conv1 activations (stride 32 per image)
    # v2_ref  : (Bt*16, 80) f32     col-pooled conv2 activations (stride 16 per image)
    f32 = jnp.float32
    bf16 = jnp.bfloat16
    Bt = o_ref.shape[0]
    M1 = Bt * 32                    # conv1 slab rows: 2 pad + 28 image + 2 pad per image
    M2 = Bt * 16                    # conv2 slab rows: 10 valid + 6 don't-care per image

    # ---- assemble the H-padded input slab in VMEM (batch stacked along rows) ----
    xpad_ref[0:2, :] = jnp.zeros((2, 28), f32)
    for b in range(Bt):
        xpad_ref[pl.ds(b * 32 + 2, 28), :] = x_ref[b]
        xpad_ref[pl.ds(b * 32 + 30, 4), :] = jnp.zeros((4, 28), f32)   # halo of b / b+1
    xpad_ref[pl.ds(Bt * 32 + 2, 6), :] = jnp.zeros((6, 28), f32)       # kh-shift tail
    s1_ref[pl.ds(Bt * 32, 8), :] = jnp.zeros((8, 84), f32)             # hygiene for tail reads

    # ---- conv1: 5x5, pad=2, 1 -> 6  (5 banded bf16 MXU matmuls, M = Bt*32) ----
    acc1 = jnp.zeros((M1, 28 * 6), f32)
    for kh in range(5):
        lhs = xpad_ref[pl.ds(kh, M1), :].astype(bf16)                  # (M1, 28)
        acc1 = acc1 + jnp.dot(lhs, m1_ref[kh], preferred_element_type=f32)
    o1 = jnp.maximum(acc1 + b1_ref[...], 0.0)                          # (M1, 168)

    # ---- pool1 columns: lane-shift max + single 0/1 compaction matmul ----
    vm1 = jnp.maximum(o1[:, :27 * 6], o1[:, 6:])                       # (M1, 162)
    u1 = jnp.dot(vm1.astype(bf16), cs1_ref[...], preferred_element_type=f32)  # (M1, 84)
    s1_ref[pl.ds(0, M1), :] = u1

    # ---- conv2: 5x5, valid, 6 -> 16; pool1 row-max folded into stride-2 reads ----
    acc2 = jnp.zeros((M2, 10 * 16), f32)
    for kh in range(5):
        a = s1_ref[pl.ds(2 * kh, M2, stride=2), :]                     # rows 2(m+kh)
        b = s1_ref[pl.ds(2 * kh + 1, M2, stride=2), :]                 # rows 2(m+kh)+1
        p1 = jnp.maximum(a, b).astype(bf16)                            # pool1 rows (m+kh)
        acc2 = acc2 + jnp.dot(p1, m2_ref[kh], preferred_element_type=f32)
    o2 = jnp.maximum(acc2 + b2_ref[...], 0.0)                          # (M2, 160)

    # ---- pool2 columns ----
    vm2 = jnp.maximum(o2[:, :9 * 16], o2[:, 16:])                      # (M2, 144)
    v2_ref[...] = jnp.dot(vm2.astype(bf16), cs2_ref[...],
                          preferred_element_type=f32)                  # (M2, 80)

    # ---- fc1: batch in M; pool2 row-max folded into stride-16 reads ----
    h = jnp.zeros((Bt, 120), f32)
    for r in range(5):
        a = v2_ref[pl.ds(2 * r, Bt, stride=16), :]                     # (Bt, 80)
        b = v2_ref[pl.ds(2 * r + 1, Bt, stride=16), :]
        p2 = jnp.maximum(a, b).astype(bf16)
        h = h + jnp.dot(p2, wf1_ref[r], preferred_element_type=f32)
    h = jnp.maximum(h + bf1_ref[...], 0.0)                             # (Bt, 120)

    # ---- fc2 + relu, fc3 (classes padded to a full 128-lane vreg) ----
    h = jnp.maximum(jnp.dot(h.astype(bf16), wf2_ref[...],
                            preferred_element_type=f32) + bf2_ref[...], 0.0)
    logits = jnp.dot(h.astype(bf16), wf3_ref[...],
                     preferred_element_type=f32) + bf3_ref[...]        # (Bt, 128), pads -1e30 (f32)

    # ---- softmax over the padded class dim; reciprocal on the EUP ----
    m = jnp.max(logits, axis=-1, keepdims=True)
    e = jnp.exp(logits - m)
    o_ref[...] = e * pl.reciprocal(jnp.sum(e, axis=-1, keepdims=True), approx=True)


# ----------------------------------------------------------------------------- host-side prep
def _conv_band(w, w_in_len, w_out_len, pad):
    """Fold the kw window shift + channel contraction of a 5x5 conv into
    (K, W_in*Cin, W_out*Cout) block-banded matrices, one per kh."""
    w = np.asarray(w, np.float32)
    cout, cin, K, _ = w.shape
    m = np.zeros((K, w_in_len * cin, w_out_len * cout), np.float32)
    for kh in range(K):
        for kw in range(K):
            blk = w[:, :, kh, kw].T                          # (cin, cout)
            for ow in range(w_out_len):
                wi = ow + kw - pad
                if 0 <= wi < w_in_len:
                    m[kh, wi * cin:(wi + 1) * cin, ow * cout:(ow + 1) * cout] = blk
    return m


def _col_compact_sel(wo, c):
    """Selector picking the (already kw-maxed) lane (2j)*c + ch into lane j*c + ch."""
    k = (2 * wo - 1) * c
    s = np.zeros((k, wo * c), np.float32)
    for j in range(wo):
        for ch in range(c):
            s[(2 * j) * c + ch, j * c + ch] = 1.0
    return s


def lenet_pallas(x_nchw, params, bt=8):
    """x_nchw: (N, 1, 28, 28) f32. params in PyTorch layout:
    (conv1.w, conv1.b, conv2.w, conv2.b, fc1.w, fc1.b, fc2.w, fc2.b, fc3.w, fc3.b).
    bt must be a multiple of 8 (full 8x128 output vregs)."""
    w1, b1, w2, b2, fw1, fb1, fw2, fb2, fw3, fb3 = params
    N = x_nchw.shape[0]
    assert x_nchw.shape[1:] == (1, 28, 28)
    assert bt % 8 == 0
    bf16 = jnp.bfloat16

    # Cin == 1, so NCHW -> (N, 28, 28) is a free metadata reshape; pad batch to bt.
    n_pad = ((N + bt - 1) // bt) * bt
    x = jnp.reshape(x_nchw.astype(jnp.float32), (N, 28, 28))
    if n_pad != N:
        x = jnp.concatenate([x, jnp.zeros((n_pad - N, 28, 28), jnp.float32)], axis=0)

    # conv weights as banded matmul operands (bf16) + row-tiled f32 biases
    m1 = jnp.asarray(_conv_band(w1, 28, 28, pad=2), dtype=bf16)              # (5, 28, 168)
    m2 = jnp.asarray(_conv_band(w2, 14, 10, pad=0), dtype=bf16)              # (5, 84, 160)
    b1row = jnp.asarray(np.tile(np.asarray(b1, np.float32), 28)[None, :])    # (1, 168)
    b2row = jnp.asarray(np.tile(np.asarray(b2, np.float32), 10)[None, :])    # (1, 160)

    # 2x2 max-pool column-compaction selectors (single selector; kw-max done by lane shift)
    cs1 = jnp.asarray(_col_compact_sel(14, 6), dtype=bf16)                   # (162, 84)
    cs2 = jnp.asarray(_col_compact_sel(5, 16), dtype=bf16)                   # (144, 80)

    # fc1: reorder PyTorch NCHW-flatten columns to the kernel's (oh, ow*16+c) order,
    # split per pooled row so the kernel never needs a lane-crossing flatten.
    wf1 = jnp.asarray(np.transpose(np.asarray(fw1, np.float32).reshape(120, 16, 5, 5),
                                   (2, 3, 1, 0)).reshape(5, 80, 120), dtype=bf16)
    bf1 = jnp.asarray(np.asarray(fb1, np.float32)[None, :])
    wf2 = jnp.asarray(np.asarray(fw2, np.float32).T, dtype=bf16)             # (120, 84)
    bf2 = jnp.asarray(np.asarray(fb2, np.float32)[None, :])

    # fc3 padded to 128 lanes; pad logits biased to -1e30 in the f32 bias (not bf16)
    wf3 = np.zeros((84, 128), np.float32)
    wf3[:, :10] = np.asarray(fw3, np.float32).T
    bf3 = np.full((128,), -1e30, np.float32)
    bf3[:10] = np.asarray(fb3, np.float32)
    wf3 = jnp.asarray(wf3, dtype=bf16)
    bf3 = jnp.asarray(bf3[None, :])

    out = pl.pallas_call(
        lenet_kernel,
        out_shape=jax.ShapeDtypeStruct((n_pad, 128), jnp.float32),
        grid_spec=pltpu.PrefetchScalarGridSpec(
            num_scalar_prefetch=0,
            grid=(n_pad // bt,),
            in_specs=[
                pl.BlockSpec((bt, 28, 28), lambda n: (n, 0, 0)),       # x
                pl.BlockSpec((5, 28, 168), lambda n: (0, 0, 0)),       # m1
                pl.BlockSpec((1, 168), lambda n: (0, 0)),              # b1row
                pl.BlockSpec((5, 84, 160), lambda n: (0, 0, 0)),       # m2
                pl.BlockSpec((1, 160), lambda n: (0, 0)),              # b2row
                pl.BlockSpec((162, 84), lambda n: (0, 0)),             # csel1
                pl.BlockSpec((144, 80), lambda n: (0, 0)),             # csel2
                pl.BlockSpec((5, 80, 120), lambda n: (0, 0, 0)),       # wf1
                pl.BlockSpec((1, 120), lambda n: (0, 0)),              # bf1
                pl.BlockSpec((120, 84), lambda n: (0, 0)),             # wf2
                pl.BlockSpec((1, 84), lambda n: (0, 0)),               # bf2
                pl.BlockSpec((84, 128), lambda n: (0, 0)),             # wf3 (padded)
                pl.BlockSpec((1, 128), lambda n: (0, 0)),              # bf3 (padded, f32)
            ],
            out_specs=pl.BlockSpec((bt, 128), lambda n: (n, 0)),
            scratch_shapes=[
                pltpu.VMEM((bt * 32 + 8, 28), jnp.float32),   # padded input slab
                pltpu.VMEM((bt * 32 + 8, 84), jnp.float32),   # col-pooled conv1 slab
                pltpu.VMEM((bt * 16, 80), jnp.float32),       # col-pooled conv2 slab
            ],
        ),
        # batch blocks are independent -> v7x can shard the grid over its 2 TensorCores
        compiler_params=pltpu.CompilerParams(dimension_semantics=("parallel",)),
    )(x, m1, b1row, m2, b2row, cs1, cs2, wf1, bf1, wf2, bf2, wf3, bf3)

    return out[:N, :10]


# ----------------------------------------------------------------------------- pure-JAX reference
def lenet_reference(x_nchw, params):
    w1, b1, w2, b2, fw1, fb1, fw2, fb2, fw3, fb3 = params
    hi = lax.Precision.HIGHEST
    x = jnp.transpose(x_nchw, (0, 2, 3, 1)).astype(jnp.float32)    # NHWC

    def conv(y, w, b, pad):
        w_hwio = jnp.transpose(w, (2, 3, 1, 0)).astype(jnp.float32)
        out = lax.conv_general_dilated(
            y, w_hwio, window_strides=(1, 1), padding=((pad, pad), (pad, pad)),
            dimension_numbers=("NHWC", "HWIO", "NHWC"), precision=hi)
        return out + b

    def pool(y):
        return lax.reduce_window(y, -jnp.inf, lax.max,
                                 (1, 2, 2, 1), (1, 2, 2, 1), "VALID")

    out = pool(jax.nn.relu(conv(x, w1, b1, 2)))                    # (N, 14, 14, 6)
    out = pool(jax.nn.relu(conv(out, w2, b2, 0)))                  # (N, 5, 5, 16)
    out = jnp.transpose(out, (0, 3, 1, 2)).reshape(out.shape[0], -1)   # PyTorch NCHW flatten
    out = jax.nn.relu(jnp.dot(out, fw1.T, precision=hi) + fb1)
    out = jax.nn.relu(jnp.dot(out, fw2.T, precision=hi) + fb2)
    logits = jnp.dot(out, fw3.T, precision=hi) + fb3
    return jax.nn.softmax(logits, axis=1)


# ----------------------------------------------------------------------------- main
if __name__ == "__main__":
    key = jax.random.PRNGKey(0)
    ks = jax.random.split(key, 12)
    N = 16
    x = jax.random.normal(ks[0], (N, 1, 28, 28), jnp.float32)

    # parameters in PyTorch layout
    w1 = jax.random.normal(ks[1], (6, 1, 5, 5), jnp.float32) * 0.2
    b1 = jax.random.normal(ks[2], (6,), jnp.float32) * 0.1
    w2 = jax.random.normal(ks[3], (16, 6, 5, 5), jnp.float32) * 0.1
    b2 = jax.random.normal(ks[4], (16,), jnp.float32) * 0.1
    fw1 = jax.random.normal(ks[5], (120, 400), jnp.float32) * 0.05
    fb1 = jax.random.normal(ks[6], (120,), jnp.float32) * 0.1
    fw2 = jax.random.normal(ks[7], (84, 120), jnp.float32) * 0.1
    fb2 = jax.random.normal(ks[8], (84,), jnp.float32) * 0.1
    fw3 = jax.random.normal(ks[9], (10, 84), jnp.float32) * 0.1
    fb3 = jax.random.normal(ks[10], (10,), jnp.float32) * 0.1
    params = (w1, b1, w2, b2, fw1, fb1, fw2, fb2, fw3, fb3)

    out = jax.block_until_ready(lenet_pallas(x, params, bt=8))
    ref = jax.block_until_ready(lenet_reference(x, params))

    assert out.shape == (N, 10)
    assert bool(jnp.all(jnp.isfinite(out)))
    assert bool(jnp.allclose(jnp.sum(out, axis=1), 1.0, atol=5e-3))
    max_err = jnp.max(jnp.abs(out - ref))
    # kernel matmuls run in single-pass bf16 (f32 accumulation) -> bf16-level tolerance
    assert bool(jnp.allclose(out, ref, atol=3e-2)), f"max err {max_err}"

    print("KERNEL_OK")
</pallas_src>

<mosaic_0001>
module attributes {stable_mosaic.version = 11 : i64} {
  func.func @lenet_kernel(%arg0: i32, %arg1: memref<8x28x28xf32, #tpu.memory_space<vmem>>, %arg2: memref<5x28x168xbf16, #tpu.memory_space<vmem>>, %arg3: memref<1x168xf32, #tpu.memory_space<vmem>>, %arg4: memref<5x84x160xbf16, #tpu.memory_space<vmem>>, %arg5: memref<1x160xf32, #tpu.memory_space<vmem>>, %arg6: memref<162x84xbf16, #tpu.memory_space<vmem>>, %arg7: memref<144x80xbf16, #tpu.memory_space<vmem>>, %arg8: memref<5x80x120xbf16, #tpu.memory_space<vmem>>, %arg9: memref<1x120xf32, #tpu.memory_space<vmem>>, %arg10: memref<120x84xbf16, #tpu.memory_space<vmem>>, %arg11: memref<1x84xf32, #tpu.memory_space<vmem>>, %arg12: memref<84x128xbf16, #tpu.memory_space<vmem>>, %arg13: memref<1x128xf32, #tpu.memory_space<vmem>>, %arg14: memref<8x128xf32, #tpu.memory_space<vmem>>, %arg15: memref<264x28xf32, #tpu.memory_space<vmem>>, %arg16: memref<264x84xf32, #tpu.memory_space<vmem>>, %arg17: memref<128x80xf32, #tpu.memory_space<vmem>>) attributes {dimension_semantics = [#tpu.dimension_semantics<parallel>], iteration_bounds = array<i64: 2>, scalar_prefetch = 0 : i64, scratch_operands = 3 : i64, tpu.core_type = #tpu.core_type<tc>, window_params = [{transform_indices = @transform_0, window_bounds = array<i64: 8, 28, 28>}, {pipeline_mode = #tpu.pipeline_mode<synchronous>, transform_indices = @transform_1, window_bounds = array<i64: 5, 28, 168>}, {pipeline_mode = #tpu.pipeline_mode<synchronous>, transform_indices = @transform_2, window_bounds = array<i64: 1, 168>}, {pipeline_mode = #tpu.pipeline_mode<synchronous>, transform_indices = @transform_3, window_bounds = array<i64: 5, 84, 160>}, {pipeline_mode = #tpu.pipeline_mode<synchronous>, transform_indices = @transform_4, window_bounds = array<i64: 1, 160>}, {pipeline_mode = #tpu.pipeline_mode<synchronous>, transform_indices = @transform_5, window_bounds = array<i64: 162, 84>}, {pipeline_mode = #tpu.pipeline_mode<synchronous>, transform_indices = @transform_6, window_bounds = array<i64: 144, 80>}, {pipeline_mode = #tpu.pipeline_mode<synchronous>, transform_indices = @transform_7, window_bounds = array<i64: 5, 80, 120>}, {pipeline_mode = #tpu.pipeline_mode<synchronous>, transform_indices = @transform_8, window_bounds = array<i64: 1, 120>}, {pipeline_mode = #tpu.pipeline_mode<synchronous>, transform_indices = @transform_9, window_bounds = array<i64: 120, 84>}, {pipeline_mode = #tpu.pipeline_mode<synchronous>, transform_indices = @transform_10, window_bounds = array<i64: 1, 84>}, {pipeline_mode = #tpu.pipeline_mode<synchronous>, transform_indices = @transform_11, window_bounds = array<i64: 84, 128>}, {pipeline_mode = #tpu.pipeline_mode<synchronous>, transform_indices = @transform_12, window_bounds = array<i64: 1, 128>}, {transform_indices = @transform_13, window_bounds = array<i64: 8, 128>}]} {
    %cst = arith.constant 0.000000e+00 : f32
    %0 = vector.broadcast %cst : f32 to vector<2x28xf32>
    %c0 = arith.constant 0 : index
    %c0_0 = arith.constant 0 : index
    %1 = vector.load %arg15[%c0, %c0_0] : memref<264x28xf32, #tpu.memory_space<vmem>>, vector<2x28xf32>
    tpu.vector_store %arg15[%c0, %c0_0], %0 {strides = array<i32>} : memref<264x28xf32, #tpu.memory_space<vmem>>, vector<2x28xf32>,
    %c0_1 = arith.constant 0 : index
    %c0_2 = arith.constant 0 : index
    %c0_3 = arith.constant 0 : index
    %2 = vector.load %arg1[%c0_1, %c0_2, %c0_3] : memref<8x28x28xf32, #tpu.memory_space<vmem>>, vector<1x28x28xf32>
    %3 = vector.shape_cast %2 : vector<1x28x28xf32> to vector<28x28xf32>
    %c2 = arith.constant 2 : index
    %c0_4 = arith.constant 0 : index
    %4 = vector.load %arg15[%c2, %c0_4] : memref<264x28xf32, #tpu.memory_space<vmem>>, vector<28x28xf32>
    tpu.vector_store %arg15[%c2, %c0_4], %3 {strides = array<i32>} : memref<264x28xf32, #tpu.memory_space<vmem>>, vector<28x28xf32>,
    %cst_5 = arith.constant 0.000000e+00 : f32
    %5 = vector.broadcast %cst_5 : f32 to vector<4x28xf32>
    %c30 = arith.constant 30 : index
    %c0_6 = arith.constant 0 : index
    %6 = vector.load %arg15[%c30, %c0_6] : memref<264x28xf32, #tpu.memory_space<vmem>>, vector<4x28xf32>
    tpu.vector_store %arg15[%c30, %c0_6], %5 {strides = array<i32>} : memref<264x28xf32, #tpu.memory_space<vmem>>, vector<4x28xf32>,
    %c1 = arith.constant 1 : index
    %c0_7 = arith.constant 0 : index
    %c0_8 = arith.constant 0 : index
    %7 = vector.load %arg1[%c1, %c0_7, %c0_8] : memref<8x28x28xf32, #tpu.memory_space<vmem>>, vector<1x28x28xf32>
    %8 = vector.shape_cast %7 : vector<1x28x28xf32> to vector<28x28xf32>
    %c34 = arith.constant 34 : index
    %c0_9 = arith.constant 0 : index
    %9 = vector.load %arg15[%c34, %c0_9] : memref<264x28xf32, #tpu.memory_space<vmem>>, vector<28x28xf32>
    tpu.vector_store %arg15[%c34, %c0_9], %8 {strides = array<i32>} : memref<264x28xf32, #tpu.memory_space<vmem>>, vector<28x28xf32>,
    %cst_10 = arith.constant 0.000000e+00 : f32
    %10 = vector.broadcast %cst_10 : f32 to vector<4x28xf32>
    %c62 = arith.constant 62 : index
    %c0_11 = arith.constant 0 : index
    %11 = vector.load %arg15[%c62, %c0_11] : memref<264x28xf32, #tpu.memory_space<vmem>>, vector<4x28xf32>
    tpu.vector_store %arg15[%c62, %c0_11], %10 {strides = array<i32>} : memref<264x28xf32, #tpu.memory_space<vmem>>, vector<4x28xf32>,
    %c2_12 = arith.constant 2 : index
    %c0_13 = arith.constant 0 : index
    %c0_14 = arith.constant 0 : index
    %12 = vector.load %arg1[%c2_12, %c0_13, %c0_14] : memref<8x28x28xf32, #tpu.memory_space<vmem>>, vector<1x28x28xf32>
    %13 = vector.shape_cast %12 : vector<1x28x28xf32> to vector<28x28xf32>
    %c66 = arith.constant 66 : index
    %c0_15 = arith.constant 0 : index
    %14 = vector.load %arg15[%c66, %c0_15] : memref<264x28xf32, #tpu.memory_space<vmem>>, vector<28x28xf32>
    tpu.vector_store %arg15[%c66, %c0_15], %13 {strides = array<i32>} : memref<264x28xf32, #tpu.memory_space<vmem>>, vector<28x28xf32>,
    %cst_16 = arith.constant 0.000000e+00 : f32
    %15 = vector.broadcast %cst_16 : f32 to vector<4x28xf32>
    %c94 = arith.constant 94 : index
    %c0_17 = arith.constant 0 : index
    %16 = vector.load %arg15[%c94, %c0_17] : memref<264x28xf32, #tpu.memory_space<vmem>>, vector<4x28xf32>
    tpu.vector_store %arg15[%c94, %c0_17], %15 {strides = array<i32>} : memref<264x28xf32, #tpu.memory_space<vmem>>, vector<4x28xf32>,
    %c3 = arith.constant 3 : index
    %c0_18 = arith.constant 0 : index
    %c0_19 = arith.constant 0 : index
    %17 = vector.load %arg1[%c3, %c0_18, %c0_19] : memref<8x28x28xf32, #tpu.memory_space<vmem>>, vector<1x28x28xf32>
    %18 = vector.shape_cast %17 : vector<1x28x28xf32> to vector<28x28xf32>
    %c98 = arith.constant 98 : index
    %c0_20 = arith.constant 0 : index
    %19 = vector.load %arg15[%c98, %c0_20] : memref<264x28xf32, #tpu.memory_space<vmem>>, vector<28x28xf32>
    tpu.vector_store %arg15[%c98, %c0_20], %18 {strides = array<i32>} : memref<264x28xf32, #tpu.memory_space<vmem>>, vector<28x28xf32>,
    %cst_21 = arith.constant 0.000000e+00 : f32
    %20 = vector.broadcast %cst_21 : f32 to vector<4x28xf32>
    %c126 = arith.constant 126 : index
    %c0_22 = arith.constant 0 : index
    %21 = vector.load %arg15[%c126, %c0_22] : memref<264x28xf32, #tpu.memory_space<vmem>>, vector<4x28xf32>
    tpu.vector_store %arg15[%c126, %c0_22], %20 {strides = array<i32>} : memref<264x28xf32, #tpu.memory_space<vmem>>, vector<4x28xf32>,
    %c4 = arith.constant 4 : index
    %c0_23 = arith.constant 0 : index
    %c0_24 = arith.constant 0 : index
    %22 = vector.load %arg1[%c4, %c0_23, %c0_24] : memref<8x28x28xf32, #tpu.memory_space<vmem>>, vector<1x28x28xf32>
    %23 = vector.shape_cast %22 : vector<1x28x28xf32> to vector<28x28xf32>
    %c130 = arith.constant 130 : index
    %c0_25 = arith.constant 0 : index
    %24 = vector.load %arg15[%c130, %c0_25] : memref<264x28xf32, #tpu.memory_space<vmem>>, vector<28x28xf32>
    tpu.vector_store %arg15[%c130, %c0_25], %23 {strides = array<i32>} : memref<264x28xf32, #tpu.memory_space<vmem>>, vector<28x28xf32>,
    %cst_26 = arith.constant 0.000000e+00 : f32
    %25 = vector.broadcast %cst_26 : f32 to vector<4x28xf32>
    %c158 = arith.constant 158 : index
    %c0_27 = arith.constant 0 : index
    %26 = vector.load %arg15[%c158, %c0_27] : memref<264x28xf32, #tpu.memory_space<vmem>>, vector<4x28xf32>
    tpu.vector_store %arg15[%c158, %c0_27], %25 {strides = array<i32>} : memref<264x28xf32, #tpu.memory_space<vmem>>, vector<4x28xf32>,
    %c5 = arith.constant 5 : index
    %c0_28 = arith.constant 0 : index
    %c0_29 = arith.constant 0 : index
    %27 = vector.load %arg1[%c5, %c0_28, %c0_29] : memref<8x28x28xf32, #tpu.memory_space<vmem>>, vector<1x28x28xf32>
    %28 = vector.shape_cast %27 : vector<1x28x28xf32> to vector<28x28xf32>
    %c162 = arith.constant 162 : index
    %c0_30 = arith.constant 0 : index
    %29 = vector.load %arg15[%c162, %c0_30] : memref<264x28xf32, #tpu.memory_space<vmem>>, vector<28x28xf32>
    tpu.vector_store %arg15[%c162, %c0_30], %28 {strides = array<i32>} : memref<264x28xf32, #tpu.memory_space<vmem>>, vector<28x28xf32>,
    %cst_31 = arith.constant 0.000000e+00 : f32
    %30 = vector.broadcast %cst_31 : f32 to vector<4x28xf32>
    %c190 = arith.constant 190 : index
    %c0_32 = arith.constant 0 : index
    %31 = vector.load %arg15[%c190, %c0_32] : memref<264x28xf32, #tpu.memory_space<vmem>>, vector<4x28xf32>
    tpu.vector_store %arg15[%c190, %c0_32], %30 {strides = array<i32>} : memref<264x28xf32, #tpu.memory_space<vmem>>, vector<4x28xf32>,
    %c6 = arith.constant 6 : index
    %c0_33 = arith.constant 0 : index
    %c0_34 = arith.constant 0 : index
    %32 = vector.load %arg1[%c6, %c0_33, %c0_34] : memref<8x28x28xf32, #tpu.memory_space<vmem>>, vector<1x28x28xf32>
    %33 = vector.shape_cast %32 : vector<1x28x28xf32> to vector<28x28xf32>
    %c194 = arith.constant 194 : index
    %c0_35 = arith.constant 0 : index
    %34 = vector.load %arg15[%c194, %c0_35] : memref<264x28xf32, #tpu.memory_space<vmem>>, vector<28x28xf32>
    tpu.vector_store %arg15[%c194, %c0_35], %33 {strides = array<i32>} : memref<264x28xf32, #tpu.memory_space<vmem>>, vector<28x28xf32>,
    %cst_36 = arith.constant 0.000000e+00 : f32
    %35 = vector.broadcast %cst_36 : f32 to vector<4x28xf32>
    %c222 = arith.constant 222 : index
    %c0_37 = arith.constant 0 : index
    %36 = vector.load %arg15[%c222, %c0_37] : memref<264x28xf32, #tpu.memory_space<vmem>>, vector<4x28xf32>
    tpu.vector_store %arg15[%c222, %c0_37], %35 {strides = array<i32>} : memref<264x28xf32, #tpu.memory_space<vmem>>, vector<4x28xf32>,
    %c7 = arith.constant 7 : index
    %c0_38 = arith.constant 0 : index
    %c0_39 = arith.constant 0 : index
    %37 = vector.load %arg1[%c7, %c0_38, %c0_39] : memref<8x28x28xf32, #tpu.memory_space<vmem>>, vector<1x28x28xf32>
    %38 = vector.shape_cast %37 : vector<1x28x28xf32> to vector<28x28xf32>
    %c226 = arith.constant 226 : index
    %c0_40 = arith.constant 0 : index
    %39 = vector.load %arg15[%c226, %c0_40] : memref<264x28xf32, #tpu.memory_space<vmem>>, vector<28x28xf32>
    tpu.vector_store %arg15[%c226, %c0_40], %38 {strides = array<i32>} : memref<264x28xf32, #tpu.memory_space<vmem>>, vector<28x28xf32>,
    %cst_41 = arith.constant 0.000000e+00 : f32
    %40 = vector.broadcast %cst_41 : f32 to vector<4x28xf32>
    %c254 = arith.constant 254 : index
    %c0_42 = arith.constant 0 : index
    %41 = vector.load %arg15[%c254, %c0_42] : memref<264x28xf32, #tpu.memory_space<vmem>>, vector<4x28xf32>
    tpu.vector_store %arg15[%c254, %c0_42], %40 {strides = array<i32>} : memref<264x28xf32, #tpu.memory_space<vmem>>, vector<4x28xf32>,
    %cst_43 = arith.constant 0.000000e+00 : f32
    %42 = vector.broadcast %cst_43 : f32 to vector<6x28xf32>
    %c258 = arith.constant 258 : index
    %c0_44 = arith.constant 0 : index
    %43 = vector.load %arg15[%c258, %c0_44] : memref<264x28xf32, #tpu.memory_space<vmem>>, vector<6x28xf32>
    tpu.vector_store %arg15[%c258, %c0_44], %42 {strides = array<i32>} : memref<264x28xf32, #tpu.memory_space<vmem>>, vector<6x28xf32>,
    %cst_45 = arith.constant 0.000000e+00 : f32
    %44 = vector.broadcast %cst_45 : f32 to vector<8x84xf32>
    %c256 = arith.constant 256 : index
    %c0_46 = arith.constant 0 : index
    %45 = vector.load %arg16[%c256, %c0_46] : memref<264x84xf32, #tpu.memory_space<vmem>>, vector<8x84xf32>
    tpu.vector_store %arg16[%c256, %c0_46], %44 {strides = array<i32>} : memref<264x84xf32, #tpu.memory_space<vmem>>, vector<8x84xf32>,
    %cst_47 = arith.constant 0.000000e+00 : f32
    %46 = vector.broadcast %cst_47 : f32 to vector<256x168xf32>
    %c0_48 = arith.constant 0 : index
    %c0_49 = arith.constant 0 : index
    %47 = vector.load %arg15[%c0_48, %c0_49] : memref<264x28xf32, #tpu.memory_space<vmem>>, vector<256x28xf32>
    %48 = arith.truncf %47 : vector<256x28xf32> to vector<256x28xbf16>
    %c0_50 = arith.constant 0 : index
    %c0_51 = arith.constant 0 : index
    %c0_52 = arith.constant 0 : index
    %49 = vector.load %arg2[%c0_50, %c0_51, %c0_52] : memref<5x28x168xbf16, #tpu.memory_space<vmem>>, vector<1x28x168xbf16>
    %50 = vector.shape_cast %49 : vector<1x28x168xbf16> to vector<28x168xbf16>
    %cst_53 = arith.constant dense<0.000000e+00> : vector<256x168xf32>
    %51 = tpu.matmul %48, %50, %cst_53 {dimension_numbers = #tpu.dot_dimension_numbers<[1], [0], [0], [1], [0, 0, 1, 1], [], []>} : vector<256x28xbf16>, vector<28x168xbf16>, vector<256x168xf32> -> vector<256x168xf32>
    %52 = arith.addf %46, %51 : vector<256x168xf32>
    %c1_54 = arith.constant 1 : index
    %c0_55 = arith.constant 0 : index
    %53 = vector.load %arg15[%c1_54, %c0_55] : memref<264x28xf32, #tpu.memory_space<vmem>>, vector<256x28xf32>
    %54 = arith.truncf %53 : vector<256x28xf32> to vector<256x28xbf16>
    %c1_56 = arith.constant 1 : index
    %c0_57 = arith.constant 0 : index
    %c0_58 = arith.constant 0 : index
    %55 = vector.load %arg2[%c1_56, %c0_57, %c0_58] : memref<5x28x168xbf16, #tpu.memory_space<vmem>>, vector<1x28x168xbf16>
    %56 = vector.shape_cast %55 : vector<1x28x168xbf16> to vector<28x168xbf16>
    %cst_59 = arith.constant dense<0.000000e+00> : vector<256x168xf32>
    %57 = tpu.matmul %54, %56, %cst_59 {dimension_numbers = #tpu.dot_dimension_numbers<[1], [0], [0], [1], [0, 0, 1, 1], [], []>} : vector<256x28xbf16>, vector<28x168xbf16>, vector<256x168xf32> -> vector<256x168xf32>
    %58 = arith.addf %52, %57 : vector<256x168xf32>
    %c2_60 = arith.constant 2 : index
    %c0_61 = arith.constant 0 : index
    %59 = vector.load %arg15[%c2_60, %c0_61] : memref<264x28xf32, #tpu.memory_space<vmem>>, vector<256x28xf32>
    %60 = arith.truncf %59 : vector<256x28xf32> to vector<256x28xbf16>
    %c2_62 = arith.constant 2 : index
    %c0_63 = arith.constant 0 : index
    %c0_64 = arith.constant 0 : index
    %61 = vector.load %arg2[%c2_62, %c0_63, %c0_64] : memref<5x28x168xbf16, #tpu.memory_space<vmem>>, vector<1x28x168xbf16>
    %62 = vector.shape_cast %61 : vector<1x28x168xbf16> to vector<28x168xbf16>
    %cst_65 = arith.constant dense<0.000000e+00> : vector<256x168xf32>
    %63 = tpu.matmul %60, %62, %cst_65 {dimension_numbers = #tpu.dot_dimension_numbers<[1], [0], [0], [1], [0, 0, 1, 1], [], []>} : vector<256x28xbf16>, vector<28x168xbf16>, vector<256x168xf32> -> vector<256x168xf32>
    %64 = arith.addf %58, %63 : vector<256x168xf32>
    %c3_66 = arith.constant 3 : index
    %c0_67 = arith.constant 0 : index
    %65 = vector.load %arg15[%c3_66, %c0_67] : memref<264x28xf32, #tpu.memory_space<vmem>>, vector<256x28xf32>
    %66 = arith.truncf %65 : vector<256x28xf32> to vector<256x28xbf16>
    %c3_68 = arith.constant 3 : index
    %c0_69 = arith.constant 0 : index
    %c0_70 = arith.constant 0 : index
    %67 = vector.load %arg2[%c3_68, %c0_69, %c0_70] : memref<5x28x168xbf16, #tpu.memory_space<vmem>>, vector<1x28x168xbf16>
    %68 = vector.shape_cast %67 : vector<1x28x168xbf16> to vector<28x168xbf16>
    %cst_71 = arith.constant dense<0.000000e+00> : vector<256x168xf32>
    %69 = tpu.matmul %66, %68, %cst_71 {dimension_numbers = #tpu.dot_dimension_numbers<[1], [0], [0], [1], [0, 0, 1, 1], [], []>} : vector<256x28xbf16>, vector<28x168xbf16>, vector<256x168xf32> -> vector<256x168xf32>
    %70 = arith.addf %64, %69 : vector<256x168xf32>
    %c4_72 = arith.constant 4 : index
    %c0_73 = arith.constant 0 : index
    %71 = vector.load %arg15[%c4_72, %c0_73] : memref<264x28xf32, #tpu.memory_space<vmem>>, vector<256x28xf32>
    %72 = arith.truncf %71 : vector<256x28xf32> to vector<256x28xbf16>
    %c4_74 = arith.constant 4 : index
    %c0_75 = arith.constant 0 : index
    %c0_76 = arith.constant 0 : index
    %73 = vector.load %arg2[%c4_74, %c0_75, %c0_76] : memref<5x28x168xbf16, #tpu.memory_space<vmem>>, vector<1x28x168xbf16>
    %74 = vector.shape_cast %73 : vector<1x28x168xbf16> to vector<28x168xbf16>
    %cst_77 = arith.constant dense<0.000000e+00> : vector<256x168xf32>
    %75 = tpu.matmul %72, %74, %cst_77 {dimension_numbers = #tpu.dot_dimension_numbers<[1], [0], [0], [1], [0, 0, 1, 1], [], []>} : vector<256x28xbf16>, vector<28x168xbf16>, vector<256x168xf32> -> vector<256x168xf32>
    %76 = arith.addf %70, %75 : vector<256x168xf32>
    %c0_78 = arith.constant 0 : index
    %c0_79 = arith.constant 0 : index
    %77 = vector.load %arg3[%c0_78, %c0_79] : memref<1x168xf32, #tpu.memory_space<vmem>>, vector<1x168xf32>
    %78 = vector.broadcast %77 : vector<1x168xf32> to vector<256x168xf32>
    %79 = arith.addf %76, %78 : vector<256x168xf32>
    %cst_80 = arith.constant 0.000000e+00 : f32
    %80 = vector.broadcast %cst_80 : f32 to vector<256x168xf32>
    %81 = arith.maximumf %79, %80 : vector<256x168xf32>
    %82 = vector.extract_strided_slice %81 {offsets = [0, 0], sizes = [256, 162], strides = [1, 1]} : vector<256x168xf32> to vector<256x162xf32>
    %83 = vector.extract_strided_slice %81 {offsets = [0, 6], sizes = [256, 162], strides = [1, 1]} : vector<256x168xf32> to vector<256x162xf32>
    %84 = arith.maximumf %82, %83 : vector<256x162xf32>
    %85 = arith.truncf %84 : vector<256x162xf32> to vector<256x162xbf16>
    %c0_81 = arith.constant 0 : index
    %c0_82 = arith.constant 0 : index
    %86 = vector.load %arg6[%c0_81, %c0_82] : memref<162x84xbf16, #tpu.memory_space<vmem>>, vector<162x84xbf16>
    %cst_83 = arith.constant dense<0.000000e+00> : vector<256x84xf32>
    %87 = tpu.matmul %85, %86, %cst_83 {dimension_numbers = #tpu.dot_dimension_numbers<[1], [0], [0], [1], [0, 0, 1, 1], [], []>} : vector<256x162xbf16>, vector<162x84xbf16>, vector<256x84xf32> -> vector<256x84xf32>
    %c0_84 = arith.constant 0 : index
    %c0_85 = arith.constant 0 : index
    %88 = vector.load %arg16[%c0_84, %c0_85] : memref<264x84xf32, #tpu.memory_space<vmem>>, vector<256x84xf32>
    tpu.vector_store %arg16[%c0_84, %c0_85], %87 {strides = array<i32>} : memref<264x84xf32, #tpu.memory_space<vmem>>, vector<256x84xf32>,
    %cst_86 = arith.constant 0.000000e+00 : f32
    %89 = vector.broadcast %cst_86 : f32 to vector<128x160xf32>
    %c0_87 = arith.constant 0 : index
    %c0_88 = arith.constant 0 : index
    %90 = tpu.strided_load %arg16[%c0_87, %c0_88] {strides = array<i32: 2, 1>} : memref<264x84xf32, #tpu.memory_space<vmem>>, vector<128x84xf32>
    %c1_89 = arith.constant 1 : index
    %c0_90 = arith.constant 0 : index
    %91 = tpu.strided_load %arg16[%c1_89, %c0_90] {strides = array<i32: 2, 1>} : memref<264x84xf32, #tpu.memory_space<vmem>>, vector<128x84xf32>
    %92 = arith.maximumf %90, %91 : vector<128x84xf32>
    %93 = arith.truncf %92 : vector<128x84xf32> to vector<128x84xbf16>
    %c0_91 = arith.constant 0 : index
    %c0_92 = arith.constant 0 : index
    %c0_93 = arith.constant 0 : index
    %94 = vector.load %arg4[%c0_91, %c0_92, %c0_93] : memref<5x84x160xbf16, #tpu.memory_space<vmem>>, vector<1x84x160xbf16>
    %95 = vector.shape_cast %94 : vector<1x84x160xbf16> to vector<84x160xbf16>
    %cst_94 = arith.constant dense<0.000000e+00> : vector<128x160xf32>
    %96 = tpu.matmul %93, %95, %cst_94 {dimension_numbers = #tpu.dot_dimension_numbers<[1], [0], [0], [1], [0, 0, 1, 1], [], []>} : vector<128x84xbf16>, vector<84x160xbf16>, vector<128x160xf32> -> vector<128x160xf32>
    %97 = arith.addf %89, %96 : vector<128x160xf32>
    %c2_95 = arith.constant 2 : index
    %c0_96 = arith.constant 0 : index
    %98 = tpu.strided_load %arg16[%c2_95, %c0_96] {strides = array<i32: 2, 1>} : memref<264x84xf32, #tpu.memory_space<vmem>>, vector<128x84xf32>
    %c3_97 = arith.constant 3 : index
    %c0_98 = arith.constant 0 : index
    %99 = tpu.strided_load %arg16[%c3_97, %c0_98] {strides = array<i32: 2, 1>} : memref<264x84xf32, #tpu.memory_space<vmem>>, vector<128x84xf32>
    %100 = arith.maximumf %98, %99 : vector<128x84xf32>
    %101 = arith.truncf %100 : vector<128x84xf32> to vector<128x84xbf16>
    %c1_99 = arith.constant 1 : index
    %c0_100 = arith.constant 0 : index
    %c0_101 = arith.constant 0 : index
    %102 = vector.load %arg4[%c1_99, %c0_100, %c0_101] : memref<5x84x160xbf16, #tpu.memory_space<vmem>>, vector<1x84x160xbf16>
    %103 = vector.shape_cast %102 : vector<1x84x160xbf16> to vector<84x160xbf16>
    %cst_102 = arith.constant dense<0.000000e+00> : vector<128x160xf32>
    %104 = tpu.matmul %101, %103, %cst_102 {dimension_numbers = #tpu.dot_dimension_numbers<[1], [0], [0], [1], [0, 0, 1, 1], [], []>} : vector<128x84xbf16>, vector<84x160xbf16>, vector<128x160xf32> -> vector<128x160xf32>
    %105 = arith.addf %97, %104 : vector<128x160xf32>
    %c4_103 = arith.constant 4 : index
    %c0_104 = arith.constant 0 : index
    %106 = tpu.strided_load %arg16[%c4_103, %c0_104] {strides = array<i32: 2, 1>} : memref<264x84xf32, #tpu.memory_space<vmem>>, vector<128x84xf32>
    %c5_105 = arith.constant 5 : index
    %c0_106 = arith.constant 0 : index
    %107 = tpu.strided_load %arg16[%c5_105, %c0_106] {strides = array<i32: 2, 1>} : memref<264x84xf32, #tpu.memory_space<vmem>>, vector<128x84xf32>
    %108 = arith.maximumf %106, %107 : vector<128x84xf32>
    %109 = arith.truncf %108 : vector<128x84xf32> to vector<128x84xbf16>
    %c2_107 = arith.constant 2 : index
    %c0_108 = arith.constant 0 : index
    %c0_109 = arith.constant 0 : index
    %110 = vector.load %arg4[%c2_107, %c0_108, %c0_109] : memref<5x84x160xbf16, #tpu.memory_space<vmem>>, vector<1x84x160xbf16>
    %111 = vector.shape_cast %110 : vector<1x84x160xbf16> to vector<84x160xbf16>
    %cst_110 = arith.constant dense<0.000000e+00> : vector<128x160xf32>
    %112 = tpu.matmul %109, %111, %cst_110 {dimension_numbers = #tpu.dot_dimension_numbers<[1], [0], [0], [1], [0, 0, 1, 1], [], []>} : vector<128x84xbf16>, vector<84x160xbf16>, vector<128x160xf32> -> vector<128x160xf32>
    %113 = arith.addf %105, %112 : vector<128x160xf32>
    %c6_111 = arith.constant 6 : index
    %c0_112 = arith.constant 0 : index
    %114 = tpu.strided_load %arg16[%c6_111, %c0_112] {strides = array<i32: 2, 1>} : memref<264x84xf32, #tpu.memory_space<vmem>>, vector<128x84xf32>
    %c7_113 = arith.constant 7 : index
    %c0_114 = arith.constant 0 : index
    %115 = tpu.strided_load %arg16[%c7_113, %c0_114] {strides = array<i32: 2, 1>} : memref<264x84xf32, #tpu.memory_space<vmem>>, vector<128x84xf32>
    %116 = arith.maximumf %114, %115 : vector<128x84xf32>
    %117 = arith.truncf %116 : vector<128x84xf32> to vector<128x84xbf16>
    %c3_115 = arith.constant 3 : index
    %c0_116 = arith.constant 0 : index
    %c0_117 = arith.constant 0 : index
    %118 = vector.load %arg4[%c3_115, %c0_116, %c0_117] : memref<5x84x160xbf16, #tpu.memory_space<vmem>>, vector<1x84x160xbf16>
    %119 = vector.shape_cast %118 : vector<1x84x160xbf16> to vector<84x160xbf16>
    %cst_118 = arith.constant dense<0.000000e+00> : vector<128x160xf32>
    %120 = tpu.matmul %117, %119, %cst_118 {dimension_numbers = #tpu.dot_dimension_numbers<[1], [0], [0], [1], [0, 0, 1, 1], [], []>} : vector<128x84xbf16>, vector<84x160xbf16>, vector<128x160xf32> -> vector<128x160xf32>
    %121 = arith.addf %113, %120 : vector<128x160xf32>
    %c8 = arith.constant 8 : index
    %c0_119 = arith.constant 0 : index
    %122 = tpu.strided_load %arg16[%c8, %c0_119] {strides = array<i32: 2, 1>} : memref<264x84xf32, #tpu.memory_space<vmem>>, vector<128x84xf32>
    %c9 = arith.constant 9 : index
    %c0_120 = arith.constant 0 : index
    %123 = tpu.strided_load %arg16[%c9, %c0_120] {strides = array<i32: 2, 1>} : memref<264x84xf32, #tpu.memory_space<vmem>>, vector<128x84xf32>
    %124 = arith.maximumf %122, %123 : vector<128x84xf32>
    %125 = arith.truncf %124 : vector<128x84xf32> to vector<128x84xbf16>
    %c4_121 = arith.constant 4 : index
    %c0_122 = arith.constant 0 : index
    %c0_123 = arith.constant 0 : index
    %126 = vector.load %arg4[%c4_121, %c0_122, %c0_123] : memref<5x84x160xbf16, #tpu.memory_space<vmem>>, vector<1x84x160xbf16>
    %127 = vector.shape_cast %126 : vector<1x84x160xbf16> to vector<84x160xbf16>
    %cst_124 = arith.constant dense<0.000000e+00> : vector<128x160xf32>
    %128 = tpu.matmul %125, %127, %cst_124 {dimension_numbers = #tpu.dot_dimension_numbers<[1], [0], [0], [1], [0, 0, 1, 1], [], []>} : vector<128x84xbf16>, vector<84x160xbf16>, vector<128x160xf32> -> vector<128x160xf32>
    %129 = arith.addf %121, %128 : vector<128x160xf32>
    %c0_125 = arith.constant 0 : index
    %c0_126 = arith.constant 0 : index
    %130 = vector.load %arg5[%c0_125, %c0_126] : memref<1x160xf32, #tpu.memory_space<vmem>>, vector<1x160xf32>
    %131 = vector.broadcast %130 : vector<1x160xf32> to vector<128x160xf32>
    %132 = arith.addf %129, %131 : vector<128x160xf32>
    %cst_127 = arith.constant 0.000000e+00 : f32
    %133 = vector.broadcast %cst_127 : f32 to vector<128x160xf32>
    %134 = arith.maximumf %132, %133 : vector<128x160xf32>
    %135 = vector.extract_strided_slice %134 {offsets = [0, 0], sizes = [128, 144], strides = [1, 1]} : vector<128x160xf32> to vector<128x144xf32>
    %136 = vector.extract_strided_slice %134 {offsets = [0, 16], sizes = [128, 144], strides = [1, 1]} : vector<128x160xf32> to vector<128x144xf32>
    %137 = arith.maximumf %135, %136 : vector<128x144xf32>
    %138 = arith.truncf %137 : vector<128x144xf32> to vector<128x144xbf16>
    %c0_128 = arith.constant 0 : index
    %c0_129 = arith.constant 0 : index
    %139 = vector.load %arg7[%c0_128, %c0_129] : memref<144x80xbf16, #tpu.memory_space<vmem>>, vector<144x80xbf16>
    %cst_130 = arith.constant dense<0.000000e+00> : vector<128x80xf32>
    %140 = tpu.matmul %138, %139, %cst_130 {dimension_numbers = #tpu.dot_dimension_numbers<[1], [0], [0], [1], [0, 0, 1, 1], [], []>} : vector<128x144xbf16>, vector<144x80xbf16>, vector<128x80xf32> -> vector<128x80xf32>
    %c0_131 = arith.constant 0 : index
    %c0_132 = arith.constant 0 : index
    %141 = vector.load %arg17[%c0_131, %c0_132] : memref<128x80xf32, #tpu.memory_space<vmem>>, vector<128x80xf32>
    tpu.vector_store %arg17[%c0_131, %c0_132], %140 {strides = array<i32>} : memref<128x80xf32, #tpu.memory_space<vmem>>, vector<128x80xf32>,
    %cst_133 = arith.constant 0.000000e+00 : f32
    %142 = vector.broadcast %cst_133 : f32 to vector<8x120xf32>
    %c0_134 = arith.constant 0 : index
    %c0_135 = arith.constant 0 : index
    %143 = tpu.strided_load %arg17[%c0_134, %c0_135] {strides = array<i32: 16, 1>} : memref<128x80xf32, #tpu.memory_space<vmem>>, vector<8x80xf32>
    %c1_136 = arith.constant 1 : index
    %c0_137 = arith.constant 0 : index
    %144 = tpu.strided_load %arg17[%c1_136, %c0_137] {strides = array<i32: 16, 1>} : memref<128x80xf32, #tpu.memory_space<vmem>>, vector<8x80xf32>
    %145 = arith.maximumf %143, %144 : vector<8x80xf32>
    %146 = arith.truncf %145 : vector<8x80xf32> to vector<8x80xbf16>
    %c0_138 = arith.constant 0 : index
    %c0_139 = arith.constant 0 : index
    %c0_140 = arith.constant 0 : index
    %147 = vector.load %arg8[%c0_138, %c0_139, %c0_140] : memref<5x80x120xbf16, #tpu.memory_space<vmem>>, vector<1x80x120xbf16>
    %148 = vector.shape_cast %147 : vector<1x80x120xbf16> to vector<80x120xbf16>
    %cst_141 = arith.constant dense<0.000000e+00> : vector<8x120xf32>
    %149 = tpu.matmul %146, %148, %cst_141 {dimension_numbers = #tpu.dot_dimension_numbers<[1], [0], [0], [1], [0, 0, 1, 1], [], []>} : vector<8x80xbf16>, vector<80x120xbf16>, vector<8x120xf32> -> vector<8x120xf32>
    %150 = arith.addf %142, %149 : vector<8x120xf32>
    %c2_142 = arith.constant 2 : index
    %c0_143 = arith.constant 0 : index
    %151 = tpu.strided_load %arg17[%c2_142, %c0_143] {strides = array<i32: 16, 1>} : memref<128x80xf32, #tpu.memory_space<vmem>>, vector<8x80xf32>
    %c3_144 = arith.constant 3 : index
    %c0_145 = arith.constant 0 : index
    %152 = tpu.strided_load %arg17[%c3_144, %c0_145] {strides = array<i32: 16, 1>} : memref<128x80xf32, #tpu.memory_space<vmem>>, vector<8x80xf32>
    %153 = arith.maximumf %151, %152 : vector<8x80xf32>
    %154 = arith.truncf %153 : vector<8x80xf32> to vector<8x80xbf16>
    %c1_146 = arith.constant 1 : index
    %c0_147 = arith.constant 0 : index
    %c0_148 = arith.constant 0 : index
    %155 = vector.load %arg8[%c1_146, %c0_147, %c0_148] : memref<5x80x120xbf16, #tpu.memory_space<vmem>>, vector<1x80x120xbf16>
    %156 = vector.shape_cast %155 : vector<1x80x120xbf16> to vector<80x120xbf16>
    %cst_149 = arith.constant dense<0.000000e+00> : vector<8x120xf32>
    %157 = tpu.matmul %154, %156, %cst_149 {dimension_numbers = #tpu.dot_dimension_numbers<[1], [0], [0], [1], [0, 0, 1, 1], [], []>} : vector<8x80xbf16>, vector<80x120xbf16>, vector<8x120xf32> -> vector<8x120xf32>
    %158 = arith.addf %150, %157 : vector<8x120xf32>
    %c4_150 = arith.constant 4 : index
    %c0_151 = arith.constant 0 : index
    %159 = tpu.strided_load %arg17[%c4_150, %c0_151] {strides = array<i32: 16, 1>} : memref<128x80xf32, #tpu.memory_space<vmem>>, vector<8x80xf32>
    %c5_152 = arith.constant 5 : index
    %c0_153 = arith.constant 0 : index
    %160 = tpu.strided_load %arg17[%c5_152, %c0_153] {strides = array<i32: 16, 1>} : memref<128x80xf32, #tpu.memory_space<vmem>>, vector<8x80xf32>
    %161 = arith.maximumf %159, %160 : vector<8x80xf32>
    %162 = arith.truncf %161 : vector<8x80xf32> to vector<8x80xbf16>
    %c2_154 = arith.constant 2 : index
    %c0_155 = arith.constant 0 : index
    %c0_156 = arith.constant 0 : index
    %163 = vector.load %arg8[%c2_154, %c0_155, %c0_156] : memref<5x80x120xbf16, #tpu.memory_space<vmem>>, vector<1x80x120xbf16>
    %164 = vector.shape_cast %163 : vector<1x80x120xbf16> to vector<80x120xbf16>
    %cst_157 = arith.constant dense<0.000000e+00> : vector<8x120xf32>
    %165 = tpu.matmul %162, %164, %cst_157 {dimension_numbers = #tpu.dot_dimension_numbers<[1], [0], [0], [1], [0, 0, 1, 1], [], []>} : vector<8x80xbf16>, vector<80x120xbf16>, vector<8x120xf32> -> vector<8x120xf32>
    %166 = arith.addf %158, %165 : vector<8x120xf32>
    %c6_158 = arith.constant 6 : index
    %c0_159 = arith.constant 0 : index
    %167 = tpu.strided_load %arg17[%c6_158, %c0_159] {strides = array<i32: 16, 1>} : memref<128x80xf32, #tpu.memory_space<vmem>>, vector<8x80xf32>
    %c7_160 = arith.constant 7 : index
    %c0_161 = arith.constant 0 : index
    %168 = tpu.strided_load %arg17[%c7_160, %c0_161] {strides = array<i32: 16, 1>} : memref<128x80xf32, #tpu.memory_space<vmem>>, vector<8x80xf32>
    %169 = arith.maximumf %167, %168 : vector<8x80xf32>
    %170 = arith.truncf %169 : vector<8x80xf32> to vector<8x80xbf16>
    %c3_162 = arith.constant 3 : index
    %c0_163 = arith.constant 0 : index
    %c0_164 = arith.constant 0 : index
    %171 = vector.load %arg8[%c3_162, %c0_163, %c0_164] : memref<5x80x120xbf16, #tpu.memory_space<vmem>>, vector<1x80x120xbf16>
    %172 = vector.shape_cast %171 : vector<1x80x120xbf16> to vector<80x120xbf16>
    %cst_165 = arith.constant dense<0.000000e+00> : vector<8x120xf32>
    %173 = tpu.matmul %170, %172, %cst_165 {dimension_numbers = #tpu.dot_dimension_numbers<[1], [0], [0], [1], [0, 0, 1, 1], [], []>} : vector<8x80xbf16>, vector<80x120xbf16>, vector<8x120xf32> -> vector<8x120xf32>
    %174 = arith.addf %166, %173 : vector<8x120xf32>
    %c8_166 = arith.constant 8 : index
    %c0_167 = arith.constant 0 : index
    %175 = tpu.strided_load %arg17[%c8_166, %c0_167] {strides = array<i32: 16, 1>} : memref<128x80xf32, #tpu.memory_space<vmem>>, vector<8x80xf32>
    %c9_168 = arith.constant 9 : index
    %c0_169 = arith.constant 0 : index
    %176 = tpu.strided_load %arg17[%c9_168, %c0_169] {strides = array<i32: 16, 1>} : memref<128x80xf32, #tpu.memory_space<vmem>>, vector<8x80xf32>
    %177 = arith.maximumf %175, %176 : vector<8x80xf32>
    %178 = arith.truncf %177 : vector<8x80xf32> to vector<8x80xbf16>
    %c4_170 = arith.constant 4 : index
    %c0_171 = arith.constant 0 : index
    %c0_172 = arith.constant 0 : index
    %179 = vector.load %arg8[%c4_170, %c0_171, %c0_172] : memref<5x80x120xbf16, #tpu.memory_space<vmem>>, vector<1x80x120xbf16>
    %180 = vector.shape_cast %179 : vector<1x80x120xbf16> to vector<80x120xbf16>
    %cst_173 = arith.constant dense<0.000000e+00> : vector<8x120xf32>
    %181 = tpu.matmul %178, %180, %cst_173 {dimension_numbers = #tpu.dot_dimension_numbers<[1], [0], [0], [1], [0, 0, 1, 1], [], []>} : vector<8x80xbf16>, vector<80x120xbf16>, vector<8x120xf32> -> vector<8x120xf32>
    %182 = arith.addf %174, %181 : vector<8x120xf32>
    %c0_174 = arith.constant 0 : index
    %c0_175 = arith.constant 0 : index
    %183 = vector.load %arg9[%c0_174, %c0_175] : memref<1x120xf32, #tpu.memory_space<vmem>>, vector<1x120xf32>
    %184 = vector.broadcast %183 : vector<1x120xf32> to vector<8x120xf32>
    %185 = arith.addf %182, %184 : vector<8x120xf32>
    %cst_176 = arith.constant 0.000000e+00 : f32
    %186 = vector.broadcast %cst_176 : f32 to vector<8x120xf32>
    %187 = arith.maximumf %185, %186 : vector<8x120xf32>
    %188 = arith.truncf %187 : vector<8x120xf32> to vector<8x120xbf16>
    %c0_177 = arith.constant 0 : index
    %c0_178 = arith.constant 0 : index
    %189 = vector.load %arg10[%c0_177, %c0_178] : memref<120x84xbf16, #tpu.memory_space<vmem>>, vector<120x84xbf16>
    %cst_179 = arith.constant dense<0.000000e+00> : vector<8x84xf32>
    %190 = tpu.matmul %188, %189, %cst_179 {dimension_numbers = #tpu.dot_dimension_numbers<[1], [0], [0], [1], [0, 0, 1, 1], [], []>} : vector<8x120xbf16>, vector<120x84xbf16>, vector<8x84xf32> -> vector<8x84xf32>
    %c0_180 = arith.constant 0 : index
    %c0_181 = arith.constant 0 : index
    %191 = vector.load %arg11[%c0_180, %c0_181] : memref<1x84xf32, #tpu.memory_space<vmem>>, vector<1x84xf32>
    %192 = vector.broadcast %191 : vector<1x84xf32> to vector<8x84xf32>
    %193 = arith.addf %190, %192 : vector<8x84xf32>
    %cst_182 = arith.constant 0.000000e+00 : f32
    %194 = vector.broadcast %cst_182 : f32 to vector<8x84xf32>
    %195 = arith.maximumf %193, %194 : vector<8x84xf32>
    %196 = arith.truncf %195 : vector<8x84xf32> to vector<8x84xbf16>
    %c0_183 = arith.constant 0 : index
    %c0_184 = arith.constant 0 : index
    %197 = vector.load %arg12[%c0_183, %c0_184] : memref<84x128xbf16, #tpu.memory_space<vmem>>, vector<84x128xbf16>
    %cst_185 = arith.constant dense<0.000000e+00> : vector<8x128xf32>
    %198 = tpu.matmul %196, %197, %cst_185 {dimension_numbers = #tpu.dot_dimension_numbers<[1], [0], [0], [1], [0, 0, 1, 1], [], []>} : vector<8x84xbf16>, vector<84x128xbf16>, vector<8x128xf32> -> vector<8x128xf32>
    %c0_186 = arith.constant 0 : index
    %c0_187 = arith.constant 0 : index
    %199 = vector.load %arg13[%c0_186, %c0_187] : memref<1x128xf32, #tpu.memory_space<vmem>>, vector<1x128xf32>
    %200 = vector.broadcast %199 : vector<1x128xf32> to vector<8x128xf32>
    %201 = arith.addf %198, %200 : vector<8x128xf32>
    %cst_188 = arith.constant dense<0xFF800000> : vector<8xf32>
    %202 = vector.multi_reduction <maximumf>, %201, %cst_188 [1] : vector<8x128xf32> to vector<8xf32>
    %203 = vector.shape_cast %202 : vector<8xf32> to vector<8x1xf32>
    %204 = vector.broadcast %203 : vector<8x1xf32> to vector<8x128xf32>
    %205 = arith.subf %201, %204 : vector<8x128xf32>
    %206 = math.exp %205 : vector<8x128xf32>
    %cst_189 = arith.constant dense<0.000000e+00> : vector<8xf32>
    %207 = vector.multi_reduction <add>, %206, %cst_189 [1] : vector<8x128xf32> to vector<8xf32>
    %208 = vector.shape_cast %207 : vector<8xf32> to vector<8x1xf32>
    %209 = tpu.reciprocal %208 {approx = true} : vector<8x1xf32> -> vector<8x1xf32>
    %210 = vector.broadcast %209 : vector<8x1xf32> to vector<8x128xf32>
    %211 = arith.mulf %206, %210 : vector<8x128xf32>
    %c0_190 = arith.constant 0 : index
    %c0_191 = arith.constant 0 : index
    %212 = vector.load %arg14[%c0_190, %c0_191] : memref<8x128xf32, #tpu.memory_space<vmem>>, vector<8x128xf32>
    tpu.vector_store %arg14[%c0_190, %c0_191], %211 {strides = array<i32>} : memref<8x128xf32, #tpu.memory_space<vmem>>, vector<8x128xf32>,
    return
  }
  func.func @transform_0(%arg0: i32) -> (i32, i32, i32) {
    %c0_i32 = arith.constant 0 : i32
    %c0_i32_0 = arith.constant 0 : i32
    %c0_i32_1 = arith.constant 0 : i32
    return %arg0, %c0_i32, %c0_i32_0 : i32, i32, i32
  }
  func.func @transform_1(%arg0: i32) -> (i32, i32, i32) {
    %c0_i32 = arith.constant 0 : i32
    %c0_i32_0 = arith.constant 0 : i32
    %c0_i32_1 = arith.constant 0 : i32
    %c0_i32_2 = arith.constant 0 : i32
    return %c0_i32, %c0_i32_0, %c0_i32_1 : i32, i32, i32
  }
  func.func @transform_2(%arg0: i32) -> (i32, i32) {
    %c0_i32 = arith.constant 0 : i32
    %c0_i32_0 = arith.constant 0 : i32
    %c0_i32_1 = arith.constant 0 : i32
    return %c0_i32, %c0_i32_0 : i32, i32
  }
  func.func @transform_3(%arg0: i32) -> (i32, i32, i32) {
    %c0_i32 = arith.constant 0 : i32
    %c0_i32_0 = arith.constant 0 : i32
    %c0_i32_1 = arith.constant 0 : i32
    %c0_i32_2 = arith.constant 0 : i32
    return %c0_i32, %c0_i32_0, %c0_i32_1 : i32, i32, i32
  }
  func.func @transform_4(%arg0: i32) -> (i32, i32) {
    %c0_i32 = arith.constant 0 : i32
    %c0_i32_0 = arith.constant 0 : i32
    %c0_i32_1 = arith.constant 0 : i32
    return %c0_i32, %c0_i32_0 : i32, i32
  }
  func.func @transform_5(%arg0: i32) -> (i32, i32) {
    %c0_i32 = arith.constant 0 : i32
    %c0_i32_0 = arith.constant 0 : i32
    %c0_i32_1 = arith.constant 0 : i32
    return %c0_i32, %c0_i32_0 : i32, i32
  }
  func.func @transform_6(%arg0: i32) -> (i32, i32) {
    %c0_i32 = arith.constant 0 : i32
    %c0_i32_0 = arith.constant 0 : i32
    %c0_i32_1 = arith.constant 0 : i32
    return %c0_i32, %c0_i32_0 : i32, i32
  }
  func.func @transform_7(%arg0: i32) -> (i32, i32, i32) {
    %c0_i32 = arith.constant 0 : i32
    %c0_i32_0 = arith.constant 0 : i32
    %c0_i32_1 = arith.constant 0 : i32
    %c0_i32_2 = arith.constant 0 : i32
    return %c0_i32, %c0_i32_0, %c0_i32_1 : i32, i32, i32
  }
  func.func @transform_8(%arg0: i32) -> (i32, i32) {
    %c0_i32 = arith.constant 0 : i32
    %c0_i32_0 = arith.constant 0 : i32
    %c0_i32_1 = arith.constant 0 : i32
    return %c0_i32, %c0_i32_0 : i32, i32
  }
  func.func @transform_9(%arg0: i32) -> (i32, i32) {
    %c0_i32 = arith.constant 0 : i32
    %c0_i32_0 = arith.constant 0 : i32
    %c0_i32_1 = arith.constant 0 : i32
    return %c0_i32, %c0_i32_0 : i32, i32
  }
  func.func @transform_10(%arg0: i32) -> (i32, i32) {
    %c0_i32 = arith.constant 0 : i32
    %c0_i32_0 = arith.constant 0 : i32
    %c0_i32_1 = arith.constant 0 : i32
    return %c0_i32, %c0_i32_0 : i32, i32
  }
  func.func @transform_11(%arg0: i32) -> (i32, i32) {
    %c0_i32 = arith.constant 0 : i32
    %c0_i32_0 = arith.constant 0 : i32
    %c0_i32_1 = arith.constant 0 : i32
    return %c0_i32, %c0_i32_0 : i32, i32
  }
  func.func @transform_12(%arg0: i32) -> (i32, i32) {
    %c0_i32 = arith.constant 0 : i32
    %c0_i32_0 = arith.constant 0 : i32
    %c0_i32_1 = arith.constant 0 : i32
    return %c0_i32, %c0_i32_0 : i32, i32
  }
  func.func @transform_13(%arg0: i32) -> (i32, i32) {
    %c0_i32 = arith.constant 0 : i32
    %c0_i32_0 = arith.constant 0 : i32
    return %arg0, %c0_i32 : i32, i32
  }
}

</mosaic_0001>

<llo_original>
// kernel: tpu_custom_call.1
$region0: #{tpu_custom_call.1}
  #allocation0 [shape = 'u32[]', space=smem, size = 0x4, offset = 0x4, fixed_abs, tag = 'smem constant byte address 0x4 - core index']
  #allocation1 [shape = 'u32[72,128]{1,0:T(1,128)}', space=vmem, size = 0x9000, scoped, tag = 'internal scratch']
  #allocation2 [shape = 'f32[264,28]{1,0:T(8,128)}', space=vmem, size = 0x21000, scoped, tag = 'scratch operand']
  #allocation3 [shape = 'f32[264,84]{1,0:T(8,128)}', space=vmem, size = 0x21000, scoped, tag = 'scratch operand']
  #allocation4 [shape = 'f32[128,80]{1,0:T(8,128)}', space=vmem, size = 0x10000, scoped, tag = 'scratch operand']
  %s0 = inlined_call_operand.vmem [shape: f32[16,28,28], index: 0, kind: input, shape index: {}]
  %s1 = inlined_call_operand.vmem [shape: bf16[5,28,168], index: 1, kind: input, shape index: {}]
  %s2 = inlined_call_operand.vmem [shape: f32[1,168], index: 2, kind: input, shape index: {}]
  %s3 = inlined_call_operand.vmem [shape: bf16[5,84,160], index: 3, kind: input, shape index: {}]
  %s4 = inlined_call_operand.vmem [shape: f32[1,160], index: 4, kind: input, shape index: {}]
  %s5 = inlined_call_operand.vmem [shape: bf16[162,84], index: 5, kind: input, shape index: {}]
  %s6 = inlined_call_operand.vmem [shape: bf16[144,80], index: 6, kind: input, shape index: {}]
  %s7 = inlined_call_operand.vmem [shape: bf16[5,80,120], index: 7, kind: input, shape index: {}]
  %s8 = inlined_call_operand.vmem [shape: f32[1,120], index: 8, kind: input, shape index: {}]
  %s9 = inlined_call_operand.vmem [shape: bf16[120,84], index: 9, kind: input, shape index: {}]
  %s10 = inlined_call_operand.vmem [shape: f32[1,84], index: 10, kind: input, shape index: {}]
  %s11 = inlined_call_operand.vmem [shape: bf16[84,128], index: 11, kind: input, shape index: {}]
  %s12 = inlined_call_operand.vmem [shape: f32[1,128], index: 12, kind: input, shape index: {}]
  %s13 = inlined_call_operand.hbm [shape: f32[16,128], index: 13, kind: output, shape index: {}]
  %s14 = sld [smem:[#allocation0]]
  $region85: #{tpu_custom_call.1} parent=0
    _
  %s16 = ssub.s32 1, %s14
  %s17 = scalar_select 0, %s16, %s14
  $region1: #{tpu_custom_call.1} parent=0
    #allocation5 [shape = 'u8[8192]{0}', space=vmem, size = 0x2000, scoped, tag = 'output window, operand 0']
    #allocation6 [shape = 's32[2]{0}', space=sflag, size = 0x8, scoped, tag = 'scoped memory for tpu_custom_call.1']
    %18 = vsyncpa [#allocation6], 0
    %s19 = scalar_lea.sflag [#allocation6], 1
    %20 = vsyncpa %s19, 0
    loop: start=0, step=1, limit=4
    $region2: #{tpu_custom_call.1} parent=1 // loop_pre_header
      _
    $region3: #{tpu_custom_call.1} parent=1 // loop_header
      %s22 = sphi 0, %s26
      %p23 = scmp.ge.s32.totalorder %s22, 4
      %s32 = sphi 0, %s34
      %s35 = sphi 0, %s32
      %s36 = sphi 0, %s35
      %s52 = sphi 0, %s36
      %s56 = sphi 0, %s56
      %s58 = sphi 0, %s56
      %s59 = sphi 0, %s58
      %s73 = sphi 0, %s59
      %s77 = sphi 0, %s77
      %s79 = sphi 0, %s77
      %s80 = sphi 0, %s79
      %s94 = sphi 0, %s80
      %s98 = sphi 0, %s98
      %s100 = sphi 0, %s98
      %s101 = sphi 0, %s100
      %s115 = sphi 0, %s101
      %s119 = sphi 0, %s119
      %s121 = sphi 0, %s119
      %s122 = sphi 0, %s121
      %s136 = sphi 0, %s122
      %s140 = sphi 0, %s140
      %s142 = sphi 0, %s140
      %s143 = sphi 0, %s142
      %s157 = sphi 0, %s143
      %s161 = sphi 0, %s161
      %s163 = sphi 0, %s161
      %s164 = sphi 0, %s163
      %s178 = sphi 0, %s164
      %s182 = sphi 0, %s182
      %s184 = sphi 0, %s182
      %s185 = sphi 0, %s184
      %s199 = sphi 0, %s185
      %s203 = sphi 0, %s203
      %s205 = sphi 0, %s203
      %s206 = sphi 0, %s205
      %s220 = sphi 0, %s206
      %s224 = sphi 0, %s224
      %s226 = sphi 0, %s224
      %s227 = sphi 0, %s226
      %s241 = sphi 0, %s227
      %s245 = sphi 0, %s245
      %s247 = sphi 0, %s245
      %s248 = sphi 0, %s247
      %s262 = sphi 0, %s248
      %s266 = sphi 0, %s266
      %s268 = sphi 0, %s266
      %s269 = sphi 0, %s268
      %s283 = sphi 0, %s269
      %s287 = sphi 0, %s287
      %s289 = sphi 0, %s287
      %s290 = sphi 0, %s289
      %s304 = sphi 0, %s290
      %s310 = sphi 0, %s312
      %s313 = sphi 0, %s310
      %s314 = sphi 0, %s313
      %s330 = sphi 0, %s314
    $region4: #{tpu_custom_call.1} parent=1 // loop_header_branch
      %25 = sbr.rel (%p23) target = $region8
    $region5: #{tpu_custom_call.1} parent=1 // loop_body
      %s27 = ssub.s32 %s22, 1
      %s28 = ssub.s32 %s22, 2
      %s29 = sadd.s32 %s22, 1
      %s30 = ssub.s32 %s22, %s29
      %p31 = scmp.eq.s32.totalorder %s30, 0
      %s33 = sadd.s32 %s32, 1
      %s34 = scalar_select %p31, %s32, %s33
      %p37 = pneg %p31
      %p38 = scmp.eq.s32.totalorder %s22, 1
      %p39 = por %p37, %p38
      %p40 = scmp.ne.s32.totalorder %s32, %s35
      %p41 = scmp.eq.s32.totalorder %s22, 0
      %p42 = por %p40, %p41
      %p43 = scmp.ne.s32.totalorder %s32, %s35
      %p44 = scmp.eq.s32.totalorder %s27, 1
      %p45 = por %p43, %p44
      %p46 = scmp.ne.s32.totalorder %s35, %s36
      %p47 = scmp.eq.s32.totalorder %s27, 0
      %p48 = por %p46, %p47
      %p49 = scmp.ne.s32.totalorder %s35, %s36
      %p50 = scmp.eq.s32.totalorder %s28, 1
      %p51 = por %p49, %p50
      %p53 = scmp.ne.s32.totalorder %s36, %s52
      %p54 = scmp.eq.s32.totalorder %s28, 0
      %p55 = por %p53, %p54
      %s57 = sadd.s32 %s56, 1
      %p60 = scmp.eq.s32.totalorder %s22, 1
      %p61 = scmp.ne.s32.totalorder %s56, %s58
      %p62 = scmp.eq.s32.totalorder %s22, 0
      %p63 = por %p61, %p62
      %p64 = scmp.ne.s32.totalorder %s56, %s58
      %p65 = scmp.eq.s32.totalorder %s27, 1
      %p66 = por %p64, %p65
      %p67 = scmp.ne.s32.totalorder %s58, %s59
      %p68 = scmp.eq.s32.totalorder %s27, 0
      %p69 = por %p67, %p68
      %p70 = scmp.ne.s32.totalorder %s58, %s59
      %p71 = scmp.eq.s32.totalorder %s28, 1
      %p72 = por %p70, %p71
      %p74 = scmp.ne.s32.totalorder %s59, %s73
      %p75 = scmp.eq.s32.totalorder %s28, 0
      %p76 = por %p74, %p75
      %s78 = sadd.s32 %s77, 1
      %p81 = scmp.eq.s32.totalorder %s22, 1
      %p82 = scmp.ne.s32.totalorder %s77, %s79
      %p83 = scmp.eq.s32.totalorder %s22, 0
      %p84 = por %p82, %p83
      %p85 = scmp.ne.s32.totalorder %s77, %s79
      %p86 = scmp.eq.s32.totalorder %s27, 1
      %p87 = por %p85, %p86
      %p88 = scmp.ne.s32.totalorder %s79, %s80
      %p89 = scmp.eq.s32.totalorder %s27, 0
      %p90 = por %p88, %p89
      %p91 = scmp.ne.s32.totalorder %s79, %s80
      %p92 = scmp.eq.s32.totalorder %s28, 1
      %p93 = por %p91, %p92
      %p95 = scmp.ne.s32.totalorder %s80, %s94
      %p96 = scmp.eq.s32.totalorder %s28, 0
      %p97 = por %p95, %p96
      %s99 = sadd.s32 %s98, 1
      %p102 = scmp.eq.s32.totalorder %s22, 1
      %p103 = scmp.ne.s32.totalorder %s98, %s100
      %p104 = scmp.eq.s32.totalorder %s22, 0
      %p105 = por %p103, %p104
      %p106 = scmp.ne.s32.totalorder %s98, %s100
      %p107 = scmp.eq.s32.totalorder %s27, 1
      %p108 = por %p106, %p107
      %p109 = scmp.ne.s32.totalorder %s100, %s101
      %p110 = scmp.eq.s32.totalorder %s27, 0
      %p111 = por %p109, %p110
      %p112 = scmp.ne.s32.totalorder %s100, %s101
      %p113 = scmp.eq.s32.totalorder %s28, 1
      %p114 = por %p112, %p113
      %p116 = scmp.ne.s32.totalorder %s101, %s115
      %p117 = scmp.eq.s32.totalorder %s28, 0
      %p118 = por %p116, %p117
      %s120 = sadd.s32 %s119, 1
      %p123 = scmp.eq.s32.totalorder %s22, 1
      %p124 = scmp.ne.s32.totalorder %s119, %s121
      %p125 = scmp.eq.s32.totalorder %s22, 0
      %p126 = por %p124, %p125
      %p127 = scmp.ne.s32.totalorder %s119, %s121
      %p128 = scmp.eq.s32.totalorder %s27, 1
      %p129 = por %p127, %p128
      %p130 = scmp.ne.s32.totalorder %s121, %s122
      %p131 = scmp.eq.s32.totalorder %s27, 0
      %p132 = por %p130, %p131
      %p133 = scmp.ne.s32.totalorder %s121, %s122
      %p134 = scmp.eq.s32.totalorder %s28, 1
      %p135 = por %p133, %p134
      %p137 = scmp.ne.s32.totalorder %s122, %s136
      %p138 = scmp.eq.s32.totalorder %s28, 0
      %p139 = por %p137, %p138
      %s141 = sadd.s32 %s140, 1
      %p144 = scmp.eq.s32.totalorder %s22, 1
      %p145 = scmp.ne.s32.totalorder %s140, %s142
      %p146 = scmp.eq.s32.totalorder %s22, 0
      %p147 = por %p145, %p146
      %p148 = scmp.ne.s32.totalorder %s140, %s142
      %p149 = scmp.eq.s32.totalorder %s27, 1
      %p150 = por %p148, %p149
      %p151 = scmp.ne.s32.totalorder %s142, %s143
      %p152 = scmp.eq.s32.totalorder %s27, 0
      %p153 = por %p151, %p152
      %p154 = scmp.ne.s32.totalorder %s142, %s143
      %p155 = scmp.eq.s32.totalorder %s28, 1
      %p156 = por %p154, %p155
      %p158 = scmp.ne.s32.totalorder %s143, %s157
      %p159 = scmp.eq.s32.totalorder %s28, 0
      %p160 = por %p158, %p159
      %s162 = sadd.s32 %s161, 1
      %p165 = scmp.eq.s32.totalorder %s22, 1
      %p166 = scmp.ne.s32.totalorder %s161, %s163
      %p167 = scmp.eq.s32.totalorder %s22, 0
      %p168 = por %p166, %p167
      %p169 = scmp.ne.s32.totalorder %s161, %s163
      %p170 = scmp.eq.s32.totalorder %s27, 1
      %p171 = por %p169, %p170
      %p172 = scmp.ne.s32.totalorder %s163, %s164
      %p173 = scmp.eq.s32.totalorder %s27, 0
      %p174 = por %p172, %p173
      %p175 = scmp.ne.s32.totalorder %s163, %s164
      %p176 = scmp.eq.s32.totalorder %s28, 1
      %p177 = por %p175, %p176
      %p179 = scmp.ne.s32.totalorder %s164, %s178
      %p180 = scmp.eq.s32.totalorder %s28, 0
      %p181 = por %p179, %p180
      %s183 = sadd.s32 %s182, 1
      %p186 = scmp.eq.s32.totalorder %s22, 1
      %p187 = scmp.ne.s32.totalorder %s182, %s184
      %p188 = scmp.eq.s32.totalorder %s22, 0
      %p189 = por %p187, %p188
      %p190 = scmp.ne.s32.totalorder %s182, %s184
      %p191 = scmp.eq.s32.totalorder %s27, 1
      %p192 = por %p190, %p191
      %p193 = scmp.ne.s32.totalorder %s184, %s185
      %p194 = scmp.eq.s32.totalorder %s27, 0
      %p195 = por %p193, %p194
      %p196 = scmp.ne.s32.totalorder %s184, %s185
      %p197 = scmp.eq.s32.totalorder %s28, 1
      %p198 = por %p196, %p197
      %p200 = scmp.ne.s32.totalorder %s185, %s199
      %p201 = scmp.eq.s32.totalorder %s28, 0
      %p202 = por %p200, %p201
      %s204 = sadd.s32 %s203, 1
      %p207 = scmp.eq.s32.totalorder %s22, 1
      %p208 = scmp.ne.s32.totalorder %s203, %s205
      %p209 = scmp.eq.s32.totalorder %s22, 0
      %p210 = por %p208, %p209
      %p211 = scmp.ne.s32.totalorder %s203, %s205
      %p212 = scmp.eq.s32.totalorder %s27, 1
      %p213 = por %p211, %p212
      %p214 = scmp.ne.s32.totalorder %s205, %s206
      %p215 = scmp.eq.s32.totalorder %s27, 0
      %p216 = por %p214, %p215
      %p217 = scmp.ne.s32.totalorder %s205, %s206
      %p218 = scmp.eq.s32.totalorder %s28, 1
      %p219 = por %p217, %p218
      %p221 = scmp.ne.s32.totalorder %s206, %s220
      %p222 = scmp.eq.s32.totalorder %s28, 0
      %p223 = por %p221, %p222
      %s225 = sadd.s32 %s224, 1
      %p228 = scmp.eq.s32.totalorder %s22, 1
      %p229 = scmp.ne.s32.totalorder %s224, %s226
      %p230 = scmp.eq.s32.totalorder %s22, 0
      %p231 = por %p229, %p230
      %p232 = scmp.ne.s32.totalorder %s224, %s226
      %p233 = scmp.eq.s32.totalorder %s27, 1
      %p234 = por %p232, %p233
      %p235 = scmp.ne.s32.totalorder %s226, %s227
      %p236 = scmp.eq.s32.totalorder %s27, 0
      %p237 = por %p235, %p236
      %p238 = scmp.ne.s32.totalorder %s226, %s227
      %p239 = scmp.eq.s32.totalorder %s28, 1
      %p240 = por %p238, %p239
      %p242 = scmp.ne.s32.totalorder %s227, %s241
      %p243 = scmp.eq.s32.totalorder %s28, 0
      %p244 = por %p242, %p243
      %s246 = sadd.s32 %s245, 1
      %p249 = scmp.eq.s32.totalorder %s22, 1
      %p250 = scmp.ne.s32.totalorder %s245, %s247
      %p251 = scmp.eq.s32.totalorder %s22, 0
      %p252 = por %p250, %p251
      %p253 = scmp.ne.s32.totalorder %s245, %s247
      %p254 = scmp.eq.s32.totalorder %s27, 1
      %p255 = por %p253, %p254
      %p256 = scmp.ne.s32.totalorder %s247, %s248
      %p257 = scmp.eq.s32.totalorder %s27, 0
      %p258 = por %p256, %p257
      %p259 = scmp.ne.s32.totalorder %s247, %s248
      %p260 = scmp.eq.s32.totalorder %s28, 1
      %p261 = por %p259, %p260
      %p263 = scmp.ne.s32.totalorder %s248, %s262
      %p264 = scmp.eq.s32.totalorder %s28, 0
      %p265 = por %p263, %p264
      %s267 = sadd.s32 %s266, 1
      %p270 = scmp.eq.s32.totalorder %s22, 1
      %p271 = scmp.ne.s32.totalorder %s266, %s268
      %p272 = scmp.eq.s32.totalorder %s22, 0
      %p273 = por %p271, %p272
      %p274 = scmp.ne.s32.totalorder %s266, %s268
      %p275 = scmp.eq.s32.totalorder %s27, 1
      %p276 = por %p274, %p275
      %p277 = scmp.ne.s32.totalorder %s268, %s269
      %p278 = scmp.eq.s32.totalorder %s27, 0
      %p279 = por %p277, %p278
      %p280 = scmp.ne.s32.totalorder %s268, %s269
      %p281 = scmp.eq.s32.totalorder %s28, 1
      %p282 = por %p280, %p281
      %p284 = scmp.ne.s32.totalorder %s269, %s283
      %p285 = scmp.eq.s32.totalorder %s28, 0
      %p286 = por %p284, %p285
      %s288 = sadd.s32 %s287, 1
      %p291 = scmp.eq.s32.totalorder %s22, 1
      %p292 = scmp.ne.s32.totalorder %s287, %s289
      %p293 = scmp.eq.s32.totalorder %s22, 0
      %p294 = por %p292, %p293
      %p295 = scmp.ne.s32.totalorder %s287, %s289
      %p296 = scmp.eq.s32.totalorder %s27, 1
      %p297 = por %p295, %p296
      %p298 = scmp.ne.s32.totalorder %s289, %s290
      %p299 = scmp.eq.s32.totalorder %s27, 0
      %p300 = por %p298, %p299
      %p301 = scmp.ne.s32.totalorder %s289, %s290
      %p302 = scmp.eq.s32.totalorder %s28, 1
      %p303 = por %p301, %p302
      %p305 = scmp.ne.s32.totalorder %s290, %s304
      %p306 = scmp.eq.s32.totalorder %s28, 0
      %p307 = por %p305, %p306
      %s308 = ssub.s32 %s22, %s29
      %p309 = scmp.eq.s32.totalorder %s308, 0
      %s311 = sadd.s32 %s310, 1
      %s312 = scalar_select %p309, %s310, %s311
      %p315 = pneg %p309
      %p316 = scmp.eq.s32.totalorder %s22, 1
      %p317 = por %p315, %p316
      %p318 = scmp.ne.s32.totalorder %s310, %s313
      %p319 = scmp.eq.s32.totalorder %s22, 0
      %p320 = por %p318, %p319
      %p321 = scmp.ne.s32.totalorder %s310, %s313
      %p322 = scmp.eq.s32.totalorder %s27, 1
      %p323 = por %p321, %p322
      %p324 = scmp.ne.s32.totalorder %s313, %s314
      %p325 = scmp.eq.s32.totalorder %s27, 0
      %p326 = por %p324, %p325
      %p327 = scmp.ne.s32.totalorder %s313, %s314
      %p328 = scmp.eq.s32.totalorder %s28, 1
      %p329 = por %p327, %p328
      %p331 = scmp.ne.s32.totalorder %s314, %s330
      %p332 = scmp.eq.s32.totalorder %s28, 0
      %p333 = por %p331, %p332
      %p334 = scmp.le.s32.totalorder 1, %s22
      %p335 = scmp.lt.s32.totalorder %s22, 3
      %p336 = pnand %p334, %p335
      %p337 = pneg %p336
      // Predicated region
      $region9: #{tpu_custom_call.1} parent=5 // pred_check
        _
      $region10: #{tpu_custom_call.1} parent=5 // pred_check_branch
        %339 = sbr.rel (%p336) target = $region12
      $region11: #{tpu_custom_call.1} parent=5 // pred_region
        %s340 = ssub.s32 %s22, 1
        // Predicated region
        $region13: #{tpu_custom_call.1} parent=11 // pred_check
          %p341 = pneg %p69
        $region14: #{tpu_custom_call.1} parent=11 // pred_check_branch
          %343 = sbr.rel (%p341) target = $region16
        $region15: #{tpu_custom_call.1} parent=11 // pred_region
          _
        $region16: #{tpu_custom_call.1} parent=11 // pred_fallthru
          _
        // Predicated region
        $region17: #{tpu_custom_call.1} parent=11 // pred_check
          %p344 = pneg %p90
        $region18: #{tpu_custom_call.1} parent=11 // pred_check_branch
          %346 = sbr.rel (%p344) target = $region20
        $region19: #{tpu_custom_call.1} parent=11 // pred_region
          _
        $region20: #{tpu_custom_call.1} parent=11 // pred_fallthru
          _
        // Predicated region
        $region21: #{tpu_custom_call.1} parent=11 // pred_check
          %p347 = pneg %p111
        $region22: #{tpu_custom_call.1} parent=11 // pred_check_branch
          %349 = sbr.rel (%p347) target = $region24
        $region23: #{tpu_custom_call.1} parent=11 // pred_region
          _
        $region24: #{tpu_custom_call.1} parent=11 // pred_fallthru
          _
        // Predicated region
        $region25: #{tpu_custom_call.1} parent=11 // pred_check
          %p350 = pneg %p132
        $region26: #{tpu_custom_call.1} parent=11 // pred_check_branch
          %352 = sbr.rel (%p350) target = $region28
        $region27: #{tpu_custom_call.1} parent=11 // pred_region
          _
        $region28: #{tpu_custom_call.1} parent=11 // pred_fallthru
          _
        // Predicated region
        $region29: #{tpu_custom_call.1} parent=11 // pred_check
          %p353 = pneg %p153
        $region30: #{tpu_custom_call.1} parent=11 // pred_check_branch
          %355 = sbr.rel (%p353) target = $region32
        $region31: #{tpu_custom_call.1} parent=11 // pred_region
          _
        $region32: #{tpu_custom_call.1} parent=11 // pred_fallthru
          _
        // Predicated region
        $region33: #{tpu_custom_call.1} parent=11 // pred_check
          %p356 = pneg %p174
        $region34: #{tpu_custom_call.1} parent=11 // pred_check_branch
          %358 = sbr.rel (%p356) target = $region36
        $region35: #{tpu_custom_call.1} parent=11 // pred_region
          _
        $region36: #{tpu_custom_call.1} parent=11 // pred_fallthru
          _
        // Predicated region
        $region37: #{tpu_custom_call.1} parent=11 // pred_check
          %p359 = pneg %p195
        $region38: #{tpu_custom_call.1} parent=11 // pred_check_branch
          %361 = sbr.rel (%p359) target = $region40
        $region39: #{tpu_custom_call.1} parent=11 // pred_region
          _
        $region40: #{tpu_custom_call.1} parent=11 // pred_fallthru
          _
        // Predicated region
        $region41: #{tpu_custom_call.1} parent=11 // pred_check
          %p362 = pneg %p216
        $region42: #{tpu_custom_call.1} parent=11 // pred_check_branch
          %364 = sbr.rel (%p362) target = $region44
        $region43: #{tpu_custom_call.1} parent=11 // pred_region
          _
        $region44: #{tpu_custom_call.1} parent=11 // pred_fallthru
          _
        // Predicated region
        $region45: #{tpu_custom_call.1} parent=11 // pred_check
          %p365 = pneg %p237
        $region46: #{tpu_custom_call.1} parent=11 // pred_check_branch
          %367 = sbr.rel (%p365) target = $region48
        $region47: #{tpu_custom_call.1} parent=11 // pred_region
          _
        $region48: #{tpu_custom_call.1} parent=11 // pred_fallthru
          _
        // Predicated region
        $region49: #{tpu_custom_call.1} parent=11 // pred_check
          %p368 = pneg %p258
        $region50: #{tpu_custom_call.1} parent=11 // pred_check_branch
          %370 = sbr.rel (%p368) target = $region52
        $region51: #{tpu_custom_call.1} parent=11 // pred_region
          _
        $region52: #{tpu_custom_call.1} parent=11 // pred_fallthru
          _
        // Predicated region
        $region53: #{tpu_custom_call.1} parent=11 // pred_check
          %p371 = pneg %p279
        $region54: #{tpu_custom_call.1} parent=11 // pred_check_branch
          %373 = sbr.rel (%p371) target = $region56
        $region55: #{tpu_custom_call.1} parent=11 // pred_region
          _
        $region56: #{tpu_custom_call.1} parent=11 // pred_fallthru
          _
        // Predicated region
        $region57: #{tpu_custom_call.1} parent=11 // pred_check
          %p374 = pneg %p300
        $region58: #{tpu_custom_call.1} parent=11 // pred_check_branch
          %376 = sbr.rel (%p374) target = $region60
        $region59: #{tpu_custom_call.1} parent=11 // pred_region
          _
        $region60: #{tpu_custom_call.1} parent=11 // pred_fallthru
          _
      $region12: #{tpu_custom_call.1} parent=5 // pred_fallthru
        _
      %p377 = scmp.lt.s32.totalorder %s22, 2
      // Predicated region
      $region61: #{tpu_custom_call.1} parent=5 // pred_check
        %p378 = pneg %p377
      $region62: #{tpu_custom_call.1} parent=5 // pred_check_branch
        %380 = sbr.rel (%p378) target = $region64
      $region63: #{tpu_custom_call.1} parent=5 // pred_region
        // Predicated region
        $region65: #{tpu_custom_call.1} parent=63 // pred_check
          %p381 = pneg %p42
        $region66: #{tpu_custom_call.1} parent=63 // pred_check_branch
          %383 = sbr.rel (%p381) target = $region68
        $region67: #{tpu_custom_call.1} parent=63 // pred_region
          %s384 = smul.u32 8, %s22
          %p385 = scmp.lt.s32.totalorder %s384, 15
          %s386 = scalar_select %p385, %s384, 15
          %s387 = smul.addr %s386, 4
          %s388 = smul.addr %s387, 8
          %s389 = scalar_lea.vmem %s0, %s388
          %s390 = smul.u32 8, %s22
        $region68: #{tpu_custom_call.1} parent=63 // pred_fallthru
          _
      $region64: #{tpu_custom_call.1} parent=5 // pred_fallthru
        _
      %p391 = scmp.le.s32.totalorder 1, %s22
      %p392 = scmp.lt.s32.totalorder %s22, 3
      %p393 = pnand %p391, %p392
      %p394 = pneg %p393
      // Predicated region
      $region69: #{tpu_custom_call.1} parent=5 // pred_check
        _
      $region70: #{tpu_custom_call.1} parent=5 // pred_check_branch
        %396 = sbr.rel (%p393) target = $region72
      $region71: #{tpu_custom_call.1} parent=5 // pred_region
        %s397 = ssub.s32 %s22, 1
        %s398 = smul.u32 8, %s27
        %p399 = scmp.lt.s32.totalorder %s398, 15
        %s400 = scalar_select %p399, %s398, 15
        %s401 = smul.addr %s400, 4
        %s402 = smul.addr %s401, 8
        %s403 = scalar_lea.vmem %s0, %s402
        %p404 = pneg %p48
        %p405 = pneg %p45
        %p406 = pneg %p69
        %p407 = pneg %p66
        %p408 = pneg %p90
        %p409 = pneg %p87
        %p410 = pneg %p111
        %p411 = pneg %p108
        %p412 = pneg %p132
        %p413 = pneg %p129
        %p414 = pneg %p153
        %p415 = pneg %p150
        %p416 = pneg %p174
        %p417 = pneg %p171
        %p418 = pneg %p195
        %p419 = pneg %p192
        %p420 = pneg %p216
        %p421 = pneg %p213
        %p422 = pneg %p237
        %p423 = pneg %p234
        %p424 = pneg %p258
        %p425 = pneg %p255
        %p426 = pneg %p279
        %p427 = pneg %p276
        %p428 = pneg %p300
        %p429 = pneg %p297
        %p430 = pneg %p326
        %p431 = pneg %p323
        %s432 = sand.u32 %s313, 1
        %s433 = scalar_lea.sflag [#allocation6], %s432
        %s434 = sand.u32 %s313, 1
        %s435 = smul.addr %s434, 8
        %s436 = scalar_lea.vmem [#allocation5], %s435
        %s437 = smul.u32 8, %s27
        %p438 = scmp.lt.s32.totalorder %s437, 15
        %s439 = scalar_select %p438, %s437, 15
        %s440 = smul.addr %s439, 4
        %s441 = smul.addr %s440, 8
        %s442 = scalar_lea.vmem %s0, %s441
        %s443 = smul.u32 8, %s27
        %vm445 = vcmask 222208
        %446 = vst.msk [vmem:[#allocation2] sm:$0x3] %vm445, 0.0
        %v447 = vld [vmem:[%s442] sm:$0xff]
        %v448 = vld [vmem:[%s442 + $0x8] sm:$0xff]
        %v449 = vld [vmem:[%s442 + $0x10] sm:$0xff]
        %v450 = vld [vmem:[%s442 + $0x18] sm:$0xf]
        %vm451 = vcmask 228352
        %452 = vst.msk [vmem:[#allocation2 + $0x2] sm:$0xff] %vm451, %v447
        %453 = vst.msk [vmem:[#allocation2 + $0xa] sm:$0xff] %vm451, %v448
        %454 = vst.msk [vmem:[#allocation2 + $0x12] sm:$0xff] %vm451, %v449
        %vm455 = vcmask 224256
        %456 = vst.msk [vmem:[#allocation2 + $0x1a] sm:$0xf] %vm455, %v450
        %457 = vst.msk [vmem:[#allocation2 + $0x1e] sm:$0xf] %vm455, 0.0
        %s458 = scalar_lea.vmem %s442, 32
        %v459 = vld [vmem:[%s458] sm:$0xff]
        %v460 = vld [vmem:[%s458 + $0x8] sm:$0xff]
        %v461 = vld [vmem:[%s458 + $0x10] sm:$0xff]
        %v462 = vld [vmem:[%s458 + $0x18] sm:$0xf]
        %463 = vst.msk [vmem:[#allocation2 + $0x22] sm:$0xff] %vm451, %v459
        %464 = vst.msk [vmem:[#allocation2 + $0x2a] sm:$0xff] %vm451, %v460
        %465 = vst.msk [vmem:[#allocation2 + $0x32] sm:$0xff] %vm451, %v461
        %466 = vst.msk [vmem:[#allocation2 + $0x3a] sm:$0xf] %vm455, %v462
        %467 = vst.msk [vmem:[#allocation2 + $0x3e] sm:$0xf] %vm455, 0.0
        %s468 = scalar_lea.vmem %s442, 64
        %v469 = vld [vmem:[%s468] sm:$0xff]
        %v470 = vld [vmem:[%s468 + $0x8] sm:$0xff]
        %v471 = vld [vmem:[%s468 + $0x10] sm:$0xff]
        %v472 = vld [vmem:[%s468 + $0x18] sm:$0xf]
        %473 = vst.msk [vmem:[#allocation2 + $0x42] sm:$0xff] %vm451, %v469
        %474 = vst.msk [vmem:[#allocation2 + $0x4a] sm:$0xff] %vm451, %v470
        %475 = vst.msk [vmem:[#allocation2 + $0x52] sm:$0xff] %vm451, %v471
        %476 = vst.msk [vmem:[#allocation2 + $0x5a] sm:$0xf] %vm455, %v472
        %477 = vst.msk [vmem:[#allocation2 + $0x5e] sm:$0xf] %vm455, 0.0
        %s478 = scalar_lea.vmem %s442, 96
        %v479 = vld [vmem:[%s478] sm:$0xff]
        %v480 = vld [vmem:[%s478 + $0x8] sm:$0xff]
        %v481 = vld [vmem:[%s478 + $0x10] sm:$0xff]
        %v482 = vld [vmem:[%s478 + $0x18] sm:$0xf]
        %483 = vst.msk [vmem:[#allocation2 + $0x62] sm:$0xff] %vm451, %v479
        %484 = vst.msk [vmem:[#allocation2 + $0x6a] sm:$0xff] %vm451, %v480
        %485 = vst.msk [vmem:[#allocation2 + $0x72] sm:$0xff] %vm451, %v481
        %486 = vst.msk [vmem:[#allocation2 + $0x7a] sm:$0xf] %vm455, %v482
        %487 = vst.msk [vmem:[#allocation2 + $0x7e] sm:$0xf] %vm455, 0.0
        %s488 = scalar_lea.vmem %s442, 128
        %v489 = vld [vmem:[%s488] sm:$0xff]
        %v490 = vld [vmem:[%s488 + $0x8] sm:$0xff]
        %v491 = vld [vmem:[%s488 + $0x10] sm:$0xff]
        %v492 = vld [vmem:[%s488 + $0x18] sm:$0xf]
        %493 = vst.msk [vmem:[#allocation2 + $0x82] sm:$0xff] %vm451, %v489
        %494 = vst.msk [vmem:[#allocation2 + $0x8a] sm:$0xff] %vm451, %v490
        %495 = vst.msk [vmem:[#allocation2 + $0x92] sm:$0xff] %vm451, %v491
        %496 = vst.msk [vmem:[#allocation2 + $0x9a] sm:$0xf] %vm455, %v492
        %497 = vst.msk [vmem:[#allocation2 + $0x9e] sm:$0xf] %vm455, 0.0
        %s498 = scalar_lea.vmem %s442, 160
        %v499 = vld [vmem:[%s498] sm:$0xff]
        %v500 = vld [vmem:[%s498 + $0x8] sm:$0xff]
        %v501 = vld [vmem:[%s498 + $0x10] sm:$0xff]
        %v502 = vld [vmem:[%s498 + $0x18] sm:$0xf]
        %503 = vst.msk [vmem:[#allocation2 + $0xa2] sm:$0xff] %vm451, %v499
        %504 = vst.msk [vmem:[#allocation2 + $0xaa] sm:$0xff] %vm451, %v500
        %505 = vst.msk [vmem:[#allocation2 + $0xb2] sm:$0xff] %vm451, %v501
        %506 = vst.msk [vmem:[#allocation2 + $0xba] sm:$0xf] %vm455, %v502
        %507 = vst.msk [vmem:[#allocation2 + $0xbe] sm:$0xf] %vm455, 0.0
        %s508 = scalar_lea.vmem %s442, 192
        %v509 = vld [vmem:[%s508] sm:$0xff]
        %v510 = vld [vmem:[%s508 + $0x8] sm:$0xff]
        %v511 = vld [vmem:[%s508 + $0x10] sm:$0xff]
        %v512 = vld [vmem:[%s508 + $0x18] sm:$0xf]
        %513 = vst.msk [vmem:[#allocation2 + $0xc2] sm:$0xff] %vm451, %v509
        %514 = vst.msk [vmem:[#allocation2 + $0xca] sm:$0xff] %vm451, %v510
        %515 = vst.msk [vmem:[#allocation2 + $0xd2] sm:$0xff] %vm451, %v511
        %516 = vst.msk [vmem:[#allocation2 + $0xda] sm:$0xf] %vm455, %v512
        %517 = vst.msk [vmem:[#allocation2 + $0xde] sm:$0xf] %vm455, 0.0
        %s518 = scalar_lea.vmem %s442, 224
        %v519 = vld [vmem:[%s518] sm:$0xff]
        %v520 = vld [vmem:[%s518 + $0x8] sm:$0xff]
        %v521 = vld [vmem:[%s518 + $0x10] sm:$0xff]
        %v522 = vld [vmem:[%s518 + $0x18] sm:$0xf]
        %523 = vst.msk [vmem:[#allocation2 + $0xe2] sm:$0xff] %vm451, %v519
        %524 = vst.msk [vmem:[#allocation2 + $0xea] sm:$0xff] %vm451, %v520
        %525 = vst.msk [vmem:[#allocation2 + $0xf2] sm:$0xff] %vm451, %v521
        %526 = vst.msk [vmem:[#allocation2 + $0xfa] sm:$0xf] %vm455, %v522
        %527 = vst.msk [vmem:[#allocation2 + $0xfe] sm:$0xf] %vm455, 0.0
        %vm528 = vcmask 226304
        %529 = vst.msk [vmem:[#allocation2 + $0x102] sm:$0x3f] %vm528, 0.0
        %vm530 = vcmask 687104
        %531 = vst.msk [vmem:[#allocation3 + $0x100] sm:$0xff] %vm530, 0.0
        %v532 = vld [vmem:[#allocation2] sm:$0xff]
        %v533 = vld [vmem:[#allocation2 + $0x8] sm:$0xff]
        %v534 = vld [vmem:[#allocation2 + $0x10] sm:$0xff]
        %v535 = vld [vmem:[#allocation2 + $0x18] sm:$0xff]
        %v536 = vld [vmem:[#allocation2 + $0x20] sm:$0xff]
        %v537 = vld [vmem:[#allocation2 + $0x28] sm:$0xff]
        %v538 = vld [vmem:[#allocation2 + $0x30] sm:$0xff]
        %v539 = vld [vmem:[#allocation2 + $0x38] sm:$0xff]
        %v540 = vld [vmem:[#allocation2 + $0x40] sm:$0xff]
        %v541 = vld [vmem:[#allocation2 + $0x48] sm:$0xff]
        %v542 = vld [vmem:[#allocation2 + $0x50] sm:$0xff]
        %v543 = vld [vmem:[#allocation2 + $0x58] sm:$0xff]
        %v544 = vld [vmem:[#allocation2 + $0x60] sm:$0xff]
        %v545 = vld [vmem:[#allocation2 + $0x68] sm:$0xff]
        %v546 = vld [vmem:[#allocation2 + $0x70] sm:$0xff]
        %v547 = vld [vmem:[#allocation2 + $0x78] sm:$0xff]
        %v548 = vld [vmem:[#allocation2 + $0x80] sm:$0xff]
        %v549 = vld [vmem:[#allocation2 + $0x88] sm:$0xff]
        %v550 = vld [vmem:[#allocation2 + $0x90] sm:$0xff]
        %v551 = vld [vmem:[#allocation2 + $0x98] sm:$0xff]
        %v552 = vld [vmem:[#allocation2 + $0xa0] sm:$0xff]
        %v553 = vld [vmem:[#allocation2 + $0xa8] sm:$0xff]
        %v554 = vld [vmem:[#allocation2 + $0xb0] sm:$0xff]
        %v555 = vld [vmem:[#allocation2 + $0xb8] sm:$0xff]
        %v556 = vld [vmem:[#allocation2 + $0xc0] sm:$0xff]
        %v557 = vld [vmem:[#allocation2 + $0xc8] sm:$0xff]
        %v558 = vld [vmem:[#allocation2 + $0xd0] sm:$0xff]
        %v559 = vld [vmem:[#allocation2 + $0xd8] sm:$0xff]
        %v560 = vld [vmem:[#allocation2 + $0xe0] sm:$0xff]
        %v561 = vld [vmem:[#allocation2 + $0xe8] sm:$0xff]
        %v562 = vld [vmem:[#allocation2 + $0xf0] sm:$0xff]
        %v563 = vld [vmem:[#allocation2 + $0xf8] sm:$0xff]
        %v564 = vpack.c.bf16 %v533, %v532
        %v565 = vpack.c.bf16 %v535, %v534
        %v566 = vpack.c.bf16 %v537, %v536
        %v567 = vpack.c.bf16 %v539, %v538
        %v568 = vpack.c.bf16 %v541, %v540
        %v569 = vpack.c.bf16 %v543, %v542
        %v570 = vpack.c.bf16 %v545, %v544
        %v571 = vpack.c.bf16 %v547, %v546
        %v572 = vpack.c.bf16 %v549, %v548
        %v573 = vpack.c.bf16 %v551, %v550
        %v574 = vpack.c.bf16 %v553, %v552
        %v575 = vpack.c.bf16 %v555, %v554
        %v576 = vpack.c.bf16 %v557, %v556
        %v577 = vpack.c.bf16 %v559, %v558
        %v578 = vpack.c.bf16 %v561, %v560
        %v579 = vpack.c.bf16 %v563, %v562
        %v580 = vld [vmem:[%s1] sm:$0xff]
        %v581 = vld [vmem:[%s1 + $0x8] sm:$0xff]
        %v582 = vld [vmem:[%s1 + $0x10] sm:$0xff]
        %v583 = vld [vmem:[%s1 + $0x18] sm:$0x33]
        %v584 = vld [vmem:[#allocation2 + $0x1] sm:$0xff]
        %v585 = vld [vmem:[#allocation2 + $0x9] sm:$0xff]
        %v586 = vld [vmem:[#allocation2 + $0x11] sm:$0xff]
        %v587 = vld [vmem:[#allocation2 + $0x19] sm:$0xff]
        %v588 = vld [vmem:[#allocation2 + $0x21] sm:$0xff]
        %v589 = vld [vmem:[#allocation2 + $0x29] sm:$0xff]
        %v590 = vld [vmem:[#allocation2 + $0x31] sm:$0xff]
        %v591 = vld [vmem:[#allocation2 + $0x39] sm:$0xff]
        %v592 = vld [vmem:[#allocation2 + $0x41] sm:$0xff]
        %v593 = vld [vmem:[#allocation2 + $0x49] sm:$0xff]
        %v594 = vld [vmem:[#allocation2 + $0x51] sm:$0xff]
        %v595 = vld [vmem:[#allocation2 + $0x59] sm:$0xff]
        %v596 = vld [vmem:[#allocation2 + $0x61] sm:$0xff]
        %v597 = vld [vmem:[#allocation2 + $0x69] sm:$0xff]
        %v598 = vld [vmem:[#allocation2 + $0x71] sm:$0xff]
        %v599 = vld [vmem:[#allocation2 + $0x79] sm:$0xff]
        %v600 = vld [vmem:[#allocation2 + $0x81] sm:$0xff]
        %v601 = vld [vmem:[#allocation2 + $0x89] sm:$0xff]
        %v602 = vld [vmem:[#allocation2 + $0x91] sm:$0xff]
        %v603 = vld [vmem:[#allocation2 + $0x99] sm:$0xff]
        %v604 = vld [vmem:[#allocation2 + $0xa1] sm:$0xff]
        %v605 = vld [vmem:[#allocation2 + $0xa9] sm:$0xff]
        %v606 = vld [vmem:[#allocation2 + $0xb1] sm:$0xff]
        %v607 = vld [vmem:[#allocation2 + $0xb9] sm:$0xff]
        %v608 = vld [vmem:[#allocation2 + $0xc1] sm:$0xff]
        %v609 = vld [vmem:[#allocation2 + $0xc9] sm:$0xff]
        %v610 = vld [vmem:[#allocation2 + $0xd1] sm:$0xff]
        %v611 = vld [vmem:[#allocation2 + $0xd9] sm:$0xff]
        %v612 = vld [vmem:[#allocation2 + $0xe1] sm:$0xff]
        %v613 = vld [vmem:[#allocation2 + $0xe9] sm:$0xff]
        %v614 = vld [vmem:[#allocation2 + $0xf1] sm:$0xff]
        %v615 = vld [vmem:[#allocation2 + $0xf9] sm:$0xff]
        %v616 = vpack.c.bf16 %v585, %v584
        %v617 = vpack.c.bf16 %v587, %v586
        %v618 = vpack.c.bf16 %v589, %v588
        %v619 = vpack.c.bf16 %v591, %v590
        %v620 = vpack.c.bf16 %v593, %v592
        %v621 = vpack.c.bf16 %v595, %v594
        %v622 = vpack.c.bf16 %v597, %v596
        %v623 = vpack.c.bf16 %v599, %v598
        %v624 = vpack.c.bf16 %v601, %v600
        %v625 = vpack.c.bf16 %v603, %v602
        %v626 = vpack.c.bf16 %v605, %v604
        %v627 = vpack.c.bf16 %v607, %v606
        %v628 = vpack.c.bf16 %v609, %v608
        %v629 = vpack.c.bf16 %v611, %v610
        %v630 = vpack.c.bf16 %v613, %v612
        %v631 = vpack.c.bf16 %v615, %v614
        %s632 = scalar_lea.vmem %s1, 32
        %v633 = vld [vmem:[%s632] sm:$0xff]
        %v634 = vld [vmem:[%s632 + $0x8] sm:$0xff]
        %v635 = vld [vmem:[%s632 + $0x10] sm:$0xff]
        %v636 = vld [vmem:[%s632 + $0x18] sm:$0x33]
        %v641 = vunpack.c.l.b16 %v633
        %v642 = vunpack.c.h.b16 %v633
        %v643 = vunpack.c.l.b16 %v634
        %v644 = vunpack.c.h.b16 %v634
        %v645 = vunpack.c.l.b16 %v635
        %v646 = vunpack.c.h.b16 %v635
        %v647 = vunpack.c.l.b16 %v636
        %v648 = vunpack.c.h.b16 %v636
        %v649 = vpack.c.b16 %v643, %v641
        %v650 = vpack.c.b16 %v644, %v642
        %v651 = vpack.c.b16 %v647, %v645
        %v652 = vpack.c.b16 %v648, %v646
        %v656 = vsel %vm451, %v616, 0
        %v659 = vsel %vm451, %v617, 0
        %v662 = vsel %vm451, %v618, 0
        %v665 = vsel %vm451, %v619, 0
        %v668 = vsel %vm451, %v620, 0
        %v671 = vsel %vm451, %v621, 0
        %v674 = vsel %vm451, %v622, 0
        %v677 = vsel %vm451, %v623, 0
        %v680 = vsel %vm451, %v624, 0
        %v683 = vsel %vm451, %v625, 0
        %v686 = vsel %vm451, %v626, 0
        %v689 = vsel %vm451, %v627, 0
        %v692 = vsel %vm451, %v628, 0
        %v695 = vsel %vm451, %v629, 0
        %v698 = vsel %vm451, %v630, 0
        %v701 = vsel %vm451, %v631, 0
        %vm703 = vcmask 1045504
        %v705 = vsel %vm703, %v651, 0
        %v708 = vsel %vm703, %v652, 0
        %710 = vmatpush.bf16.msra.mxu0 0
        %711 = vmatpush.bf16.msra.mxu0 0
        %712 = vmatpush.bf16.msra.mxu0 0
        %713 = vmatpush.bf16.msra.mxu0 0
        %714 = vmatpush.bf16.msra.mxu0 0
        %715 = vmatpush.bf16.msra.mxu0 0
        %716 = vmatpush.bf16.msra.mxu0 %v705
        %717 = vmatpush.bf16.msra.mxu0 %v649
        %718 = vmatmul.bf16.gmra.mxu0 %v656
        %v719 = vpop.f32.mrf.mxu0
        %v720 = vadd.f32 0.0, %v719
        %v721 = vpop.f32.mrf.mxu0
        %v722 = vadd.f32 0.0, %v721
        %723 = vmatmul.bf16.gmra.mxu0 %v659
        %v724 = vpop.f32.mrf.mxu0
        %v725 = vadd.f32 0.0, %v724
        %v726 = vpop.f32.mrf.mxu0
        %v727 = vadd.f32 0.0, %v726
        %728 = vmatmul.bf16.gmra.mxu0 %v662
        %v729 = vpop.f32.mrf.mxu0
        %v730 = vadd.f32 0.0, %v729
        %v731 = vpop.f32.mrf.mxu0
        %v732 = vadd.f32 0.0, %v731
        %733 = vmatmul.bf16.gmra.mxu0 %v665
        %v734 = vpop.f32.mrf.mxu0
        %v735 = vadd.f32 0.0, %v734
        %v736 = vpop.f32.mrf.mxu0
        %v737 = vadd.f32 0.0, %v736
        %738 = vmatmul.bf16.gmra.mxu0 %v668
        %v739 = vpop.f32.mrf.mxu0
        %v740 = vadd.f32 0.0, %v739
        %v741 = vpop.f32.mrf.mxu0
        %v742 = vadd.f32 0.0, %v741
        %743 = vmatmul.bf16.gmra.mxu0 %v671
        %v744 = vpop.f32.mrf.mxu0
        %v745 = vadd.f32 0.0, %v744
        %v746 = vpop.f32.mrf.mxu0
        %v747 = vadd.f32 0.0, %v746
        %748 = vmatmul.bf16.gmra.mxu0 %v674
        %v749 = vpop.f32.mrf.mxu0
        %v750 = vadd.f32 0.0, %v749
        %v751 = vpop.f32.mrf.mxu0
        %v752 = vadd.f32 0.0, %v751
        %753 = vmatmul.bf16.gmra.mxu0 %v677
        %v754 = vpop.f32.mrf.mxu0
        %v755 = vadd.f32 0.0, %v754
        %v756 = vpop.f32.mrf.mxu0
        %v757 = vadd.f32 0.0, %v756
        %758 = vmatmul.bf16.gmra.mxu0 %v680
        %v759 = vpop.f32.mrf.mxu0
        %v760 = vadd.f32 0.0, %v759
        %v761 = vpop.f32.mrf.mxu0
        %v762 = vadd.f32 0.0, %v761
        %763 = vmatmul.bf16.gmra.mxu0 %v683
        %v764 = vpop.f32.mrf.mxu0
        %v765 = vadd.f32 0.0, %v764
        %v766 = vpop.f32.mrf.mxu0
        %v767 = vadd.f32 0.0, %v766
        %768 = vmatmul.bf16.gmra.mxu0 %v686
        %v769 = vpop.f32.mrf.mxu0
        %v770 = vadd.f32 0.0, %v769
        %v771 = vpop.f32.mrf.mxu0
        %v772 = vadd.f32 0.0, %v771
        %773 = vmatmul.bf16.gmra.mxu0 %v689
        %v774 = vpop.f32.mrf.mxu0
        %v775 = vadd.f32 0.0, %v774
        %v776 = vpop.f32.mrf.mxu0
        %v777 = vadd.f32 0.0, %v776
        %778 = vmatmul.bf16.gmra.mxu0 %v692
        %v779 = vpop.f32.mrf.mxu0
        %v780 = vadd.f32 0.0, %v779
        %v781 = vpop.f32.mrf.mxu0
        %v782 = vadd.f32 0.0, %v781
        %783 = vmatmul.bf16.gmra.mxu0 %v695
        %v784 = vpop.f32.mrf.mxu0
        %v785 = vadd.f32 0.0, %v784
        %v786 = vpop.f32.mrf.mxu0
        %v787 = vadd.f32 0.0, %v786
        %788 = vmatmul.bf16.gmra.mxu0 %v698
        %v789 = vpop.f32.mrf.mxu0
        %v790 = vadd.f32 0.0, %v789
        %v791 = vpop.f32.mrf.mxu0
        %v792 = vadd.f32 0.0, %v791
        %793 = vmatmul.bf16.gmra.mxu0 %v701
        %v794 = vpop.f32.mrf.mxu0
        %v795 = vadd.f32 0.0, %v794
        %v796 = vpop.f32.mrf.mxu0
        %v797 = vadd.f32 0.0, %v796
        %798 = vdwg.mxu0
        %799 = vmatpush.bf16.msra.mxu0 0
        %800 = vmatpush.bf16.msra.mxu0 0
        %801 = vmatpush.bf16.msra.mxu0 0
        %802 = vmatpush.bf16.msra.mxu0 0
        %803 = vmatpush.bf16.msra.mxu0 0
        %804 = vmatpush.bf16.msra.mxu0 0
        %805 = vmatpush.bf16.msra.mxu0 %v708
        %806 = vmatpush.bf16.msra.mxu0 %v650
        %807 = vmatmul.bf16.gmra.mxu0 %v656
        %v808 = vpop.f32.mrf.mxu0
        %v809 = vadd.f32 0.0, %v808
        %v810 = vpop.f32.mrf.mxu0
        %v811 = vadd.f32 0.0, %v810
        %812 = vmatmul.bf16.gmra.mxu0 %v659
        %v813 = vpop.f32.mrf.mxu0
        %v814 = vadd.f32 0.0, %v813
        %v815 = vpop.f32.mrf.mxu0
        %v816 = vadd.f32 0.0, %v815
        %817 = vmatmul.bf16.gmra.mxu0 %v662
        %v818 = vpop.f32.mrf.mxu0
        %v819 = vadd.f32 0.0, %v818
        %v820 = vpop.f32.mrf.mxu0
        %v821 = vadd.f32 0.0, %v820
        %822 = vmatmul.bf16.gmra.mxu0 %v665
        %v823 = vpop.f32.mrf.mxu0
        %v824 = vadd.f32 0.0, %v823
        %v825 = vpop.f32.mrf.mxu0
        %v826 = vadd.f32 0.0, %v825
        %827 = vmatmul.bf16.gmra.mxu0 %v668
        %v828 = vpop.f32.mrf.mxu0
        %v829 = vadd.f32 0.0, %v828
        %v830 = vpop.f32.mrf.mxu0
        %v831 = vadd.f32 0.0, %v830
        %832 = vmatmul.bf16.gmra.mxu0 %v671
        %v833 = vpop.f32.mrf.mxu0
        %v834 = vadd.f32 0.0, %v833
        %v835 = vpop.f32.mrf.mxu0
        %v836 = vadd.f32 0.0, %v835
        %837 = vmatmul.bf16.gmra.mxu0 %v674
        %v838 = vpop.f32.mrf.mxu0
        %v839 = vadd.f32 0.0, %v838
        %v840 = vpop.f32.mrf.mxu0
        %v841 = vadd.f32 0.0, %v840
        %842 = vmatmul.bf16.gmra.mxu0 %v677
        %v843 = vpop.f32.mrf.mxu0
        %v844 = vadd.f32 0.0, %v843
        %v845 = vpop.f32.mrf.mxu0
        %v846 = vadd.f32 0.0, %v845
        %847 = vmatmul.bf16.gmra.mxu0 %v680
        %v848 = vpop.f32.mrf.mxu0
        %v849 = vadd.f32 0.0, %v848
        %v850 = vpop.f32.mrf.mxu0
        %v851 = vadd.f32 0.0, %v850
        %852 = vmatmul.bf16.gmra.mxu0 %v683
        %v853 = vpop.f32.mrf.mxu0
        %v854 = vadd.f32 0.0, %v853
        %v855 = vpop.f32.mrf.mxu0
        %v856 = vadd.f32 0.0, %v855
        %857 = vmatmul.bf16.gmra.mxu0 %v686
        %v858 = vpop.f32.mrf.mxu0
        %v859 = vadd.f32 0.0, %v858
        %v860 = vpop.f32.mrf.mxu0
        %v861 = vadd.f32 0.0, %v860
        %862 = vmatmul.bf16.gmra.mxu0 %v689
        %v863 = vpop.f32.mrf.mxu0
        %v864 = vadd.f32 0.0, %v863
        %v865 = vpop.f32.mrf.mxu0
        %v866 = vadd.f32 0.0, %v865
        %867 = vmatmul.bf16.gmra.mxu0 %v692
        %v868 = vpop.f32.mrf.mxu0
        %v869 = vadd.f32 0.0, %v868
        %v870 = vpop.f32.mrf.mxu0
        %v871 = vadd.f32 0.0, %v870
        %872 = vmatmul.bf16.gmra.mxu0 %v695
        %v873 = vpop.f32.mrf.mxu0
        %v874 = vadd.f32 0.0, %v873
        %v875 = vpop.f32.mrf.mxu0
        %v876 = vadd.f32 0.0, %v875
        %877 = vmatmul.bf16.gmra.mxu0 %v698
        %v878 = vpop.f32.mrf.mxu0
        %v879 = vadd.f32 0.0, %v878
        %v880 = vpop.f32.mrf.mxu0
        %v881 = vadd.f32 0.0, %v880
        %882 = vmatmul.bf16.gmra.mxu0 %v701
        %v883 = vpop.f32.mrf.mxu0
        %v884 = vadd.f32 0.0, %v883
        %v885 = vpop.f32.mrf.mxu0
        %v886 = vadd.f32 0.0, %v885
        %887 = vdwg.mxu0
        %v892 = vunpack.c.l.b16 %v580
        %v893 = vunpack.c.h.b16 %v580
        %v894 = vunpack.c.l.b16 %v581
        %v895 = vunpack.c.h.b16 %v581
        %v896 = vunpack.c.l.b16 %v582
        %v897 = vunpack.c.h.b16 %v582
        %v898 = vunpack.c.l.b16 %v583
        %v899 = vunpack.c.h.b16 %v583
        %v900 = vpack.c.b16 %v894, %v892
        %v901 = vpack.c.b16 %v895, %v893
        %v902 = vpack.c.b16 %v898, %v896
        %v903 = vpack.c.b16 %v899, %v897
        %v907 = vsel %vm451, %v564, 0
        %v910 = vsel %vm451, %v565, 0
        %v913 = vsel %vm451, %v566, 0
        %v916 = vsel %vm451, %v567, 0
        %v919 = vsel %vm451, %v568, 0
        %v922 = vsel %vm451, %v569, 0
        %v925 = vsel %vm451, %v570, 0
        %v928 = vsel %vm451, %v571, 0
        %v931 = vsel %vm451, %v572, 0
        %v934 = vsel %vm451, %v573, 0
        %v937 = vsel %vm451, %v574, 0
        %v940 = vsel %vm451, %v575, 0
        %v943 = vsel %vm451, %v576, 0
        %v946 = vsel %vm451, %v577, 0
        %v949 = vsel %vm451, %v578, 0
        %v952 = vsel %vm451, %v579, 0
        %v955 = vsel %vm703, %v902, 0
        %v958 = vsel %vm703, %v903, 0
        %960 = vmatpush.bf16.msra.mxu0 0
        %961 = vmatpush.bf16.msra.mxu0 0
        %962 = vmatpush.bf16.msra.mxu0 0
        %963 = vmatpush.bf16.msra.mxu0 0
        %964 = vmatpush.bf16.msra.mxu0 0
        %965 = vmatpush.bf16.msra.mxu0 0
        %966 = vmatpush.bf16.msra.mxu0 %v955
        %967 = vmatpush.bf16.msra.mxu0 %v900
        %968 = vmatmul.bf16.gmra.mxu0 %v907
        %v969 = vpop.f32.mrf.mxu0
        %v970 = vadd.f32 %v720, %v969
        %v971 = vpop.f32.mrf.mxu0
        %v972 = vadd.f32 %v722, %v971
        %973 = vmatmul.bf16.gmra.mxu0 %v910
        %v974 = vpop.f32.mrf.mxu0
        %v975 = vadd.f32 %v725, %v974
        %v976 = vpop.f32.mrf.mxu0
        %v977 = vadd.f32 %v727, %v976
        %978 = vmatmul.bf16.gmra.mxu0 %v913
        %v979 = vpop.f32.mrf.mxu0
        %v980 = vadd.f32 %v730, %v979
        %v981 = vpop.f32.mrf.mxu0
        %v982 = vadd.f32 %v732, %v981
        %983 = vmatmul.bf16.gmra.mxu0 %v916
        %v984 = vpop.f32.mrf.mxu0
        %v985 = vadd.f32 %v735, %v984
        %v986 = vpop.f32.mrf.mxu0
        %v987 = vadd.f32 %v737, %v986
        %988 = vmatmul.bf16.gmra.mxu0 %v919
        %v989 = vpop.f32.mrf.mxu0
        %v990 = vadd.f32 %v740, %v989
        %v991 = vpop.f32.mrf.mxu0
        %v992 = vadd.f32 %v742, %v991
        %993 = vmatmul.bf16.gmra.mxu0 %v922
        %v994 = vpop.f32.mrf.mxu0
        %v995 = vadd.f32 %v745, %v994
        %v996 = vpop.f32.mrf.mxu0
        %v997 = vadd.f32 %v747, %v996
        %998 = vmatmul.bf16.gmra.mxu0 %v925
        %v999 = vpop.f32.mrf.mxu0
        %v1000 = vadd.f32 %v750, %v999
        %v1001 = vpop.f32.mrf.mxu0
        %v1002 = vadd.f32 %v752, %v1001
        %1003 = vmatmul.bf16.gmra.mxu0 %v928
        %v1004 = vpop.f32.mrf.mxu0
        %v1005 = vadd.f32 %v755, %v1004
        %v1006 = vpop.f32.mrf.mxu0
        %v1007 = vadd.f32 %v757, %v1006
        %1008 = vmatmul.bf16.gmra.mxu0 %v931
        %v1009 = vpop.f32.mrf.mxu0
        %v1010 = vadd.f32 %v760, %v1009
        %v1011 = vpop.f32.mrf.mxu0
        %v1012 = vadd.f32 %v762, %v1011
        %1013 = vmatmul.bf16.gmra.mxu0 %v934
        %v1014 = vpop.f32.mrf.mxu0
        %v1015 = vadd.f32 %v765, %v1014
        %v1016 = vpop.f32.mrf.mxu0
        %v1017 = vadd.f32 %v767, %v1016
        %1018 = vmatmul.bf16.gmra.mxu0 %v937
        %v1019 = vpop.f32.mrf.mxu0
        %v1020 = vadd.f32 %v770, %v1019
        %v1021 = vpop.f32.mrf.mxu0
        %v1022 = vadd.f32 %v772, %v1021
        %1023 = vmatmul.bf16.gmra.mxu0 %v940
        %v1024 = vpop.f32.mrf.mxu0
        %v1025 = vadd.f32 %v775, %v1024
        %v1026 = vpop.f32.mrf.mxu0
        %v1027 = vadd.f32 %v777, %v1026
        %1028 = vmatmul.bf16.gmra.mxu0 %v943
        %v1029 = vpop.f32.mrf.mxu0
        %v1030 = vadd.f32 %v780, %v1029
        %v1031 = vpop.f32.mrf.mxu0
        %v1032 = vadd.f32 %v782, %v1031
        %1033 = vmatmul.bf16.gmra.mxu0 %v946
        %v1034 = vpop.f32.mrf.mxu0
        %v1035 = vadd.f32 %v785, %v1034
        %v1036 = vpop.f32.mrf.mxu0
        %v1037 = vadd.f32 %v787, %v1036
        %1038 = vmatmul.bf16.gmra.mxu0 %v949
        %v1039 = vpop.f32.mrf.mxu0
        %v1040 = vadd.f32 %v790, %v1039
        %v1041 = vpop.f32.mrf.mxu0
        %v1042 = vadd.f32 %v792, %v1041
        %1043 = vmatmul.bf16.gmra.mxu0 %v952
        %v1044 = vpop.f32.mrf.mxu0
        %v1045 = vadd.f32 %v795, %v1044
        %v1046 = vpop.f32.mrf.mxu0
        %v1047 = vadd.f32 %v797, %v1046
        %1048 = vdwg.mxu0
        %1049 = vmatpush.bf16.msra.mxu0 0
        %1050 = vmatpush.bf16.msra.mxu0 0
        %1051 = vmatpush.bf16.msra.mxu0 0
        %1052 = vmatpush.bf16.msra.mxu0 0
        %1053 = vmatpush.bf16.msra.mxu0 0
        %1054 = vmatpush.bf16.msra.mxu0 0
        %1055 = vmatpush.bf16.msra.mxu0 %v958
        %1056 = vmatpush.bf16.msra.mxu0 %v901
        %1057 = vmatmul.bf16.gmra.mxu0 %v907
        %v1058 = vpop.f32.mrf.mxu0
        %v1059 = vadd.f32 %v809, %v1058
        %v1060 = vpop.f32.mrf.mxu0
        %v1061 = vadd.f32 %v811, %v1060
        %1062 = vmatmul.bf16.gmra.mxu0 %v910
        %v1063 = vpop.f32.mrf.mxu0
        %v1064 = vadd.f32 %v814, %v1063
        %v1065 = vpop.f32.mrf.mxu0
        %v1066 = vadd.f32 %v816, %v1065
        %1067 = vmatmul.bf16.gmra.mxu0 %v913
        %v1068 = vpop.f32.mrf.mxu0
        %v1069 = vadd.f32 %v819, %v1068
        %v1070 = vpop.f32.mrf.mxu0
        %v1071 = vadd.f32 %v821, %v1070
        %1072 = vmatmul.bf16.gmra.mxu0 %v916
        %v1073 = vpop.f32.mrf.mxu0
        %v1074 = vadd.f32 %v824, %v1073
        %v1075 = vpop.f32.mrf.mxu0
        %v1076 = vadd.f32 %v826, %v1075
        %1077 = vmatmul.bf16.gmra.mxu0 %v919
        %v1078 = vpop.f32.mrf.mxu0
        %v1079 = vadd.f32 %v829, %v1078
        %v1080 = vpop.f32.mrf.mxu0
        %v1081 = vadd.f32 %v831, %v1080
        %1082 = vmatmul.bf16.gmra.mxu0 %v922
        %v1083 = vpop.f32.mrf.mxu0
        %v1084 = vadd.f32 %v834, %v1083
        %v1085 = vpop.f32.mrf.mxu0
        %v1086 = vadd.f32 %v836, %v1085
        %1087 = vmatmul.bf16.gmra.mxu0 %v925
        %v1088 = vpop.f32.mrf.mxu0
        %v1089 = vadd.f32 %v839, %v1088
        %v1090 = vpop.f32.mrf.mxu0
        %v1091 = vadd.f32 %v841, %v1090
        %1092 = vmatmul.bf16.gmra.mxu0 %v928
        %v1093 = vpop.f32.mrf.mxu0
        %v1094 = vadd.f32 %v844, %v1093
        %v1095 = vpop.f32.mrf.mxu0
        %v1096 = vadd.f32 %v846, %v1095
        %1097 = vmatmul.bf16.gmra.mxu0 %v931
        %v1098 = vpop.f32.mrf.mxu0
        %v1099 = vadd.f32 %v849, %v1098
        %v1100 = vpop.f32.mrf.mxu0
        %v1101 = vadd.f32 %v851, %v1100
        %1102 = vmatmul.bf16.gmra.mxu0 %v934
        %v1103 = vpop.f32.mrf.mxu0
        %v1104 = vadd.f32 %v854, %v1103
        %v1105 = vpop.f32.mrf.mxu0
        %v1106 = vadd.f32 %v856, %v1105
        %1107 = vmatmul.bf16.gmra.mxu0 %v937
        %v1108 = vpop.f32.mrf.mxu0
        %v1109 = vadd.f32 %v859, %v1108
        %v1110 = vpop.f32.mrf.mxu0
        %v1111 = vadd.f32 %v861, %v1110
        %1112 = vmatmul.bf16.gmra.mxu0 %v940
        %v1113 = vpop.f32.mrf.mxu0
        %v1114 = vadd.f32 %v864, %v1113
        %v1115 = vpop.f32.mrf.mxu0
        %v1116 = vadd.f32 %v866, %v1115
        %1117 = vmatmul.bf16.gmra.mxu0 %v943
        %v1118 = vpop.f32.mrf.mxu0
        %v1119 = vadd.f32 %v869, %v1118
        %v1120 = vpop.f32.mrf.mxu0
        %v1121 = vadd.f32 %v871, %v1120
        %1122 = vmatmul.bf16.gmra.mxu0 %v946
        %v1123 = vpop.f32.mrf.mxu0
        %v1124 = vadd.f32 %v874, %v1123
        %v1125 = vpop.f32.mrf.mxu0
        %v1126 = vadd.f32 %v876, %v1125
        %1127 = vmatmul.bf16.gmra.mxu0 %v949
        %v1128 = vpop.f32.mrf.mxu0
        %v1129 = vadd.f32 %v879, %v1128
        %v1130 = vpop.f32.mrf.mxu0
        %v1131 = vadd.f32 %v881, %v1130
        %1132 = vmatmul.bf16.gmra.mxu0 %v952
        %v1133 = vpop.f32.mrf.mxu0
        %v1134 = vadd.f32 %v884, %v1133
        %v1135 = vpop.f32.mrf.mxu0
        %v1136 = vadd.f32 %v886, %v1135
        %1137 = vdwg.mxu0
        %v1138 = vld [vmem:[#allocation2 + $0x2] sm:$0xff]
        %v1139 = vld [vmem:[#allocation2 + $0xa] sm:$0xff]
        %v1140 = vld [vmem:[#allocation2 + $0x12] sm:$0xff]
        %v1141 = vld [vmem:[#allocation2 + $0x1a] sm:$0xff]
        %v1142 = vld [vmem:[#allocation2 + $0x22] sm:$0xff]
        %v1143 = vld [vmem:[#allocation2 + $0x2a] sm:$0xff]
        %v1144 = vld [vmem:[#allocation2 + $0x32] sm:$0xff]
        %v1145 = vld [vmem:[#allocation2 + $0x3a] sm:$0xff]
        %v1146 = vld [vmem:[#allocation2 + $0x42] sm:$0xff]
        %v1147 = vld [vmem:[#allocation2 + $0x4a] sm:$0xff]
        %v1148 = vld [vmem:[#allocation2 + $0x52] sm:$0xff]
        %v1149 = vld [vmem:[#allocation2 + $0x5a] sm:$0xff]
        %v1150 = vld [vmem:[#allocation2 + $0x62] sm:$0xff]
        %v1151 = vld [vmem:[#allocation2 + $0x6a] sm:$0xff]
        %v1152 = vld [vmem:[#allocation2 + $0x72] sm:$0xff]
        %v1153 = vld [vmem:[#allocation2 + $0x7a] sm:$0xff]
        %v1154 = vld [vmem:[#allocation2 + $0x82] sm:$0xff]
        %v1155 = vld [vmem:[#allocation2 + $0x8a] sm:$0xff]
        %v1156 = vld [vmem:[#allocation2 + $0x92] sm:$0xff]
        %v1157 = vld [vmem:[#allocation2 + $0x9a] sm:$0xff]
        %v1158 = vld [vmem:[#allocation2 + $0xa2] sm:$0xff]
        %v1159 = vld [vmem:[#allocation2 + $0xaa] sm:$0xff]
        %v1160 = vld [vmem:[#allocation2 + $0xb2] sm:$0xff]
        %v1161 = vld [vmem:[#allocation2 + $0xba] sm:$0xff]
        %v1162 = vld [vmem:[#allocation2 + $0xc2] sm:$0xff]
        %v1163 = vld [vmem:[#allocation2 + $0xca] sm:$0xff]
        %v1164 = vld [vmem:[#allocation2 + $0xd2] sm:$0xff]
        %v1165 = vld [vmem:[#allocation2 + $0xda] sm:$0xff]
        %v1166 = vld [vmem:[#allocation2 + $0xe2] sm:$0xff]
        %v1167 = vld [vmem:[#allocation2 + $0xea] sm:$0xff]
        %v1168 = vld [vmem:[#allocation2 + $0xf2] sm:$0xff]
        %v1169 = vld [vmem:[#allocation2 + $0xfa] sm:$0xff]
        %v1170 = vpack.c.bf16 %v1139, %v1138
        %v1171 = vpack.c.bf16 %v1141, %v1140
        %v1172 = vpack.c.bf16 %v1143, %v1142
        %v1173 = vpack.c.bf16 %v1145, %v1144
        %v1174 = vpack.c.bf16 %v1147, %v1146
        %v1175 = vpack.c.bf16 %v1149, %v1148
        %v1176 = vpack.c.bf16 %v1151, %v1150
        %v1177 = vpack.c.bf16 %v1153, %v1152
        %v1178 = vpack.c.bf16 %v1155, %v1154
        %v1179 = vpack.c.bf16 %v1157, %v1156
        %v1180 = vpack.c.bf16 %v1159, %v1158
        %v1181 = vpack.c.bf16 %v1161, %v1160
        %v1182 = vpack.c.bf16 %v1163, %v1162
        %v1183 = vpack.c.bf16 %v1165, %v1164
        %v1184 = vpack.c.bf16 %v1167, %v1166
        %v1185 = vpack.c.bf16 %v1169, %v1168
        %s1186 = scalar_lea.vmem %s1, 64
        %v1187 = vld [vmem:[%s1186] sm:$0xff]
        %v1188 = vld [vmem:[%s1186 + $0x8] sm:$0xff]
        %v1189 = vld [vmem:[%s1186 + $0x10] sm:$0xff]
        %v1190 = vld [vmem:[%s1186 + $0x18] sm:$0x33]
        %v1195 = vunpack.c.l.b16 %v1187
        %v1196 = vunpack.c.h.b16 %v1187
        %v1197 = vunpack.c.l.b16 %v1188
        %v1198 = vunpack.c.h.b16 %v1188
        %v1199 = vunpack.c.l.b16 %v1189
        %v1200 = vunpack.c.h.b16 %v1189
        %v1201 = vunpack.c.l.b16 %v1190
        %v1202 = vunpack.c.h.b16 %v1190
        %v1203 = vpack.c.b16 %v1197, %v1195
        %v1204 = vpack.c.b16 %v1198, %v1196
        %v1205 = vpack.c.b16 %v1201, %v1199
        %v1206 = vpack.c.b16 %v1202, %v1200
        %v1210 = vsel %vm451, %v1170, 0
        %v1213 = vsel %vm451, %v1171, 0
        %v1216 = vsel %vm451, %v1172, 0
        %v1219 = vsel %vm451, %v1173, 0
        %v1222 = vsel %vm451, %v1174, 0
        %v1225 = vsel %vm451, %v1175, 0
        %v1228 = vsel %vm451, %v1176, 0
        %v1231 = vsel %vm451, %v1177, 0
        %v1234 = vsel %vm451, %v1178, 0
        %v1237 = vsel %vm451, %v1179, 0
        %v1240 = vsel %vm451, %v1180, 0
        %v1243 = vsel %vm451, %v1181, 0
        %v1246 = vsel %vm451, %v1182, 0
        %v1249 = vsel %vm451, %v1183, 0
        %v1252 = vsel %vm451, %v1184, 0
        %v1255 = vsel %vm451, %v1185, 0
        %v1258 = vsel %vm703, %v1205, 0
        %v1261 = vsel %vm703, %v1206, 0
        %1263 = vmatpush.bf16.msra.mxu0 0
        %1264 = vmatpush.bf16.msra.mxu0 0
        %1265 = vmatpush.bf16.msra.mxu0 0
        %1266 = vmatpush.bf16.msra.mxu0 0
        %1267 = vmatpush.bf16.msra.mxu0 0
        %1268 = vmatpush.bf16.msra.mxu0 0
        %1269 = vmatpush.bf16.msra.mxu0 %v1258
        %1270 = vmatpush.bf16.msra.mxu0 %v1203
        %1271 = vmatmul.bf16.gmra.mxu0 %v1210
        %v1272 = vpop.f32.mrf.mxu0
        %v1273 = vadd.f32 0.0, %v1272
        %v1274 = vpop.f32.mrf.mxu0
        %v1275 = vadd.f32 0.0, %v1274
        %1276 = vmatmul.bf16.gmra.mxu0 %v1213
        %v1277 = vpop.f32.mrf.mxu0
        %v1278 = vadd.f32 0.0, %v1277
        %v1279 = vpop.f32.mrf.mxu0
        %v1280 = vadd.f32 0.0, %v1279
        %1281 = vmatmul.bf16.gmra.mxu0 %v1216
        %v1282 = vpop.f32.mrf.mxu0
        %v1283 = vadd.f32 0.0, %v1282
        %v1284 = vpop.f32.mrf.mxu0
        %v1285 = vadd.f32 0.0, %v1284
        %1286 = vmatmul.bf16.gmra.mxu0 %v1219
        %v1287 = vpop.f32.mrf.mxu0
        %v1288 = vadd.f32 0.0, %v1287
        %v1289 = vpop.f32.mrf.mxu0
        %v1290 = vadd.f32 0.0, %v1289
        %1291 = vmatmul.bf16.gmra.mxu0 %v1222
        %v1292 = vpop.f32.mrf.mxu0
        %v1293 = vadd.f32 0.0, %v1292
        %v1294 = vpop.f32.mrf.mxu0
        %v1295 = vadd.f32 0.0, %v1294
        %1296 = vmatmul.bf16.gmra.mxu0 %v1225
        %v1297 = vpop.f32.mrf.mxu0
        %v1298 = vadd.f32 0.0, %v1297
        %v1299 = vpop.f32.mrf.mxu0
        %v1300 = vadd.f32 0.0, %v1299
        %1301 = vmatmul.bf16.gmra.mxu0 %v1228
        %v1302 = vpop.f32.mrf.mxu0
        %v1303 = vadd.f32 0.0, %v1302
        %v1304 = vpop.f32.mrf.mxu0
        %v1305 = vadd.f32 0.0, %v1304
        %1306 = vmatmul.bf16.gmra.mxu0 %v1231
        %v1307 = vpop.f32.mrf.mxu0
        %v1308 = vadd.f32 0.0, %v1307
        %v1309 = vpop.f32.mrf.mxu0
        %v1310 = vadd.f32 0.0, %v1309
        %1311 = vmatmul.bf16.gmra.mxu0 %v1234
        %v1312 = vpop.f32.mrf.mxu0
        %v1313 = vadd.f32 0.0, %v1312
        %v1314 = vpop.f32.mrf.mxu0
        %v1315 = vadd.f32 0.0, %v1314
        %1316 = vmatmul.bf16.gmra.mxu0 %v1237
        %v1317 = vpop.f32.mrf.mxu0
        %v1318 = vadd.f32 0.0, %v1317
        %v1319 = vpop.f32.mrf.mxu0
        %v1320 = vadd.f32 0.0, %v1319
        %1321 = vmatmul.bf16.gmra.mxu0 %v1240
        %v1322 = vpop.f32.mrf.mxu0
        %v1323 = vadd.f32 0.0, %v1322
        %v1324 = vpop.f32.mrf.mxu0
        %v1325 = vadd.f32 0.0, %v1324
        %1326 = vmatmul.bf16.gmra.mxu0 %v1243
        %v1327 = vpop.f32.mrf.mxu0
        %v1328 = vadd.f32 0.0, %v1327
        %v1329 = vpop.f32.mrf.mxu0
        %v1330 = vadd.f32 0.0, %v1329
        %1331 = vmatmul.bf16.gmra.mxu0 %v1246
        %v1332 = vpop.f32.mrf.mxu0
        %v1333 = vadd.f32 0.0, %v1332
        %v1334 = vpop.f32.mrf.mxu0
        %v1335 = vadd.f32 0.0, %v1334
        %1336 = vmatmul.bf16.gmra.mxu0 %v1249
        %v1337 = vpop.f32.mrf.mxu0
        %v1338 = vadd.f32 0.0, %v1337
        %v1339 = vpop.f32.mrf.mxu0
        %v1340 = vadd.f32 0.0, %v1339
        %1341 = vmatmul.bf16.gmra.mxu0 %v1252
        %v1342 = vpop.f32.mrf.mxu0
        %v1343 = vadd.f32 0.0, %v1342
        %v1344 = vpop.f32.mrf.mxu0
        %v1345 = vadd.f32 0.0, %v1344
        %1346 = vmatmul.bf16.gmra.mxu0 %v1255
        %v1347 = vpop.f32.mrf.mxu0
        %v1348 = vadd.f32 0.0, %v1347
        %v1349 = vpop.f32.mrf.mxu0
        %v1350 = vadd.f32 0.0, %v1349
        %1351 = vdwg.mxu0
        %1352 = vmatpush.bf16.msra.mxu0 0
        %1353 = vmatpush.bf16.msra.mxu0 0
        %1354 = vmatpush.bf16.msra.mxu0 0
        %1355 = vmatpush.bf16.msra.mxu0 0
        %1356 = vmatpush.bf16.msra.mxu0 0
        %1357 = vmatpush.bf16.msra.mxu0 0
        %1358 = vmatpush.bf16.msra.mxu0 %v1261
        %1359 = vmatpush.bf16.msra.mxu0 %v1204
        %1360 = vmatmul.bf16.gmra.mxu0 %v1210
        %v1361 = vpop.f32.mrf.mxu0
        %v1362 = vadd.f32 0.0, %v1361
        %v1363 = vpop.f32.mrf.mxu0
        %v1364 = vadd.f32 0.0, %v1363
        %1365 = vmatmul.bf16.gmra.mxu0 %v1213
        %v1366 = vpop.f32.mrf.mxu0
        %v1367 = vadd.f32 0.0, %v1366
        %v1368 = vpop.f32.mrf.mxu0
        %v1369 = vadd.f32 0.0, %v1368
        %1370 = vmatmul.bf16.gmra.mxu0 %v1216
        %v1371 = vpop.f32.mrf.mxu0
        %v1372 = vadd.f32 0.0, %v1371
        %v1373 = vpop.f32.mrf.mxu0
        %v1374 = vadd.f32 0.0, %v1373
        %1375 = vmatmul.bf16.gmra.mxu0 %v1219
        %v1376 = vpop.f32.mrf.mxu0
        %v1377 = vadd.f32 0.0, %v1376
        %v1378 = vpop.f32.mrf.mxu0
        %v1379 = vadd.f32 0.0, %v1378
        %1380 = vmatmul.bf16.gmra.mxu0 %v1222
        %v1381 = vpop.f32.mrf.mxu0
        %v1382 = vadd.f32 0.0, %v1381
        %v1383 = vpop.f32.mrf.mxu0
        %v1384 = vadd.f32 0.0, %v1383
        %1385 = vmatmul.bf16.gmra.mxu0 %v1225
        %v1386 = vpop.f32.mrf.mxu0
        %v1387 = vadd.f32 0.0, %v1386
        %v1388 = vpop.f32.mrf.mxu0
        %v1389 = vadd.f32 0.0, %v1388
        %1390 = vmatmul.bf16.gmra.mxu0 %v1228
        %v1391 = vpop.f32.mrf.mxu0
        %v1392 = vadd.f32 0.0, %v1391
        %v1393 = vpop.f32.mrf.mxu0
        %v1394 = vadd.f32 0.0, %v1393
        %1395 = vmatmul.bf16.gmra.mxu0 %v1231
        %v1396 = vpop.f32.mrf.mxu0
        %v1397 = vadd.f32 0.0, %v1396
        %v1398 = vpop.f32.mrf.mxu0
        %v1399 = vadd.f32 0.0, %v1398
        %1400 = vmatmul.bf16.gmra.mxu0 %v1234
        %v1401 = vpop.f32.mrf.mxu0
        %v1402 = vadd.f32 0.0, %v1401
        %v1403 = vpop.f32.mrf.mxu0
        %v1404 = vadd.f32 0.0, %v1403
        %1405 = vmatmul.bf16.gmra.mxu0 %v1237
        %v1406 = vpop.f32.mrf.mxu0
        %v1407 = vadd.f32 0.0, %v1406
        %v1408 = vpop.f32.mrf.mxu0
        %v1409 = vadd.f32 0.0, %v1408
        %1410 = vmatmul.bf16.gmra.mxu0 %v1240
        %v1411 = vpop.f32.mrf.mxu0
        %v1412 = vadd.f32 0.0, %v1411
        %v1413 = vpop.f32.mrf.mxu0
        %v1414 = vadd.f32 0.0, %v1413
        %1415 = vmatmul.bf16.gmra.mxu0 %v1243
        %v1416 = vpop.f32.mrf.mxu0
        %v1417 = vadd.f32 0.0, %v1416
        %v1418 = vpop.f32.mrf.mxu0
        %v1419 = vadd.f32 0.0, %v1418
        %1420 = vmatmul.bf16.gmra.mxu0 %v1246
        %v1421 = vpop.f32.mrf.mxu0
        %v1422 = vadd.f32 0.0, %v1421
        %v1423 = vpop.f32.mrf.mxu0
        %v1424 = vadd.f32 0.0, %v1423
        %1425 = vmatmul.bf16.gmra.mxu0 %v1249
        %v1426 = vpop.f32.mrf.mxu0
        %v1427 = vadd.f32 0.0, %v1426
        %v1428 = vpop.f32.mrf.mxu0
        %v1429 = vadd.f32 0.0, %v1428
        %1430 = vmatmul.bf16.gmra.mxu0 %v1252
        %v1431 = vpop.f32.mrf.mxu0
        %v1432 = vadd.f32 0.0, %v1431
        %v1433 = vpop.f32.mrf.mxu0
        %v1434 = vadd.f32 0.0, %v1433
        %1435 = vmatmul.bf16.gmra.mxu0 %v1255
        %v1436 = vpop.f32.mrf.mxu0
        %v1437 = vadd.f32 0.0, %v1436
        %v1438 = vpop.f32.mrf.mxu0
        %v1439 = vadd.f32 0.0, %v1438
        %1440 = vdwg.mxu0
        %v1441 = vadd.f32 %v970, %v1273
        %v1442 = vadd.f32 %v1059, %v1362
        %v1443 = vadd.f32 %v972, %v1275
        %v1444 = vadd.f32 %v1061, %v1364
        %v1445 = vadd.f32 %v975, %v1278
        %v1446 = vadd.f32 %v1064, %v1367
        %v1447 = vadd.f32 %v977, %v1280
        %v1448 = vadd.f32 %v1066, %v1369
        %v1449 = vadd.f32 %v980, %v1283
        %v1450 = vadd.f32 %v1069, %v1372
        %v1451 = vadd.f32 %v982, %v1285
        %v1452 = vadd.f32 %v1071, %v1374
        %v1453 = vadd.f32 %v985, %v1288
        %v1454 = vadd.f32 %v1074, %v1377
        %v1455 = vadd.f32 %v987, %v1290
        %v1456 = vadd.f32 %v1076, %v1379
        %v1457 = vadd.f32 %v990, %v1293
        %v1458 = vadd.f32 %v1079, %v1382
        %v1459 = vadd.f32 %v992, %v1295
        %v1460 = vadd.f32 %v1081, %v1384
        %v1461 = vadd.f32 %v995, %v1298
        %v1462 = vadd.f32 %v1084, %v1387
        %v1463 = vadd.f32 %v997, %v1300
        %v1464 = vadd.f32 %v1086, %v1389
        %v1465 = vadd.f32 %v1000, %v1303
        %v1466 = vadd.f32 %v1089, %v1392
        %v1467 = vadd.f32 %v1002, %v1305
        %v1468 = vadd.f32 %v1091, %v1394
        %v1469 = vadd.f32 %v1005, %v1308
        %v1470 = vadd.f32 %v1094, %v1397
        %v1471 = vadd.f32 %v1007, %v1310
        %v1472 = vadd.f32 %v1096, %v1399
        %v1473 = vadd.f32 %v1010, %v1313
        %v1474 = vadd.f32 %v1099, %v1402
        %v1475 = vadd.f32 %v1012, %v1315
        %v1476 = vadd.f32 %v1101, %v1404
        %v1477 = vadd.f32 %v1015, %v1318
        %v1478 = vadd.f32 %v1104, %v1407
        %v1479 = vadd.f32 %v1017, %v1320
        %v1480 = vadd.f32 %v1106, %v1409
        %v1481 = vadd.f32 %v1020, %v1323
        %v1482 = vadd.f32 %v1109, %v1412
        %v1483 = vadd.f32 %v1022, %v1325
        %v1484 = vadd.f32 %v1111, %v1414
        %v1485 = vadd.f32 %v1025, %v1328
        %v1486 = vadd.f32 %v1114, %v1417
        %v1487 = vadd.f32 %v1027, %v1330
        %v1488 = vadd.f32 %v1116, %v1419
        %v1489 = vadd.f32 %v1030, %v1333
        %v1490 = vadd.f32 %v1119, %v1422
        %v1491 = vadd.f32 %v1032, %v1335
        %v1492 = vadd.f32 %v1121, %v1424
        %v1493 = vadd.f32 %v1035, %v1338
        %v1494 = vadd.f32 %v1124, %v1427
        %v1495 = vadd.f32 %v1037, %v1340
        %v1496 = vadd.f32 %v1126, %v1429
        %v1497 = vadd.f32 %v1040, %v1343
        %v1498 = vadd.f32 %v1129, %v1432
        %v1499 = vadd.f32 %v1042, %v1345
        %v1500 = vadd.f32 %v1131, %v1434
        %v1501 = vadd.f32 %v1045, %v1348
        %v1502 = vadd.f32 %v1134, %v1437
        %v1503 = vadd.f32 %v1047, %v1350
        %v1504 = vadd.f32 %v1136, %v1439
        %v1505 = vld [vmem:[#allocation2 + $0x3] sm:$0xff]
        %v1506 = vld [vmem:[#allocation2 + $0xb] sm:$0xff]
        %v1507 = vld [vmem:[#allocation2 + $0x13] sm:$0xff]
        %v1508 = vld [vmem:[#allocation2 + $0x1b] sm:$0xff]
        %v1509 = vld [vmem:[#allocation2 + $0x23] sm:$0xff]
        %v1510 = vld [vmem:[#allocation2 + $0x2b] sm:$0xff]
        %v1511 = vld [vmem:[#allocation2 + $0x33] sm:$0xff]
        %v1512 = vld [vmem:[#allocation2 + $0x3b] sm:$0xff]
        %v1513 = vld [vmem:[#allocation2 + $0x43] sm:$0xff]
        %v1514 = vld [vmem:[#allocation2 + $0x4b] sm:$0xff]
        %v1515 = vld [vmem:[#allocation2 + $0x53] sm:$0xff]
        %v1516 = vld [vmem:[#allocation2 + $0x5b] sm:$0xff]
        %v1517 = vld [vmem:[#allocation2 + $0x63] sm:$0xff]
        %v1518 = vld [vmem:[#allocation2 + $0x6b] sm:$0xff]
        %v1519 = vld [vmem:[#allocation2 + $0x73] sm:$0xff]
        %v1520 = vld [vmem:[#allocation2 + $0x7b] sm:$0xff]
        %v1521 = vld [vmem:[#allocation2 + $0x83] sm:$0xff]
        %v1522 = vld [vmem:[#allocation2 + $0x8b] sm:$0xff]
        %v1523 = vld [vmem:[#allocation2 + $0x93] sm:$0xff]
        %v1524 = vld [vmem:[#allocation2 + $0x9b] sm:$0xff]
        %v1525 = vld [vmem:[#allocation2 + $0xa3] sm:$0xff]
        %v1526 = vld [vmem:[#allocation2 + $0xab] sm:$0xff]
        %v1527 = vld [vmem:[#allocation2 + $0xb3] sm:$0xff]
        %v1528 = vld [vmem:[#allocation2 + $0xbb] sm:$0xff]
        %v1529 = vld [vmem:[#allocation2 + $0xc3] sm:$0xff]
        %v1530 = vld [vmem:[#allocation2 + $0xcb] sm:$0xff]
        %v1531 = vld [vmem:[#allocation2 + $0xd3] sm:$0xff]
        %v1532 = vld [vmem:[#allocation2 + $0xdb] sm:$0xff]
        %v1533 = vld [vmem:[#allocation2 + $0xe3] sm:$0xff]
        %v1534 = vld [vmem:[#allocation2 + $0xeb] sm:$0xff]
        %v1535 = vld [vmem:[#allocation2 + $0xf3] sm:$0xff]
        %v1536 = vld [vmem:[#allocation2 + $0xfb] sm:$0xff]
        %v1537 = vpack.c.bf16 %v1506, %v1505
        %v1538 = vpack.c.bf16 %v1508, %v1507
        %v1539 = vpack.c.bf16 %v1510, %v1509
        %v1540 = vpack.c.bf16 %v1512, %v1511
        %v1541 = vpack.c.bf16 %v1514, %v1513
        %v1542 = vpack.c.bf16 %v1516, %v1515
        %v1543 = vpack.c.bf16 %v1518, %v1517
        %v1544 = vpack.c.bf16 %v1520, %v1519
        %v1545 = vpack.c.bf16 %v1522, %v1521
        %v1546 = vpack.c.bf16 %v1524, %v1523
        %v1547 = vpack.c.bf16 %v1526, %v1525
        %v1548 = vpack.c.bf16 %v1528, %v1527
        %v1549 = vpack.c.bf16 %v1530, %v1529
        %v1550 = vpack.c.bf16 %v1532, %v1531
        %v1551 = vpack.c.bf16 %v1534, %v1533
        %v1552 = vpack.c.bf16 %v1536, %v1535
        %s1553 = scalar_lea.vmem %s1, 96
        %v1554 = vld [vmem:[%s1553] sm:$0xff]
        %v1555 = vld [vmem:[%s1553 + $0x8] sm:$0xff]
        %v1556 = vld [vmem:[%s1553 + $0x10] sm:$0xff]
        %v1557 = vld [vmem:[%s1553 + $0x18] sm:$0x33]
        %v1562 = vunpack.c.l.b16 %v1554
        %v1563 = vunpack.c.h.b16 %v1554
        %v1564 = vunpack.c.l.b16 %v1555
        %v1565 = vunpack.c.h.b16 %v1555
        %v1566 = vunpack.c.l.b16 %v1556
        %v1567 = vunpack.c.h.b16 %v1556
        %v1568 = vunpack.c.l.b16 %v1557
        %v1569 = vunpack.c.h.b16 %v1557
        %v1570 = vpack.c.b16 %v1564, %v1562
        %v1571 = vpack.c.b16 %v1565, %v1563
        %v1572 = vpack.c.b16 %v1568, %v1566
        %v1573 = vpack.c.b16 %v1569, %v1567
        %v1577 = vsel %vm451, %v1537, 0
        %v1580 = vsel %vm451, %v1538, 0
        %v1583 = vsel %vm451, %v1539, 0
        %v1586 = vsel %vm451, %v1540, 0
        %v1589 = vsel %vm451, %v1541, 0
        %v1592 = vsel %vm451, %v1542, 0
        %v1595 = vsel %vm451, %v1543, 0
        %v1598 = vsel %vm451, %v1544, 0
        %v1601 = vsel %vm451, %v1545, 0
        %v1604 = vsel %vm451, %v1546, 0
        %v1607 = vsel %vm451, %v1547, 0
        %v1610 = vsel %vm451, %v1548, 0
        %v1613 = vsel %vm451, %v1549, 0
        %v1616 = vsel %vm451, %v1550, 0
        %v1619 = vsel %vm451, %v1551, 0
        %v1622 = vsel %vm451, %v1552, 0
        %v1625 = vsel %vm703, %v1572, 0
        %v1628 = vsel %vm703, %v1573, 0
        %1630 = vmatpush.bf16.msra.mxu0 0
        %1631 = vmatpush.bf16.msra.mxu0 0
        %1632 = vmatpush.bf16.msra.mxu0 0
        %1633 = vmatpush.bf16.msra.mxu0 0
        %1634 = vmatpush.bf16.msra.mxu0 0
        %1635 = vmatpush.bf16.msra.mxu0 0
        %1636 = vmatpush.bf16.msra.mxu0 %v1625
        %1637 = vmatpush.bf16.msra.mxu0 %v1570
        %1638 = vmatmul.bf16.gmra.mxu0 %v1577
        %v1639 = vpop.f32.mrf.mxu0
        %v1640 = vadd.f32 0.0, %v1639
        %v1641 = vpop.f32.mrf.mxu0
        %v1642 = vadd.f32 0.0, %v1641
        %1643 = vmatmul.bf16.gmra.mxu0 %v1580
        %v1644 = vpop.f32.mrf.mxu0
        %v1645 = vadd.f32 0.0, %v1644
        %v1646 = vpop.f32.mrf.mxu0
        %v1647 = vadd.f32 0.0, %v1646
        %1648 = vmatmul.bf16.gmra.mxu0 %v1583
        %v1649 = vpop.f32.mrf.mxu0
        %v1650 = vadd.f32 0.0, %v1649
        %v1651 = vpop.f32.mrf.mxu0
        %v1652 = vadd.f32 0.0, %v1651
        %1653 = vmatmul.bf16.gmra.mxu0 %v1586
        %v1654 = vpop.f32.mrf.mxu0
        %v1655 = vadd.f32 0.0, %v1654
        %v1656 = vpop.f32.mrf.mxu0
        %v1657 = vadd.f32 0.0, %v1656
        %1658 = vmatmul.bf16.gmra.mxu0 %v1589
        %v1659 = vpop.f32.mrf.mxu0
        %v1660 = vadd.f32 0.0, %v1659
        %v1661 = vpop.f32.mrf.mxu0
        %v1662 = vadd.f32 0.0, %v1661
        %1663 = vmatmul.bf16.gmra.mxu0 %v1592
        %v1664 = vpop.f32.mrf.mxu0
        %v1665 = vadd.f32 0.0, %v1664
        %v1666 = vpop.f32.mrf.mxu0
        %v1667 = vadd.f32 0.0, %v1666
        %1668 = vmatmul.bf16.gmra.mxu0 %v1595
        %v1669 = vpop.f32.mrf.mxu0
        %v1670 = vadd.f32 0.0, %v1669
        %v1671 = vpop.f32.mrf.mxu0
        %v1672 = vadd.f32 0.0, %v1671
        %1673 = vmatmul.bf16.gmra.mxu0 %v1598
        %v1674 = vpop.f32.mrf.mxu0
        %v1675 = vadd.f32 0.0, %v1674
        %v1676 = vpop.f32.mrf.mxu0
        %v1677 = vadd.f32 0.0, %v1676
        %1678 = vmatmul.bf16.gmra.mxu0 %v1601
        %v1679 = vpop.f32.mrf.mxu0
        %v1680 = vadd.f32 0.0, %v1679
        %v1681 = vpop.f32.mrf.mxu0
        %v1682 = vadd.f32 0.0, %v1681
        %1683 = vmatmul.bf16.gmra.mxu0 %v1604
        %v1684 = vpop.f32.mrf.mxu0
        %v1685 = vadd.f32 0.0, %v1684
        %v1686 = vpop.f32.mrf.mxu0
        %v1687 = vadd.f32 0.0, %v1686
        %1688 = vmatmul.bf16.gmra.mxu0 %v1607
        %v1689 = vpop.f32.mrf.mxu0
        %v1690 = vadd.f32 0.0, %v1689
        %v1691 = vpop.f32.mrf.mxu0
        %v1692 = vadd.f32 0.0, %v1691
        %1693 = vmatmul.bf16.gmra.mxu0 %v1610
        %v1694 = vpop.f32.mrf.mxu0
        %v1695 = vadd.f32 0.0, %v1694
        %v1696 = vpop.f32.mrf.mxu0
        %v1697 = vadd.f32 0.0, %v1696
        %1698 = vmatmul.bf16.gmra.mxu0 %v1613
        %v1699 = vpop.f32.mrf.mxu0
        %v1700 = vadd.f32 0.0, %v1699
        %v1701 = vpop.f32.mrf.mxu0
        %v1702 = vadd.f32 0.0, %v1701
        %1703 = vmatmul.bf16.gmra.mxu0 %v1616
        %v1704 = vpop.f32.mrf.mxu0
        %v1705 = vadd.f32 0.0, %v1704
        %v1706 = vpop.f32.mrf.mxu0
        %v1707 = vadd.f32 0.0, %v1706
        %1708 = vmatmul.bf16.gmra.mxu0 %v1619
        %v1709 = vpop.f32.mrf.mxu0
        %v1710 = vadd.f32 0.0, %v1709
        %v1711 = vpop.f32.mrf.mxu0
        %v1712 = vadd.f32 0.0, %v1711
        %1713 = vmatmul.bf16.gmra.mxu0 %v1622
        %v1714 = vpop.f32.mrf.mxu0
        %v1715 = vadd.f32 0.0, %v1714
        %v1716 = vpop.f32.mrf.mxu0
        %v1717 = vadd.f32 0.0, %v1716
        %1718 = vdwg.mxu0
        %1719 = vmatpush.bf16.msra.mxu0 0
        %1720 = vmatpush.bf16.msra.mxu0 0
        %1721 = vmatpush.bf16.msra.mxu0 0
        %1722 = vmatpush.bf16.msra.mxu0 0
        %1723 = vmatpush.bf16.msra.mxu0 0
        %1724 = vmatpush.bf16.msra.mxu0 0
        %1725 = vmatpush.bf16.msra.mxu0 %v1628
        %1726 = vmatpush.bf16.msra.mxu0 %v1571
        %1727 = vmatmul.bf16.gmra.mxu0 %v1577
        %v1728 = vpop.f32.mrf.mxu0
        %v1729 = vadd.f32 0.0, %v1728
        %v1730 = vpop.f32.mrf.mxu0
        %v1731 = vadd.f32 0.0, %v1730
        %1732 = vmatmul.bf16.gmra.mxu0 %v1580
        %v1733 = vpop.f32.mrf.mxu0
        %v1734 = vadd.f32 0.0, %v1733
        %v1735 = vpop.f32.mrf.mxu0
        %v1736 = vadd.f32 0.0, %v1735
        %1737 = vmatmul.bf16.gmra.mxu0 %v1583
        %v1738 = vpop.f32.mrf.mxu0
        %v1739 = vadd.f32 0.0, %v1738
        %v1740 = vpop.f32.mrf.mxu0
        %v1741 = vadd.f32 0.0, %v1740
        %1742 = vmatmul.bf16.gmra.mxu0 %v1586
        %v1743 = vpop.f32.mrf.mxu0
        %v1744 = vadd.f32 0.0, %v1743
        %v1745 = vpop.f32.mrf.mxu0
        %v1746 = vadd.f32 0.0, %v1745
        %1747 = vmatmul.bf16.gmra.mxu0 %v1589
        %v1748 = vpop.f32.mrf.mxu0
        %v1749 = vadd.f32 0.0, %v1748
        %v1750 = vpop.f32.mrf.mxu0
        %v1751 = vadd.f32 0.0, %v1750
        %1752 = vmatmul.bf16.gmra.mxu0 %v1592
        %v1753 = vpop.f32.mrf.mxu0
        %v1754 = vadd.f32 0.0, %v1753
        %v1755 = vpop.f32.mrf.mxu0
        %v1756 = vadd.f32 0.0, %v1755
        %1757 = vmatmul.bf16.gmra.mxu0 %v1595
        %v1758 = vpop.f32.mrf.mxu0
        %v1759 = vadd.f32 0.0, %v1758
        %v1760 = vpop.f32.mrf.mxu0
        %v1761 = vadd.f32 0.0, %v1760
        %1762 = vmatmul.bf16.gmra.mxu0 %v1598
        %v1763 = vpop.f32.mrf.mxu0
        %v1764 = vadd.f32 0.0, %v1763
        %v1765 = vpop.f32.mrf.mxu0
        %v1766 = vadd.f32 0.0, %v1765
        %1767 = vmatmul.bf16.gmra.mxu0 %v1601
        %v1768 = vpop.f32.mrf.mxu0
        %v1769 = vadd.f32 0.0, %v1768
        %v1770 = vpop.f32.mrf.mxu0
        %v1771 = vadd.f32 0.0, %v1770
        %1772 = vmatmul.bf16.gmra.mxu0 %v1604
        %v1773 = vpop.f32.mrf.mxu0
        %v1774 = vadd.f32 0.0, %v1773
        %v1775 = vpop.f32.mrf.mxu0
        %v1776 = vadd.f32 0.0, %v1775
        %1777 = vmatmul.bf16.gmra.mxu0 %v1607
        %v1778 = vpop.f32.mrf.mxu0
        %v1779 = vadd.f32 0.0, %v1778
        %v1780 = vpop.f32.mrf.mxu0
        %v1781 = vadd.f32 0.0, %v1780
        %1782 = vmatmul.bf16.gmra.mxu0 %v1610
        %v1783 = vpop.f32.mrf.mxu0
        %v1784 = vadd.f32 0.0, %v1783
        %v1785 = vpop.f32.mrf.mxu0
        %v1786 = vadd.f32 0.0, %v1785
        %1787 = vmatmul.bf16.gmra.mxu0 %v1613
        %v1788 = vpop.f32.mrf.mxu0
        %v1789 = vadd.f32 0.0, %v1788
        %v1790 = vpop.f32.mrf.mxu0
        %v1791 = vadd.f32 0.0, %v1790
        %1792 = vmatmul.bf16.gmra.mxu0 %v1616
        %v1793 = vpop.f32.mrf.mxu0
        %v1794 = vadd.f32 0.0, %v1793
        %v1795 = vpop.f32.mrf.mxu0
        %v1796 = vadd.f32 0.0, %v1795
        %1797 = vmatmul.bf16.gmra.mxu0 %v1619
        %v1798 = vpop.f32.mrf.mxu0
        %v1799 = vadd.f32 0.0, %v1798
        %v1800 = vpop.f32.mrf.mxu0
        %v1801 = vadd.f32 0.0, %v1800
        %1802 = vmatmul.bf16.gmra.mxu0 %v1622
        %v1803 = vpop.f32.mrf.mxu0
        %v1804 = vadd.f32 0.0, %v1803
        %v1805 = vpop.f32.mrf.mxu0
        %v1806 = vadd.f32 0.0, %v1805
        %1807 = vdwg.mxu0
        %v1808 = vadd.f32 %v1441, %v1640
        %v1809 = vadd.f32 %v1442, %v1729
        %v1810 = vadd.f32 %v1443, %v1642
        %v1811 = vadd.f32 %v1444, %v1731
        %v1812 = vadd.f32 %v1445, %v1645
        %v1813 = vadd.f32 %v1446, %v1734
        %v1814 = vadd.f32 %v1447, %v1647
        %v1815 = vadd.f32 %v1448, %v1736
        %v1816 = vadd.f32 %v1449, %v1650
        %v1817 = vadd.f32 %v1450, %v1739
        %v1818 = vadd.f32 %v1451, %v1652
        %v1819 = vadd.f32 %v1452, %v1741
        %v1820 = vadd.f32 %v1453, %v1655
        %v1821 = vadd.f32 %v1454, %v1744
        %v1822 = vadd.f32 %v1455, %v1657
        %v1823 = vadd.f32 %v1456, %v1746
        %v1824 = vadd.f32 %v1457, %v1660
        %v1825 = vadd.f32 %v1458, %v1749
        %v1826 = vadd.f32 %v1459, %v1662
        %v1827 = vadd.f32 %v1460, %v1751
        %v1828 = vadd.f32 %v1461, %v1665
        %v1829 = vadd.f32 %v1462, %v1754
        %v1830 = vadd.f32 %v1463, %v1667
        %v1831 = vadd.f32 %v1464, %v1756
        %v1832 = vadd.f32 %v1465, %v1670
        %v1833 = vadd.f32 %v1466, %v1759
        %v1834 = vadd.f32 %v1467, %v1672
        %v1835 = vadd.f32 %v1468, %v1761
        %v1836 = vadd.f32 %v1469, %v1675
        %v1837 = vadd.f32 %v1470, %v1764
        %v1838 = vadd.f32 %v1471, %v1677
        %v1839 = vadd.f32 %v1472, %v1766
        %v1840 = vadd.f32 %v1473, %v1680
        %v1841 = vadd.f32 %v1474, %v1769
        %v1842 = vadd.f32 %v1475, %v1682
        %v1843 = vadd.f32 %v1476, %v1771
        %v1844 = vadd.f32 %v1477, %v1685
        %v1845 = vadd.f32 %v1478, %v1774
        %v1846 = vadd.f32 %v1479, %v1687
        %v1847 = vadd.f32 %v1480, %v1776
        %v1848 = vadd.f32 %v1481, %v1690
        %v1849 = vadd.f32 %v1482, %v1779
        %v1850 = vadd.f32 %v1483, %v1692
        %v1851 = vadd.f32 %v1484, %v1781
        %v1852 = vadd.f32 %v1485, %v1695
        %v1853 = vadd.f32 %v1486, %v1784
        %v1854 = vadd.f32 %v1487, %v1697
        %v1855 = vadd.f32 %v1488, %v1786
        %v1856 = vadd.f32 %v1489, %v1700
        %v1857 = vadd.f32 %v1490, %v1789
        %v1858 = vadd.f32 %v1491, %v1702
        %v1859 = vadd.f32 %v1492, %v1791
        %v1860 = vadd.f32 %v1493, %v1705
        %v1861 = vadd.f32 %v1494, %v1794
        %v1862 = vadd.f32 %v1495, %v1707
        %v1863 = vadd.f32 %v1496, %v1796
        %v1864 = vadd.f32 %v1497, %v1710
        %v1865 = vadd.f32 %v1498, %v1799
        %v1866 = vadd.f32 %v1499, %v1712
        %v1867 = vadd.f32 %v1500, %v1801
        %v1868 = vadd.f32 %v1501, %v1715
        %v1869 = vadd.f32 %v1502, %v1804
        %v1870 = vadd.f32 %v1503, %v1717
        %v1871 = vadd.f32 %v1504, %v1806
        %v1872 = vld [vmem:[#allocation2 + $0x4] sm:$0xff]
        %v1873 = vld [vmem:[#allocation2 + $0xc] sm:$0xff]
        %v1874 = vld [vmem:[#allocation2 + $0x14] sm:$0xff]
        %v1875 = vld [vmem:[#allocation2 + $0x1c] sm:$0xff]
        %v1876 = vld [vmem:[#allocation2 + $0x24] sm:$0xff]
        %v1877 = vld [vmem:[#allocation2 + $0x2c] sm:$0xff]
        %v1878 = vld [vmem:[#allocation2 + $0x34] sm:$0xff]
        %v1879 = vld [vmem:[#allocation2 + $0x3c] sm:$0xff]
        %v1880 = vld [vmem:[#allocation2 + $0x44] sm:$0xff]
        %v1881 = vld [vmem:[#allocation2 + $0x4c] sm:$0xff]
        %v1882 = vld [vmem:[#allocation2 + $0x54] sm:$0xff]
        %v1883 = vld [vmem:[#allocation2 + $0x5c] sm:$0xff]
        %v1884 = vld [vmem:[#allocation2 + $0x64] sm:$0xff]
        %v1885 = vld [vmem:[#allocation2 + $0x6c] sm:$0xff]
        %v1886 = vld [vmem:[#allocation2 + $0x74] sm:$0xff]
        %v1887 = vld [vmem:[#allocation2 + $0x7c] sm:$0xff]
        %v1888 = vld [vmem:[#allocation2 + $0x84] sm:$0xff]
        %v1889 = vld [vmem:[#allocation2 + $0x8c] sm:$0xff]
        %v1890 = vld [vmem:[#allocation2 + $0x94] sm:$0xff]
        %v1891 = vld [vmem:[#allocation2 + $0x9c] sm:$0xff]
        %v1892 = vld [vmem:[#allocation2 + $0xa4] sm:$0xff]
        %v1893 = vld [vmem:[#allocation2 + $0xac] sm:$0xff]
        %v1894 = vld [vmem:[#allocation2 + $0xb4] sm:$0xff]
        %v1895 = vld [vmem:[#allocation2 + $0xbc] sm:$0xff]
        %v1896 = vld [vmem:[#allocation2 + $0xc4] sm:$0xff]
        %v1897 = vld [vmem:[#allocation2 + $0xcc] sm:$0xff]
        %v1898 = vld [vmem:[#allocation2 + $0xd4] sm:$0xff]
        %v1899 = vld [vmem:[#allocation2 + $0xdc] sm:$0xff]
        %v1900 = vld [vmem:[#allocation2 + $0xe4] sm:$0xff]
        %v1901 = vld [vmem:[#allocation2 + $0xec] sm:$0xff]
        %v1902 = vld [vmem:[#allocation2 + $0xf4] sm:$0xff]
        %v1903 = vld [vmem:[#allocation2 + $0xfc] sm:$0xff]
        %v1904 = vpack.c.bf16 %v1873, %v1872
        %v1905 = vpack.c.bf16 %v1875, %v1874
        %v1906 = vpack.c.bf16 %v1877, %v1876
        %v1907 = vpack.c.bf16 %v1879, %v1878
        %v1908 = vpack.c.bf16 %v1881, %v1880
        %v1909 = vpack.c.bf16 %v1883, %v1882
        %v1910 = vpack.c.bf16 %v1885, %v1884
        %v1911 = vpack.c.bf16 %v1887, %v1886
        %v1912 = vpack.c.bf16 %v1889, %v1888
        %v1913 = vpack.c.bf16 %v1891, %v1890
        %v1914 = vpack.c.bf16 %v1893, %v1892
        %v1915 = vpack.c.bf16 %v1895, %v1894
        %v1916 = vpack.c.bf16 %v1897, %v1896
        %v1917 = vpack.c.bf16 %v1899, %v1898
        %v1918 = vpack.c.bf16 %v1901, %v1900
        %v1919 = vpack.c.bf16 %v1903, %v1902
        %s1920 = scalar_lea.vmem %s1, 128
        %v1921 = vld [vmem:[%s1920] sm:$0xff]
        %v1922 = vld [vmem:[%s1920 + $0x8] sm:$0xff]
        %v1923 = vld [vmem:[%s1920 + $0x10] sm:$0xff]
        %v1924 = vld [vmem:[%s1920 + $0x18] sm:$0x33]
        %v1929 = vunpack.c.l.b16 %v1921
        %v1930 = vunpack.c.h.b16 %v1921
        %v1931 = vunpack.c.l.b16 %v1922
        %v1932 = vunpack.c.h.b16 %v1922
        %v1933 = vunpack.c.l.b16 %v1923
        %v1934 = vunpack.c.h.b16 %v1923
        %v1935 = vunpack.c.l.b16 %v1924
        %v1936 = vunpack.c.h.b16 %v1924
        %v1937 = vpack.c.b16 %v1931, %v1929
        %v1938 = vpack.c.b16 %v1932, %v1930
        %v1939 = vpack.c.b16 %v1935, %v1933
        %v1940 = vpack.c.b16 %v1936, %v1934
        %v1944 = vsel %vm451, %v1904, 0
        %v1947 = vsel %vm451, %v1905, 0
        %v1950 = vsel %vm451, %v1906, 0
        %v1953 = vsel %vm451, %v1907, 0
        %v1956 = vsel %vm451, %v1908, 0
        %v1959 = vsel %vm451, %v1909, 0
        %v1962 = vsel %vm451, %v1910, 0
        %v1965 = vsel %vm451, %v1911, 0
        %v1968 = vsel %vm451, %v1912, 0
        %v1971 = vsel %vm451, %v1913, 0
        %v1974 = vsel %vm451, %v1914, 0
        %v1977 = vsel %vm451, %v1915, 0
        %v1980 = vsel %vm451, %v1916, 0
        %v1983 = vsel %vm451, %v1917, 0
        %v1986 = vsel %vm451, %v1918, 0
        %v1989 = vsel %vm451, %v1919, 0
        %v1992 = vsel %vm703, %v1939, 0
        %v1995 = vsel %vm703, %v1940, 0
        %1997 = vmatpush.bf16.msra.mxu0 0
        %1998 = vmatpush.bf16.msra.mxu0 0
        %1999 = vmatpush.bf16.msra.mxu0 0
        %2000 = vmatpush.bf16.msra.mxu0 0
        %2001 = vmatpush.bf16.msra.mxu0 0
        %2002 = vmatpush.bf16.msra.mxu0 0
        %2003 = vmatpush.bf16.msra.mxu0 %v1992
        %2004 = vmatpush.bf16.msra.mxu0 %v1937
        %2005 = vmatmul.bf16.gmra.mxu0 %v1944
        %v2006 = vpop.f32.mrf.mxu0
        %v2007 = vadd.f32 0.0, %v2006
        %v2008 = vpop.f32.mrf.mxu0
        %v2009 = vadd.f32 0.0, %v2008
        %2010 = vmatmul.bf16.gmra.mxu0 %v1947
        %v2011 = vpop.f32.mrf.mxu0
        %v2012 = vadd.f32 0.0, %v2011
        %v2013 = vpop.f32.mrf.mxu0
        %v2014 = vadd.f32 0.0, %v2013
        %2015 = vmatmul.bf16.gmra.mxu0 %v1950
        %v2016 = vpop.f32.mrf.mxu0
        %v2017 = vadd.f32 0.0, %v2016
        %v2018 = vpop.f32.mrf.mxu0
        %v2019 = vadd.f32 0.0, %v2018
        %2020 = vmatmul.bf16.gmra.mxu0 %v1953
        %v2021 = vpop.f32.mrf.mxu0
        %v2022 = vadd.f32 0.0, %v2021
        %v2023 = vpop.f32.mrf.mxu0
        %v2024 = vadd.f32 0.0, %v2023
        %2025 = vmatmul.bf16.gmra.mxu0 %v1956
        %v2026 = vpop.f32.mrf.mxu0
        %v2027 = vadd.f32 0.0, %v2026
        %v2028 = vpop.f32.mrf.mxu0
        %v2029 = vadd.f32 0.0, %v2028
        %2030 = vmatmul.bf16.gmra.mxu0 %v1959
        %v2031 = vpop.f32.mrf.mxu0
        %v2032 = vadd.f32 0.0, %v2031
        %v2033 = vpop.f32.mrf.mxu0
        %v2034 = vadd.f32 0.0, %v2033
        %2035 = vmatmul.bf16.gmra.mxu0 %v1962
        %v2036 = vpop.f32.mrf.mxu0
        %v2037 = vadd.f32 0.0, %v2036
        %v2038 = vpop.f32.mrf.mxu0
        %v2039 = vadd.f32 0.0, %v2038
        %2040 = vmatmul.bf16.gmra.mxu0 %v1965
        %v2041 = vpop.f32.mrf.mxu0
        %v2042 = vadd.f32 0.0, %v2041
        %v2043 = vpop.f32.mrf.mxu0
        %v2044 = vadd.f32 0.0, %v2043
        %2045 = vmatmul.bf16.gmra.mxu0 %v1968
        %v2046 = vpop.f32.mrf.mxu0
        %v2047 = vadd.f32 0.0, %v2046
        %v2048 = vpop.f32.mrf.mxu0
        %v2049 = vadd.f32 0.0, %v2048
        %2050 = vmatmul.bf16.gmra.mxu0 %v1971
        %v2051 = vpop.f32.mrf.mxu0
        %v2052 = vadd.f32 0.0, %v2051
        %v2053 = vpop.f32.mrf.mxu0
        %v2054 = vadd.f32 0.0, %v2053
        %2055 = vmatmul.bf16.gmra.mxu0 %v1974
        %v2056 = vpop.f32.mrf.mxu0
        %v2057 = vadd.f32 0.0, %v2056
        %v2058 = vpop.f32.mrf.mxu0
        %v2059 = vadd.f32 0.0, %v2058
        %2060 = vmatmul.bf16.gmra.mxu0 %v1977
        %v2061 = vpop.f32.mrf.mxu0
        %v2062 = vadd.f32 0.0, %v2061
        %v2063 = vpop.f32.mrf.mxu0
        %v2064 = vadd.f32 0.0, %v2063
        %2065 = vmatmul.bf16.gmra.mxu0 %v1980
        %v2066 = vpop.f32.mrf.mxu0
        %v2067 = vadd.f32 0.0, %v2066
        %v2068 = vpop.f32.mrf.mxu0
        %v2069 = vadd.f32 0.0, %v2068
        %2070 = vmatmul.bf16.gmra.mxu0 %v1983
        %v2071 = vpop.f32.mrf.mxu0
        %v2072 = vadd.f32 0.0, %v2071
        %v2073 = vpop.f32.mrf.mxu0
        %v2074 = vadd.f32 0.0, %v2073
        %2075 = vmatmul.bf16.gmra.mxu0 %v1986
        %v2076 = vpop.f32.mrf.mxu0
        %v2077 = vadd.f32 0.0, %v2076
        %v2078 = vpop.f32.mrf.mxu0
        %v2079 = vadd.f32 0.0, %v2078
        %2080 = vmatmul.bf16.gmra.mxu0 %v1989
        %v2081 = vpop.f32.mrf.mxu0
        %v2082 = vadd.f32 0.0, %v2081
        %v2083 = vpop.f32.mrf.mxu0
        %v2084 = vadd.f32 0.0, %v2083
        %2085 = vdwg.mxu0
        %2086 = vmatpush.bf16.msra.mxu0 0
        %2087 = vmatpush.bf16.msra.mxu0 0
        %2088 = vmatpush.bf16.msra.mxu0 0
        %2089 = vmatpush.bf16.msra.mxu0 0
        %2090 = vmatpush.bf16.msra.mxu0 0
        %2091 = vmatpush.bf16.msra.mxu0 0
        %2092 = vmatpush.bf16.msra.mxu0 %v1995
        %2093 = vmatpush.bf16.msra.mxu0 %v1938
        %2094 = vmatmul.bf16.gmra.mxu0 %v1944
        %v2095 = vpop.f32.mrf.mxu0
        %v2096 = vadd.f32 0.0, %v2095
        %v2097 = vpop.f32.mrf.mxu0
        %v2098 = vadd.f32 0.0, %v2097
        %2099 = vmatmul.bf16.gmra.mxu0 %v1947
        %v2100 = vpop.f32.mrf.mxu0
        %v2101 = vadd.f32 0.0, %v2100
        %v2102 = vpop.f32.mrf.mxu0
        %v2103 = vadd.f32 0.0, %v2102
        %2104 = vmatmul.bf16.gmra.mxu0 %v1950
        %v2105 = vpop.f32.mrf.mxu0
        %v2106 = vadd.f32 0.0, %v2105
        %v2107 = vpop.f32.mrf.mxu0
        %v2108 = vadd.f32 0.0, %v2107
        %2109 = vmatmul.bf16.gmra.mxu0 %v1953
        %v2110 = vpop.f32.mrf.mxu0
        %v2111 = vadd.f32 0.0, %v2110
        %v2112 = vpop.f32.mrf.mxu0
        %v2113 = vadd.f32 0.0, %v2112
        %2114 = vmatmul.bf16.gmra.mxu0 %v1956
        %v2115 = vpop.f32.mrf.mxu0
        %v2116 = vadd.f32 0.0, %v2115
        %v2117 = vpop.f32.mrf.mxu0
        %v2118 = vadd.f32 0.0, %v2117
        %2119 = vmatmul.bf16.gmra.mxu0 %v1959
        %v2120 = vpop.f32.mrf.mxu0
        %v2121 = vadd.f32 0.0, %v2120
        %v2122 = vpop.f32.mrf.mxu0
        %v2123 = vadd.f32 0.0, %v2122
        %2124 = vmatmul.bf16.gmra.mxu0 %v1962
        %v2125 = vpop.f32.mrf.mxu0
        %v2126 = vadd.f32 0.0, %v2125
        %v2127 = vpop.f32.mrf.mxu0
        %v2128 = vadd.f32 0.0, %v2127
        %2129 = vmatmul.bf16.gmra.mxu0 %v1965
        %v2130 = vpop.f32.mrf.mxu0
        %v2131 = vadd.f32 0.0, %v2130
        %v2132 = vpop.f32.mrf.mxu0
        %v2133 = vadd.f32 0.0, %v2132
        %2134 = vmatmul.bf16.gmra.mxu0 %v1968
        %v2135 = vpop.f32.mrf.mxu0
        %v2136 = vadd.f32 0.0, %v2135
        %v2137 = vpop.f32.mrf.mxu0
        %v2138 = vadd.f32 0.0, %v2137
        %2139 = vmatmul.bf16.gmra.mxu0 %v1971
        %v2140 = vpop.f32.mrf.mxu0
        %v2141 = vadd.f32 0.0, %v2140
        %v2142 = vpop.f32.mrf.mxu0
        %v2143 = vadd.f32 0.0, %v2142
        %2144 = vmatmul.bf16.gmra.mxu0 %v1974
        %v2145 = vpop.f32.mrf.mxu0
        %v2146 = vadd.f32 0.0, %v2145
        %v2147 = vpop.f32.mrf.mxu0
        %v2148 = vadd.f32 0.0, %v2147
        %2149 = vmatmul.bf16.gmra.mxu0 %v1977
        %v2150 = vpop.f32.mrf.mxu0
        %v2151 = vadd.f32 0.0, %v2150
        %v2152 = vpop.f32.mrf.mxu0
        %v2153 = vadd.f32 0.0, %v2152
        %2154 = vmatmul.bf16.gmra.mxu0 %v1980
        %v2155 = vpop.f32.mrf.mxu0
        %v2156 = vadd.f32 0.0, %v2155
        %v2157 = vpop.f32.mrf.mxu0
        %v2158 = vadd.f32 0.0, %v2157
        %2159 = vmatmul.bf16.gmra.mxu0 %v1983
        %v2160 = vpop.f32.mrf.mxu0
        %v2161 = vadd.f32 0.0, %v2160
        %v2162 = vpop.f32.mrf.mxu0
        %v2163 = vadd.f32 0.0, %v2162
        %2164 = vmatmul.bf16.gmra.mxu0 %v1986
        %v2165 = vpop.f32.mrf.mxu0
        %v2166 = vadd.f32 0.0, %v2165
        %v2167 = vpop.f32.mrf.mxu0
        %v2168 = vadd.f32 0.0, %v2167
        %2169 = vmatmul.bf16.gmra.mxu0 %v1989
        %v2170 = vpop.f32.mrf.mxu0
        %v2171 = vadd.f32 0.0, %v2170
        %v2172 = vpop.f32.mrf.mxu0
        %v2173 = vadd.f32 0.0, %v2172
        %2174 = vdwg.mxu0
        %v2175 = vadd.f32 %v1808, %v2007
        %v2176 = vadd.f32 %v1809, %v2096
        %v2177 = vadd.f32 %v1810, %v2009
        %v2178 = vadd.f32 %v1811, %v2098
        %v2179 = vadd.f32 %v1812, %v2012
        %v2180 = vadd.f32 %v1813, %v2101
        %v2181 = vadd.f32 %v1814, %v2014
        %v2182 = vadd.f32 %v1815, %v2103
        %v2183 = vadd.f32 %v1816, %v2017
        %v2184 = vadd.f32 %v1817, %v2106
        %v2185 = vadd.f32 %v1818, %v2019
        %v2186 = vadd.f32 %v1819, %v2108
        %v2187 = vadd.f32 %v1820, %v2022
        %v2188 = vadd.f32 %v1821, %v2111
        %v2189 = vadd.f32 %v1822, %v2024
        %v2190 = vadd.f32 %v1823, %v2113
        %v2191 = vadd.f32 %v1824, %v2027
        %v2192 = vadd.f32 %v1825, %v2116
        %v2193 = vadd.f32 %v1826, %v2029
        %v2194 = vadd.f32 %v1827, %v2118
        %v2195 = vadd.f32 %v1828, %v2032
        %v2196 = vadd.f32 %v1829, %v2121
        %v2197 = vadd.f32 %v1830, %v2034
        %v2198 = vadd.f32 %v1831, %v2123
        %v2199 = vadd.f32 %v1832, %v2037
        %v2200 = vadd.f32 %v1833, %v2126
        %v2201 = vadd.f32 %v1834, %v2039
        %v2202 = vadd.f32 %v1835, %v2128
        %v2203 = vadd.f32 %v1836, %v2042
        %v2204 = vadd.f32 %v1837, %v2131
        %v2205 = vadd.f32 %v1838, %v2044
        %v2206 = vadd.f32 %v1839, %v2133
        %v2207 = vadd.f32 %v1840, %v2047
        %v2208 = vadd.f32 %v1841, %v2136
        %v2209 = vadd.f32 %v1842, %v2049
        %v2210 = vadd.f32 %v1843, %v2138
        %v2211 = vadd.f32 %v1844, %v2052
        %v2212 = vadd.f32 %v1845, %v2141
        %v2213 = vadd.f32 %v1846, %v2054
        %v2214 = vadd.f32 %v1847, %v2143
        %v2215 = vadd.f32 %v1848, %v2057
        %v2216 = vadd.f32 %v1849, %v2146
        %v2217 = vadd.f32 %v1850, %v2059
        %v2218 = vadd.f32 %v1851, %v2148
        %v2219 = vadd.f32 %v1852, %v2062
        %v2220 = vadd.f32 %v1853, %v2151
        %v2221 = vadd.f32 %v1854, %v2064
        %v2222 = vadd.f32 %v1855, %v2153
        %v2223 = vadd.f32 %v1856, %v2067
        %v2224 = vadd.f32 %v1857, %v2156
        %v2225 = vadd.f32 %v1858, %v2069
        %v2226 = vadd.f32 %v1859, %v2158
        %v2227 = vadd.f32 %v1860, %v2072
        %v2228 = vadd.f32 %v1861, %v2161
        %v2229 = vadd.f32 %v1862, %v2074
        %v2230 = vadd.f32 %v1863, %v2163
        %v2231 = vadd.f32 %v1864, %v2077
        %v2232 = vadd.f32 %v1865, %v2166
        %v2233 = vadd.f32 %v1866, %v2079
        %v2234 = vadd.f32 %v1867, %v2168
        %v2235 = vadd.f32 %v1868, %v2082
        %v2236 = vadd.f32 %v1869, %v2171
        %v2237 = vadd.f32 %v1870, %v2084
        %v2238 = vadd.f32 %v1871, %v2173
        %v2239 = vld [vmem:[%s2] sm:$0x3]
        %v2241 = vperm.slane %v2239, 0
        %v2242 = vperm.slane %v2239, 1
        %v2245 = vadd.f32 %v2175, %v2241
        %v2246 = vadd.f32 %v2176, %v2242
        %v2247 = vadd.f32 %v2177, %v2241
        %v2248 = vadd.f32 %v2178, %v2242
        %v2249 = vadd.f32 %v2179, %v2241
        %v2250 = vadd.f32 %v2180, %v2242
        %v2251 = vadd.f32 %v2181, %v2241
        %v2252 = vadd.f32 %v2182, %v2242
        %v2253 = vadd.f32 %v2183, %v2241
        %v2254 = vadd.f32 %v2184, %v2242
        %v2255 = vadd.f32 %v2185, %v2241
        %v2256 = vadd.f32 %v2186, %v2242
        %v2257 = vadd.f32 %v2187, %v2241
        %v2258 = vadd.f32 %v2188, %v2242
        %v2259 = vadd.f32 %v2189, %v2241
        %v2260 = vadd.f32 %v2190, %v2242
        %v2261 = vadd.f32 %v2191, %v2241
        %v2262 = vadd.f32 %v2192, %v2242
        %v2263 = vadd.f32 %v2193, %v2241
        %v2264 = vadd.f32 %v2194, %v2242
        %v2265 = vadd.f32 %v2195, %v2241
        %v2266 = vadd.f32 %v2196, %v2242
        %v2267 = vadd.f32 %v2197, %v2241
        %v2268 = vadd.f32 %v2198, %v2242
        %v2269 = vadd.f32 %v2199, %v2241
        %v2270 = vadd.f32 %v2200, %v2242
        %v2271 = vadd.f32 %v2201, %v2241
        %v2272 = vadd.f32 %v2202, %v2242
        %v2273 = vadd.f32 %v2203, %v2241
        %v2274 = vadd.f32 %v2204, %v2242
        %v2275 = vadd.f32 %v2205, %v2241
        %v2276 = vadd.f32 %v2206, %v2242
        %v2277 = vadd.f32 %v2207, %v2241
        %v2278 = vadd.f32 %v2208, %v2242
        %v2279 = vadd.f32 %v2209, %v2241
        %v2280 = vadd.f32 %v2210, %v2242
        %v2281 = vadd.f32 %v2211, %v2241
        %v2282 = vadd.f32 %v2212, %v2242
        %v2283 = vadd.f32 %v2213, %v2241
        %v2284 = vadd.f32 %v2214, %v2242
        %v2285 = vadd.f32 %v2215, %v2241
        %v2286 = vadd.f32 %v2216, %v2242
        %v2287 = vadd.f32 %v2217, %v2241
        %v2288 = vadd.f32 %v2218, %v2242
        %v2289 = vadd.f32 %v2219, %v2241
        %v2290 = vadd.f32 %v2220, %v2242
        %v2291 = vadd.f32 %v2221, %v2241
        %v2292 = vadd.f32 %v2222, %v2242
        %v2293 = vadd.f32 %v2223, %v2241
        %v2294 = vadd.f32 %v2224, %v2242
        %v2295 = vadd.f32 %v2225, %v2241
        %v2296 = vadd.f32 %v2226, %v2242
        %v2297 = vadd.f32 %v2227, %v2241
        %v2298 = vadd.f32 %v2228, %v2242
        %v2299 = vadd.f32 %v2229, %v2241
        %v2300 = vadd.f32 %v2230, %v2242
        %v2301 = vadd.f32 %v2231, %v2241
        %v2302 = vadd.f32 %v2232, %v2242
        %v2303 = vadd.f32 %v2233, %v2241
        %v2304 = vadd.f32 %v2234, %v2242
        %v2305 = vadd.f32 %v2235, %v2241
        %v2306 = vadd.f32 %v2236, %v2242
        %v2307 = vadd.f32 %v2237, %v2241
        %v2308 = vadd.f32 %v2238, %v2242
        %v2309 = vmax.f32 %v2245, 0.0
        %v2310 = vmax.f32 %v2246, 0.0
        %v2311 = vmax.f32 %v2247, 0.0
        %v2312 = vmax.f32 %v2248, 0.0
        %v2313 = vmax.f32 %v2249, 0.0
        %v2314 = vmax.f32 %v2250, 0.0
        %v2315 = vmax.f32 %v2251, 0.0
        %v2316 = vmax.f32 %v2252, 0.0
        %v2317 = vmax.f32 %v2253, 0.0
        %v2318 = vmax.f32 %v2254, 0.0
        %v2319 = vmax.f32 %v2255, 0.0
        %v2320 = vmax.f32 %v2256, 0.0
        %v2321 = vmax.f32 %v2257, 0.0
        %v2322 = vmax.f32 %v2258, 0.0
        %v2323 = vmax.f32 %v2259, 0.0
        %v2324 = vmax.f32 %v2260, 0.0
        %v2325 = vmax.f32 %v2261, 0.0
        %v2326 = vmax.f32 %v2262, 0.0
        %v2327 = vmax.f32 %v2263, 0.0
        %v2328 = vmax.f32 %v2264, 0.0
        %v2329 = vmax.f32 %v2265, 0.0
        %v2330 = vmax.f32 %v2266, 0.0
        %v2331 = vmax.f32 %v2267, 0.0
        %v2332 = vmax.f32 %v2268, 0.0
        %v2333 = vmax.f32 %v2269, 0.0
        %v2334 = vmax.f32 %v2270, 0.0
        %v2335 = vmax.f32 %v2271, 0.0
        %v2336 = vmax.f32 %v2272, 0.0
        %v2337 = vmax.f32 %v2273, 0.0
        %v2338 = vmax.f32 %v2274, 0.0
        %v2339 = vmax.f32 %v2275, 0.0
        %v2340 = vmax.f32 %v2276, 0.0
        %v2341 = vmax.f32 %v2277, 0.0
        %v2342 = vmax.f32 %v2278, 0.0
        %v2343 = vmax.f32 %v2279, 0.0
        %v2344 = vmax.f32 %v2280, 0.0
        %v2345 = vmax.f32 %v2281, 0.0
        %v2346 = vmax.f32 %v2282, 0.0
        %v2347 = vmax.f32 %v2283, 0.0
        %v2348 = vmax.f32 %v2284, 0.0
        %v2349 = vmax.f32 %v2285, 0.0
        %v2350 = vmax.f32 %v2286, 0.0
        %v2351 = vmax.f32 %v2287, 0.0
        %v2352 = vmax.f32 %v2288, 0.0
        %v2353 = vmax.f32 %v2289, 0.0
        %v2354 = vmax.f32 %v2290, 0.0
        %v2355 = vmax.f32 %v2291, 0.0
        %v2356 = vmax.f32 %v2292, 0.0
        %v2357 = vmax.f32 %v2293, 0.0
        %v2358 = vmax.f32 %v2294, 0.0
        %v2359 = vmax.f32 %v2295, 0.0
        %v2360 = vmax.f32 %v2296, 0.0
        %v2361 = vmax.f32 %v2297, 0.0
        %v2362 = vmax.f32 %v2298, 0.0
        %v2363 = vmax.f32 %v2299, 0.0
        %v2364 = vmax.f32 %v2300, 0.0
        %v2365 = vmax.f32 %v2301, 0.0
        %v2366 = vmax.f32 %v2302, 0.0
        %v2367 = vmax.f32 %v2303, 0.0
        %v2368 = vmax.f32 %v2304, 0.0
        %v2369 = vmax.f32 %v2305, 0.0
        %v2370 = vmax.f32 %v2306, 0.0
        %v2371 = vmax.f32 %v2307, 0.0
        %v2372 = vmax.f32 %v2308, 0.0
        %2437 = vrot.lane.b32.xlu0 %v2309, 122
        %v2438 = vpop.permute.xlu0 %2437
        %2439 = vrot.lane.b32.xlu0 %v2310, 122
        %v2440 = vpop.permute.xlu0 %2439
        %2441 = vrot.lane.b32.xlu0 %v2311, 122
        %v2442 = vpop.permute.xlu0 %2441
        %2443 = vrot.lane.b32.xlu0 %v2312, 122
        %v2444 = vpop.permute.xlu0 %2443
        %2445 = vrot.lane.b32.xlu0 %v2313, 122
        %v2446 = vpop.permute.xlu0 %2445
        %2447 = vrot.lane.b32.xlu0 %v2314, 122
        %v2448 = vpop.permute.xlu0 %2447
        %2449 = vrot.lane.b32.xlu0 %v2315, 122
        %v2450 = vpop.permute.xlu0 %2449
        %2451 = vrot.lane.b32.xlu0 %v2316, 122
        %v2452 = vpop.permute.xlu0 %2451
        %2453 = vrot.lane.b32.xlu0 %v2317, 122
        %v2454 = vpop.permute.xlu0 %2453
        %2455 = vrot.lane.b32.xlu0 %v2318, 122
        %v2456 = vpop.permute.xlu0 %2455
        %2457 = vrot.lane.b32.xlu0 %v2319, 122
        %v2458 = vpop.permute.xlu0 %2457
        %2459 = vrot.lane.b32.xlu0 %v2320, 122
        %v2460 = vpop.permute.xlu0 %2459
        %2461 = vrot.lane.b32.xlu0 %v2321, 122
        %v2462 = vpop.permute.xlu0 %2461
        %2463 = vrot.lane.b32.xlu0 %v2322, 122
        %v2464 = vpop.permute.xlu0 %2463
        %2465 = vrot.lane.b32.xlu0 %v2323, 122
        %v2466 = vpop.permute.xlu0 %2465
        %2467 = vrot.lane.b32.xlu0 %v2324, 122
        %v2468 = vpop.permute.xlu0 %2467
        %2469 = vrot.lane.b32.xlu0 %v2325, 122
        %v2470 = vpop.permute.xlu0 %2469
        %2471 = vrot.lane.b32.xlu0 %v2326, 122
        %v2472 = vpop.permute.xlu0 %2471
        %2473 = vrot.lane.b32.xlu0 %v2327, 122
        %v2474 = vpop.permute.xlu0 %2473
        %2475 = vrot.lane.b32.xlu0 %v2328, 122
        %v2476 = vpop.permute.xlu0 %2475
        %2477 = vrot.lane.b32.xlu0 %v2329, 122
        %v2478 = vpop.permute.xlu0 %2477
        %2479 = vrot.lane.b32.xlu0 %v2330, 122
        %v2480 = vpop.permute.xlu0 %2479
        %2481 = vrot.lane.b32.xlu0 %v2331, 122
        %v2482 = vpop.permute.xlu0 %2481
        %2483 = vrot.lane.b32.xlu0 %v2332, 122
        %v2484 = vpop.permute.xlu0 %2483
        %2485 = vrot.lane.b32.xlu0 %v2333, 122
        %v2486 = vpop.permute.xlu0 %2485
        %2487 = vrot.lane.b32.xlu0 %v2334, 122
        %v2488 = vpop.permute.xlu0 %2487
        %2489 = vrot.lane.b32.xlu0 %v2335, 122
        %v2490 = vpop.permute.xlu0 %2489
        %2491 = vrot.lane.b32.xlu0 %v2336, 122
        %v2492 = vpop.permute.xlu0 %2491
        %2493 = vrot.lane.b32.xlu0 %v2337, 122
        %v2494 = vpop.permute.xlu0 %2493
        %2495 = vrot.lane.b32.xlu0 %v2338, 122
        %v2496 = vpop.permute.xlu0 %2495
        %2497 = vrot.lane.b32.xlu0 %v2339, 122
        %v2498 = vpop.permute.xlu0 %2497
        %2499 = vrot.lane.b32.xlu0 %v2340, 122
        %v2500 = vpop.permute.xlu0 %2499
        %2501 = vrot.lane.b32.xlu0 %v2341, 122
        %v2502 = vpop.permute.xlu0 %2501
        %2503 = vrot.lane.b32.xlu0 %v2342, 122
        %v2504 = vpop.permute.xlu0 %2503
        %2505 = vrot.lane.b32.xlu0 %v2343, 122
        %v2506 = vpop.permute.xlu0 %2505
        %2507 = vrot.lane.b32.xlu0 %v2344, 122
        %v2508 = vpop.permute.xlu0 %2507
        %2509 = vrot.lane.b32.xlu0 %v2345, 122
        %v2510 = vpop.permute.xlu0 %2509
        %2511 = vrot.lane.b32.xlu0 %v2346, 122
        %v2512 = vpop.permute.xlu0 %2511
        %2513 = vrot.lane.b32.xlu0 %v2347, 122
        %v2514 = vpop.permute.xlu0 %2513
        %2515 = vrot.lane.b32.xlu0 %v2348, 122
        %v2516 = vpop.permute.xlu0 %2515
        %2517 = vrot.lane.b32.xlu0 %v2349, 122
        %v2518 = vpop.permute.xlu0 %2517
        %2519 = vrot.lane.b32.xlu0 %v2350, 122
        %v2520 = vpop.permute.xlu0 %2519
        %2521 = vrot.lane.b32.xlu0 %v2351, 122
        %v2522 = vpop.permute.xlu0 %2521
        %2523 = vrot.lane.b32.xlu0 %v2352, 122
        %v2524 = vpop.permute.xlu0 %2523
        %2525 = vrot.lane.b32.xlu0 %v2353, 122
        %v2526 = vpop.permute.xlu0 %2525
        %2527 = vrot.lane.b32.xlu0 %v2354, 122
        %v2528 = vpop.permute.xlu0 %2527
        %2529 = vrot.lane.b32.xlu0 %v2355, 122
        %v2530 = vpop.permute.xlu0 %2529
        %2531 = vrot.lane.b32.xlu0 %v2356, 122
        %v2532 = vpop.permute.xlu0 %2531
        %2533 = vrot.lane.b32.xlu0 %v2357, 122
        %v2534 = vpop.permute.xlu0 %2533
        %2535 = vrot.lane.b32.xlu0 %v2358, 122
        %v2536 = vpop.permute.xlu0 %2535
        %2537 = vrot.lane.b32.xlu0 %v2359, 122
        %v2538 = vpop.permute.xlu0 %2537
        %2539 = vrot.lane.b32.xlu0 %v2360, 122
        %v2540 = vpop.permute.xlu0 %2539
        %2541 = vrot.lane.b32.xlu0 %v2361, 122
        %v2542 = vpop.permute.xlu0 %2541
        %2543 = vrot.lane.b32.xlu0 %v2362, 122
        %v2544 = vpop.permute.xlu0 %2543
        %2545 = vrot.lane.b32.xlu0 %v2363, 122
        %v2546 = vpop.permute.xlu0 %2545
        %2547 = vrot.lane.b32.xlu0 %v2364, 122
        %v2548 = vpop.permute.xlu0 %2547
        %2549 = vrot.lane.b32.xlu0 %v2365, 122
        %v2550 = vpop.permute.xlu0 %2549
        %2551 = vrot.lane.b32.xlu0 %v2366, 122
        %v2552 = vpop.permute.xlu0 %2551
        %2553 = vrot.lane.b32.xlu0 %v2367, 122
        %v2554 = vpop.permute.xlu0 %2553
        %2555 = vrot.lane.b32.xlu0 %v2368, 122
        %v2556 = vpop.permute.xlu0 %2555
        %2557 = vrot.lane.b32.xlu0 %v2369, 122
        %v2558 = vpop.permute.xlu0 %2557
        %2559 = vrot.lane.b32.xlu0 %v2370, 122
        %v2560 = vpop.permute.xlu0 %2559
        %2561 = vrot.lane.b32.xlu0 %v2371, 122
        %v2562 = vpop.permute.xlu0 %2561
        %2563 = vrot.lane.b32.xlu0 %v2372, 122
        %v2564 = vpop.permute.xlu0 %2563
        %vm2565 = vcmask 998400
        %v2566 = vsel %vm2565, %v2438, %v2440
        %v2567 = vsel %vm2565, %v2442, %v2444
        %v2568 = vsel %vm2565, %v2446, %v2448
        %v2569 = vsel %vm2565, %v2450, %v2452
        %v2570 = vsel %vm2565, %v2454, %v2456
        %v2571 = vsel %vm2565, %v2458, %v2460
        %v2572 = vsel %vm2565, %v2462, %v2464
        %v2573 = vsel %vm2565, %v2466, %v2468
        %v2574 = vsel %vm2565, %v2470, %v2472
        %v2575 = vsel %vm2565, %v2474, %v2476
        %v2576 = vsel %vm2565, %v2478, %v2480
        %v2577 = vsel %vm2565, %v2482, %v2484
        %v2578 = vsel %vm2565, %v2486, %v2488
        %v2579 = vsel %vm2565, %v2490, %v2492
        %v2580 = vsel %vm2565, %v2494, %v2496
        %v2581 = vsel %vm2565, %v2498, %v2500
        %v2582 = vsel %vm2565, %v2502, %v2504
        %v2583 = vsel %vm2565, %v2506, %v2508
        %v2584 = vsel %vm2565, %v2510, %v2512
        %v2585 = vsel %vm2565, %v2514, %v2516
        %v2586 = vsel %vm2565, %v2518, %v2520
        %v2587 = vsel %vm2565, %v2522, %v2524
        %v2588 = vsel %vm2565, %v2526, %v2528
        %v2589 = vsel %vm2565, %v2530, %v2532
        %v2590 = vsel %vm2565, %v2534, %v2536
        %v2591 = vsel %vm2565, %v2538, %v2540
        %v2592 = vsel %vm2565, %v2542, %v2544
        %v2593 = vsel %vm2565, %v2546, %v2548
        %v2594 = vsel %vm2565, %v2550, %v2552
        %v2595 = vsel %vm2565, %v2554, %v2556
        %v2596 = vsel %vm2565, %v2558, %v2560
        %v2597 = vsel %vm2565, %v2562, %v2564
        %v2662 = vmax.f32 %v2309, %v2566
        %v2663 = vmax.f32 %v2310, %v2440
        %v2664 = vmax.f32 %v2311, %v2567
        %v2665 = vmax.f32 %v2312, %v2444
        %v2666 = vmax.f32 %v2313, %v2568
        %v2667 = vmax.f32 %v2314, %v2448
        %v2668 = vmax.f32 %v2315, %v2569
        %v2669 = vmax.f32 %v2316, %v2452
        %v2670 = vmax.f32 %v2317, %v2570
        %v2671 = vmax.f32 %v2318, %v2456
        %v2672 = vmax.f32 %v2319, %v2571
        %v2673 = vmax.f32 %v2320, %v2460
        %v2674 = vmax.f32 %v2321, %v2572
        %v2675 = vmax.f32 %v2322, %v2464
        %v2676 = vmax.f32 %v2323, %v2573
        %v2677 = vmax.f32 %v2324, %v2468
        %v2678 = vmax.f32 %v2325, %v2574
        %v2679 = vmax.f32 %v2326, %v2472
        %v2680 = vmax.f32 %v2327, %v2575
        %v2681 = vmax.f32 %v2328, %v2476
        %v2682 = vmax.f32 %v2329, %v2576
        %v2683 = vmax.f32 %v2330, %v2480
        %v2684 = vmax.f32 %v2331, %v2577
        %v2685 = vmax.f32 %v2332, %v2484
        %v2686 = vmax.f32 %v2333, %v2578
        %v2687 = vmax.f32 %v2334, %v2488
        %v2688 = vmax.f32 %v2335, %v2579
        %v2689 = vmax.f32 %v2336, %v2492
        %v2690 = vmax.f32 %v2337, %v2580
        %v2691 = vmax.f32 %v2338, %v2496
        %v2692 = vmax.f32 %v2339, %v2581
        %v2693 = vmax.f32 %v2340, %v2500
        %v2694 = vmax.f32 %v2341, %v2582
        %v2695 = vmax.f32 %v2342, %v2504
        %v2696 = vmax.f32 %v2343, %v2583
        %v2697 = vmax.f32 %v2344, %v2508
        %v2698 = vmax.f32 %v2345, %v2584
        %v2699 = vmax.f32 %v2346, %v2512
        %v2700 = vmax.f32 %v2347, %v2585
        %v2701 = vmax.f32 %v2348, %v2516
        %v2702 = vmax.f32 %v2349, %v2586
        %v2703 = vmax.f32 %v2350, %v2520
        %v2704 = vmax.f32 %v2351, %v2587
        %v2705 = vmax.f32 %v2352, %v2524
        %v2706 = vmax.f32 %v2353, %v2588
        %v2707 = vmax.f32 %v2354, %v2528
        %v2708 = vmax.f32 %v2355, %v2589
        %v2709 = vmax.f32 %v2356, %v2532
        %v2710 = vmax.f32 %v2357, %v2590
        %v2711 = vmax.f32 %v2358, %v2536
        %v2712 = vmax.f32 %v2359, %v2591
        %v2713 = vmax.f32 %v2360, %v2540
        %v2714 = vmax.f32 %v2361, %v2592
        %v2715 = vmax.f32 %v2362, %v2544
        %v2716 = vmax.f32 %v2363, %v2593
        %v2717 = vmax.f32 %v2364, %v2548
        %v2718 = vmax.f32 %v2365, %v2594
        %v2719 = vmax.f32 %v2366, %v2552
        %v2720 = vmax.f32 %v2367, %v2595
        %v2721 = vmax.f32 %v2368, %v2556
        %v2722 = vmax.f32 %v2369, %v2596
        %v2723 = vmax.f32 %v2370, %v2560
        %v2724 = vmax.f32 %v2371, %v2597
        %v2725 = vmax.f32 %v2372, %v2564
        %v2726 = vpack.c.bf16 %v2664, %v2662
        %v2727 = vpack.c.bf16 %v2665, %v2663
        %v2728 = vpack.c.bf16 %v2668, %v2666
        %v2729 = vpack.c.bf16 %v2669, %v2667
        %v2730 = vpack.c.bf16 %v2672, %v2670
        %v2731 = vpack.c.bf16 %v2673, %v2671
        %v2732 = vpack.c.bf16 %v2676, %v2674
        %v2733 = vpack.c.bf16 %v2677, %v2675
        %v2734 = vpack.c.bf16 %v2680, %v2678
        %v2735 = vpack.c.bf16 %v2681, %v2679
        %v2736 = vpack.c.bf16 %v2684, %v2682
        %v2737 = vpack.c.bf16 %v2685, %v2683
        %v2738 = vpack.c.bf16 %v2688, %v2686
        %v2739 = vpack.c.bf16 %v2689, %v2687
        %v2740 = vpack.c.bf16 %v2692, %v2690
        %v2741 = vpack.c.bf16 %v2693, %v2691
        %v2742 = vpack.c.bf16 %v2696, %v2694
        %v2743 = vpack.c.bf16 %v2697, %v2695
        %v2744 = vpack.c.bf16 %v2700, %v2698
        %v2745 = vpack.c.bf16 %v2701, %v2699
        %v2746 = vpack.c.bf16 %v2704, %v2702
        %v2747 = vpack.c.bf16 %v2705, %v2703
        %v2748 = vpack.c.bf16 %v2708, %v2706
        %v2749 = vpack.c.bf16 %v2709, %v2707
        %v2750 = vpack.c.bf16 %v2712, %v2710
        %v2751 = vpack.c.bf16 %v2713, %v2711
        %v2752 = vpack.c.bf16 %v2716, %v2714
        %v2753 = vpack.c.bf16 %v2717, %v2715
        %v2754 = vpack.c.bf16 %v2720, %v2718
        %v2755 = vpack.c.bf16 %v2721, %v2719
        %v2756 = vpack.c.bf16 %v2724, %v2722
        %v2757 = vpack.c.bf16 %v2725, %v2723
        %v2758 = vld [vmem:[%s5] sm:$0xf]
        %v2759 = vld [vmem:[%s5 + $0x4] sm:$0xf]
        %v2760 = vld [vmem:[%s5 + $0x8] sm:$0xf]
        %v2761 = vld [vmem:[%s5 + $0xc] sm:$0xf]
        %v2762 = vld [vmem:[%s5 + $0x10] sm:$0xf]
        %v2763 = vld [vmem:[%s5 + $0x14] sm:$0xf]
        %v2764 = vld [vmem:[%s5 + $0x18] sm:$0xf]
        %v2765 = vld [vmem:[%s5 + $0x1c] sm:$0xf]
        %v2766 = vld [vmem:[%s5 + $0x20] sm:$0xf]
        %v2767 = vld [vmem:[%s5 + $0x24] sm:$0xf]
        %v2768 = vld [vmem:[%s5 + $0x28] sm:$0xf]
        %v2769 = vld [vmem:[%s5 + $0x2c] sm:$0xf]
        %v2770 = vld [vmem:[%s5 + $0x30] sm:$0xf]
        %v2771 = vld [vmem:[%s5 + $0x34] sm:$0xf]
        %v2772 = vld [vmem:[%s5 + $0x38] sm:$0xf]
        %v2773 = vld [vmem:[%s5 + $0x3c] sm:$0xf]
        %v2774 = vld [vmem:[%s5 + $0x40] sm:$0xf]
        %v2775 = vld [vmem:[%s5 + $0x44] sm:$0xf]
        %v2776 = vld [vmem:[%s5 + $0x48] sm:$0xf]
        %v2777 = vld [vmem:[%s5 + $0x4c] sm:$0xf]
        %v2778 = vld [vmem:[%s5 + $0x50] sm:$0x1]
        %v2800 = vunpack.c.l.b16 %v2758
        %v2801 = vunpack.c.l.b16 %v2759
        %v2802 = vunpack.c.l.b16 %v2760
        %v2803 = vunpack.c.l.b16 %v2761
        %v2804 = vunpack.c.l.b16 %v2762
        %v2805 = vunpack.c.l.b16 %v2763
        %v2806 = vunpack.c.l.b16 %v2764
        %v2807 = vunpack.c.l.b16 %v2765
        %v2808 = vunpack.c.l.b16 %v2766
        %v2809 = vunpack.c.l.b16 %v2767
        %v2810 = vunpack.c.l.b16 %v2768
        %v2811 = vunpack.c.l.b16 %v2769
        %v2812 = vunpack.c.l.b16 %v2770
        %v2813 = vunpack.c.l.b16 %v2771
        %v2814 = vunpack.c.l.b16 %v2772
        %v2815 = vunpack.c.l.b16 %v2773
        %v2816 = vunpack.c.l.b16 %v2774
        %v2817 = vunpack.c.l.b16 %v2775
        %v2818 = vunpack.c.l.b16 %v2776
        %v2819 = vunpack.c.l.b16 %v2777
        %v2820 = vunpack.c.l.b16 %v2778
        %v2821 = vpack.c.b16 %v2801, %v2800
        %v2822 = vpack.c.b16 %v2803, %v2802
        %v2823 = vpack.c.b16 %v2805, %v2804
        %v2824 = vpack.c.b16 %v2807, %v2806
        %v2825 = vpack.c.b16 %v2809, %v2808
        %v2826 = vpack.c.b16 %v2811, %v2810
        %v2827 = vpack.c.b16 %v2813, %v2812
        %v2828 = vpack.c.b16 %v2815, %v2814
        %v2829 = vpack.c.b16 %v2817, %v2816
        %v2830 = vpack.c.b16 %v2819, %v2818
        %v2831 = vpack.c.b16 %v2820, %v2820
        %vm2842 = vcmask 277504
        %v2844 = vsel %vm2842, %v2727, 0
        %v2847 = vsel %vm2842, %v2729, 0
        %v2850 = vsel %vm2842, %v2731, 0
        %v2853 = vsel %vm2842, %v2733, 0
        %v2856 = vsel %vm2842, %v2735, 0
        %v2859 = vsel %vm2842, %v2737, 0
        %v2862 = vsel %vm2842, %v2739, 0
        %v2865 = vsel %vm2842, %v2741, 0
        %v2868 = vsel %vm2842, %v2743, 0
        %v2871 = vsel %vm2842, %v2745, 0
        %v2874 = vsel %vm2842, %v2747, 0
        %v2877 = vsel %vm2842, %v2749, 0
        %v2880 = vsel %vm2842, %v2751, 0
        %v2883 = vsel %vm2842, %v2753, 0
        %v2886 = vsel %vm2842, %v2755, 0
        %v2889 = vsel %vm2842, %v2757, 0
        %vm2891 = vcmask 1040384
        %v2893 = vsel %vm2891, %v2831, 0
        %2895 = vmatpush.bf16.msra.mxu0 %v2828
        %2896 = vmatpush.bf16.msra.mxu0 %v2827
        %2897 = vmatpush.bf16.msra.mxu0 %v2826
        %2898 = vmatpush.bf16.msra.mxu0 %v2825
        %2899 = vmatpush.bf16.msra.mxu0 %v2824
        %2900 = vmatpush.bf16.msra.mxu0 %v2823
        %2901 = vmatpush.bf16.msra.mxu0 %v2822
        %2902 = vmatpush.bf16.msra.mxu0 %v2821
        %2903 = vmatmul.bf16.gmra.mxu0 %v2726
        %v2904 = vpop.f32.mrf.mxu0
        %v2905 = vadd.f32 0.0, %v2904
        %v2906 = vpop.f32.mrf.mxu0
        %v2907 = vadd.f32 0.0, %v2906
        %2908 = vmatmul.bf16.gmra.mxu0 %v2728
        %v2909 = vpop.f32.mrf.mxu0
        %v2910 = vadd.f32 0.0, %v2909
        %v2911 = vpop.f32.mrf.mxu0
        %v2912 = vadd.f32 0.0, %v2911
        %2913 = vmatmul.bf16.gmra.mxu0 %v2730
        %v2914 = vpop.f32.mrf.mxu0
        %v2915 = vadd.f32 0.0, %v2914
        %v2916 = vpop.f32.mrf.mxu0
        %v2917 = vadd.f32 0.0, %v2916
        %2918 = vmatmul.bf16.gmra.mxu0 %v2732
        %v2919 = vpop.f32.mrf.mxu0
        %v2920 = vadd.f32 0.0, %v2919
        %v2921 = vpop.f32.mrf.mxu0
        %v2922 = vadd.f32 0.0, %v2921
        %2923 = vmatmul.bf16.gmra.mxu0 %v2734
        %v2924 = vpop.f32.mrf.mxu0
        %v2925 = vadd.f32 0.0, %v2924
        %v2926 = vpop.f32.mrf.mxu0
        %v2927 = vadd.f32 0.0, %v2926
        %2928 = vmatmul.bf16.gmra.mxu0 %v2736
        %v2929 = vpop.f32.mrf.mxu0
        %v2930 = vadd.f32 0.0, %v2929
        %v2931 = vpop.f32.mrf.mxu0
        %v2932 = vadd.f32 0.0, %v2931
        %2933 = vmatmul.bf16.gmra.mxu0 %v2738
        %v2934 = vpop.f32.mrf.mxu0
        %v2935 = vadd.f32 0.0, %v2934
        %v2936 = vpop.f32.mrf.mxu0
        %v2937 = vadd.f32 0.0, %v2936
        %2938 = vmatmul.bf16.gmra.mxu0 %v2740
        %v2939 = vpop.f32.mrf.mxu0
        %v2940 = vadd.f32 0.0, %v2939
        %v2941 = vpop.f32.mrf.mxu0
        %v2942 = vadd.f32 0.0, %v2941
        %2943 = vmatmul.bf16.gmra.mxu0 %v2742
        %v2944 = vpop.f32.mrf.mxu0
        %v2945 = vadd.f32 0.0, %v2944
        %v2946 = vpop.f32.mrf.mxu0
        %v2947 = vadd.f32 0.0, %v2946
        %2948 = vmatmul.bf16.gmra.mxu0 %v2744
        %v2949 = vpop.f32.mrf.mxu0
        %v2950 = vadd.f32 0.0, %v2949
        %v2951 = vpop.f32.mrf.mxu0
        %v2952 = vadd.f32 0.0, %v2951
        %2953 = vmatmul.bf16.gmra.mxu0 %v2746
        %v2954 = vpop.f32.mrf.mxu0
        %v2955 = vadd.f32 0.0, %v2954
        %v2956 = vpop.f32.mrf.mxu0
        %v2957 = vadd.f32 0.0, %v2956
        %2958 = vmatmul.bf16.gmra.mxu0 %v2748
        %v2959 = vpop.f32.mrf.mxu0
        %v2960 = vadd.f32 0.0, %v2959
        %v2961 = vpop.f32.mrf.mxu0
        %v2962 = vadd.f32 0.0, %v2961
        %2963 = vmatmul.bf16.gmra.mxu0 %v2750
        %v2964 = vpop.f32.mrf.mxu0
        %v2965 = vadd.f32 0.0, %v2964
        %v2966 = vpop.f32.mrf.mxu0
        %v2967 = vadd.f32 0.0, %v2966
        %2968 = vmatmul.bf16.gmra.mxu0 %v2752
        %v2969 = vpop.f32.mrf.mxu0
        %v2970 = vadd.f32 0.0, %v2969
        %v2971 = vpop.f32.mrf.mxu0
        %v2972 = vadd.f32 0.0, %v2971
        %2973 = vmatmul.bf16.gmra.mxu0 %v2754
        %v2974 = vpop.f32.mrf.mxu0
        %v2975 = vadd.f32 0.0, %v2974
        %v2976 = vpop.f32.mrf.mxu0
        %v2977 = vadd.f32 0.0, %v2976
        %2978 = vmatmul.bf16.gmra.mxu0 %v2756
        %v2979 = vpop.f32.mrf.mxu0
        %v2980 = vadd.f32 0.0, %v2979
        %v2981 = vpop.f32.mrf.mxu0
        %v2982 = vadd.f32 0.0, %v2981
        %2983 = vdwg.mxu0
        %2984 = vmatpush.bf16.msra.mxu0 0
        %2985 = vmatpush.bf16.msra.mxu0 0
        %2986 = vmatpush.bf16.msra.mxu0 0
        %2987 = vmatpush.bf16.msra.mxu0 0
        %2988 = vmatpush.bf16.msra.mxu0 0
        %2989 = vmatpush.bf16.msra.mxu0 %v2893
        %2990 = vmatpush.bf16.msra.mxu0 %v2830
        %2991 = vmatpush.bf16.msra.mxu0 %v2829
        %2992 = vmatmul.bf16.gmra.mxu0 %v2844
        %v2993 = vpop.f32.mrf.mxu0
        %v2994 = vadd.f32 %v2905, %v2993
        %v2995 = vpop.f32.mrf.mxu0
        %v2996 = vadd.f32 %v2907, %v2995
        %2997 = vmatmul.bf16.gmra.mxu0 %v2847
        %v2998 = vpop.f32.mrf.mxu0
        %v2999 = vadd.f32 %v2910, %v2998
        %v3000 = vpop.f32.mrf.mxu0
        %v3001 = vadd.f32 %v2912, %v3000
        %3002 = vmatmul.bf16.gmra.mxu0 %v2850
        %v3003 = vpop.f32.mrf.mxu0
        %v3004 = vadd.f32 %v2915, %v3003
        %v3005 = vpop.f32.mrf.mxu0
        %v3006 = vadd.f32 %v2917, %v3005
        %3007 = vmatmul.bf16.gmra.mxu0 %v2853
        %v3008 = vpop.f32.mrf.mxu0
        %v3009 = vadd.f32 %v2920, %v3008
        %v3010 = vpop.f32.mrf.mxu0
        %v3011 = vadd.f32 %v2922, %v3010
        %3012 = vmatmul.bf16.gmra.mxu0 %v2856
        %v3013 = vpop.f32.mrf.mxu0
        %v3014 = vadd.f32 %v2925, %v3013
        %v3015 = vpop.f32.mrf.mxu0
        %v3016 = vadd.f32 %v2927, %v3015
        %3017 = vmatmul.bf16.gmra.mxu0 %v2859
        %v3018 = vpop.f32.mrf.mxu0
        %v3019 = vadd.f32 %v2930, %v3018
        %v3020 = vpop.f32.mrf.mxu0
        %v3021 = vadd.f32 %v2932, %v3020
        %3022 = vmatmul.bf16.gmra.mxu0 %v2862
        %v3023 = vpop.f32.mrf.mxu0
        %v3024 = vadd.f32 %v2935, %v3023
        %v3025 = vpop.f32.mrf.mxu0
        %v3026 = vadd.f32 %v2937, %v3025
        %3027 = vmatmul.bf16.gmra.mxu0 %v2865
        %v3028 = vpop.f32.mrf.mxu0
        %v3029 = vadd.f32 %v2940, %v3028
        %v3030 = vpop.f32.mrf.mxu0
        %v3031 = vadd.f32 %v2942, %v3030
        %3032 = vmatmul.bf16.gmra.mxu0 %v2868
        %v3033 = vpop.f32.mrf.mxu0
        %v3034 = vadd.f32 %v2945, %v3033
        %v3035 = vpop.f32.mrf.mxu0
        %v3036 = vadd.f32 %v2947, %v3035
        %3037 = vmatmul.bf16.gmra.mxu0 %v2871
        %v3038 = vpop.f32.mrf.mxu0
        %v3039 = vadd.f32 %v2950, %v3038
        %v3040 = vpop.f32.mrf.mxu0
        %v3041 = vadd.f32 %v2952, %v3040
        %3042 = vmatmul.bf16.gmra.mxu0 %v2874
        %v3043 = vpop.f32.mrf.mxu0
        %v3044 = vadd.f32 %v2955, %v3043
        %v3045 = vpop.f32.mrf.mxu0
        %v3046 = vadd.f32 %v2957, %v3045
        %3047 = vmatmul.bf16.gmra.mxu0 %v2877
        %v3048 = vpop.f32.mrf.mxu0
        %v3049 = vadd.f32 %v2960, %v3048
        %v3050 = vpop.f32.mrf.mxu0
        %v3051 = vadd.f32 %v2962, %v3050
        %3052 = vmatmul.bf16.gmra.mxu0 %v2880
        %v3053 = vpop.f32.mrf.mxu0
        %v3054 = vadd.f32 %v2965, %v3053
        %v3055 = vpop.f32.mrf.mxu0
        %v3056 = vadd.f32 %v2967, %v3055
        %3057 = vmatmul.bf16.gmra.mxu0 %v2883
        %v3058 = vpop.f32.mrf.mxu0
        %v3059 = vadd.f32 %v2970, %v3058
        %v3060 = vpop.f32.mrf.mxu0
        %v3061 = vadd.f32 %v2972, %v3060
        %3062 = vmatmul.bf16.gmra.mxu0 %v2886
        %v3063 = vpop.f32.mrf.mxu0
        %v3064 = vadd.f32 %v2975, %v3063
        %v3065 = vpop.f32.mrf.mxu0
        %v3066 = vadd.f32 %v2977, %v3065
        %3067 = vmatmul.bf16.gmra.mxu0 %v2889
        %v3068 = vpop.f32.mrf.mxu0
        %v3069 = vadd.f32 %v2980, %v3068
        %v3070 = vpop.f32.mrf.mxu0
        %v3071 = vadd.f32 %v2982, %v3070
        %3072 = vdwg.mxu0
        %3073 = vst.msk [vmem:[#allocation3] sm:$0xff] %vm530, %v2994
        %3074 = vst.msk [vmem:[#allocation3 + $0x8] sm:$0xff] %vm530, %v2996
        %3075 = vst.msk [vmem:[#allocation3 + $0x10] sm:$0xff] %vm530, %v2999
        %3076 = vst.msk [vmem:[#allocation3 + $0x18] sm:$0xff] %vm530, %v3001
        %3077 = vst.msk [vmem:[#allocation3 + $0x20] sm:$0xff] %vm530, %v3004
        %3078 = vst.msk [vmem:[#allocation3 + $0x28] sm:$0xff] %vm530, %v3006
        %3079 = vst.msk [vmem:[#allocation3 + $0x30] sm:$0xff] %vm530, %v3009
        %3080 = vst.msk [vmem:[#allocation3 + $0x38] sm:$0xff] %vm530, %v3011
        %3081 = vst.msk [vmem:[#allocation3 + $0x40] sm:$0xff] %vm530, %v3014
        %3082 = vst.msk [vmem:[#allocation3 + $0x48] sm:$0xff] %vm530, %v3016
        %3083 = vst.msk [vmem:[#allocation3 + $0x50] sm:$0xff] %vm530, %v3019
        %3084 = vst.msk [vmem:[#allocation3 + $0x58] sm:$0xff] %vm530, %v3021
        %3085 = vst.msk [vmem:[#allocation3 + $0x60] sm:$0xff] %vm530, %v3024
        %3086 = vst.msk [vmem:[#allocation3 + $0x68] sm:$0xff] %vm530, %v3026
        %3087 = vst.msk [vmem:[#allocation3 + $0x70] sm:$0xff] %vm530, %v3029
        %3088 = vst.msk [vmem:[#allocation3 + $0x78] sm:$0xff] %vm530, %v3031
        %3089 = vst.msk [vmem:[#allocation3 + $0x80] sm:$0xff] %vm530, %v3034
        %3090 = vst.msk [vmem:[#allocation3 + $0x88] sm:$0xff] %vm530, %v3036
        %3091 = vst.msk [vmem:[#allocation3 + $0x90] sm:$0xff] %vm530, %v3039
        %3092 = vst.msk [vmem:[#allocation3 + $0x98] sm:$0xff] %vm530, %v3041
        %3093 = vst.msk [vmem:[#allocation3 + $0xa0] sm:$0xff] %vm530, %v3044
        %3094 = vst.msk [vmem:[#allocation3 + $0xa8] sm:$0xff] %vm530, %v3046
        %3095 = vst.msk [vmem:[#allocation3 + $0xb0] sm:$0xff] %vm530, %v3049
        %3096 = vst.msk [vmem:[#allocation3 + $0xb8] sm:$0xff] %vm530, %v3051
        %3097 = vst.msk [vmem:[#allocation3 + $0xc0] sm:$0xff] %vm530, %v3054
        %3098 = vst.msk [vmem:[#allocation3 + $0xc8] sm:$0xff] %vm530, %v3056
        %3099 = vst.msk [vmem:[#allocation3 + $0xd0] sm:$0xff] %vm530, %v3059
        %3100 = vst.msk [vmem:[#allocation3 + $0xd8] sm:$0xff] %vm530, %v3061
        %3101 = vst.msk [vmem:[#allocation3 + $0xe0] sm:$0xff] %vm530, %v3064
        %3102 = vst.msk [vmem:[#allocation3 + $0xe8] sm:$0xff] %vm530, %v3066
        %3103 = vst.msk [vmem:[#allocation3 + $0xf0] sm:$0xff] %vm530, %v3069
        %3104 = vst.msk [vmem:[#allocation3 + $0xf8] sm:$0xff] %vm530, %v3071
        %v3105 = vld [vmem:[#allocation3] ss:$2 sm:$0xff]
        %s3106 = scalar_lea.vmem [#allocation3], 16
        %v3107 = vld [vmem:[%s3106] ss:$2 sm:$0xff]
        %s3108 = scalar_lea.vmem [#allocation3], 32
        %v3109 = vld [vmem:[%s3108] ss:$2 sm:$0xff]
        %s3110 = scalar_lea.vmem [#allocation3], 48
        %v3111 = vld [vmem:[%s3110] ss:$2 sm:$0xff]
        %s3112 = scalar_lea.vmem [#allocation3], 64
        %v3113 = vld [vmem:[%s3112] ss:$2 sm:$0xff]
        %s3114 = scalar_lea.vmem [#allocation3], 80
        %v3115 = vld [vmem:[%s3114] ss:$2 sm:$0xff]
        %s3116 = scalar_lea.vmem [#allocation3], 96
        %v3117 = vld [vmem:[%s3116] ss:$2 sm:$0xff]
        %s3118 = scalar_lea.vmem [#allocation3], 112
        %v3119 = vld [vmem:[%s3118] ss:$2 sm:$0xff]
        %s3120 = scalar_lea.vmem [#allocation3], 128
        %v3121 = vld [vmem:[%s3120] ss:$2 sm:$0xff]
        %s3122 = scalar_lea.vmem [#allocation3], 144
        %v3123 = vld [vmem:[%s3122] ss:$2 sm:$0xff]
        %s3124 = scalar_lea.vmem [#allocation3], 160
        %v3125 = vld [vmem:[%s3124] ss:$2 sm:$0xff]
        %s3126 = scalar_lea.vmem [#allocation3], 176
        %v3127 = vld [vmem:[%s3126] ss:$2 sm:$0xff]
        %s3128 = scalar_lea.vmem [#allocation3], 192
        %v3129 = vld [vmem:[%s3128] ss:$2 sm:$0xff]
        %s3130 = scalar_lea.vmem [#allocation3], 208
        %v3131 = vld [vmem:[%s3130] ss:$2 sm:$0xff]
        %s3132 = scalar_lea.vmem [#allocation3], 224
        %v3133 = vld [vmem:[%s3132] ss:$2 sm:$0xff]
        %s3134 = scalar_lea.vmem [#allocation3], 240
        %v3135 = vld [vmem:[%s3134] ss:$2 sm:$0xff]
        %s3136 = scalar_lea.vmem [#allocation3], 1
        %v3137 = vld [vmem:[%s3136] ss:$2 sm:$0xff]
        %s3138 = scalar_lea.vmem [#allocation3], 17
        %v3139 = vld [vmem:[%s3138] ss:$2 sm:$0xff]
        %s3140 = scalar_lea.vmem [#allocation3], 33
        %v3141 = vld [vmem:[%s3140] ss:$2 sm:$0xff]
        %s3142 = scalar_lea.vmem [#allocation3], 49
        %v3143 = vld [vmem:[%s3142] ss:$2 sm:$0xff]
        %s3144 = scalar_lea.vmem [#allocation3], 65
        %v3145 = vld [vmem:[%s3144] ss:$2 sm:$0xff]
        %s3146 = scalar_lea.vmem [#allocation3], 81
        %v3147 = vld [vmem:[%s3146] ss:$2 sm:$0xff]
        %s3148 = scalar_lea.vmem [#allocation3], 97
        %v3149 = vld [vmem:[%s3148] ss:$2 sm:$0xff]
        %s3150 = scalar_lea.vmem [#allocation3], 113
        %v3151 = vld [vmem:[%s3150] ss:$2 sm:$0xff]
        %s3152 = scalar_lea.vmem [#allocation3], 129
        %v3153 = vld [vmem:[%s3152] ss:$2 sm:$0xff]
        %s3154 = scalar_lea.vmem [#allocation3], 145
        %v3155 = vld [vmem:[%s3154] ss:$2 sm:$0xff]
        %s3156 = scalar_lea.vmem [#allocation3], 161
        %v3157 = vld [vmem:[%s3156] ss:$2 sm:$0xff]
        %s3158 = scalar_lea.vmem [#allocation3], 177
        %v3159 = vld [vmem:[%s3158] ss:$2 sm:$0xff]
        %s3160 = scalar_lea.vmem [#allocation3], 193
        %v3161 = vld [vmem:[%s3160] ss:$2 sm:$0xff]
        %s3162 = scalar_lea.vmem [#allocation3], 209
        %v3163 = vld [vmem:[%s3162] ss:$2 sm:$0xff]
        %s3164 = scalar_lea.vmem [#allocation3], 225
        %v3165 = vld [vmem:[%s3164] ss:$2 sm:$0xff]
        %s3166 = scalar_lea.vmem [#allocation3], 241
        %v3167 = vld [vmem:[%s3166] ss:$2 sm:$0xff]
        %v3168 = vmax.f32 %v3105, %v3137
        %v3169 = vmax.f32 %v3107, %v3139
        %v3170 = vmax.f32 %v3109, %v3141
        %v3171 = vmax.f32 %v3111, %v3143
        %v3172 = vmax.f32 %v3113, %v3145
        %v3173 = vmax.f32 %v3115, %v3147
        %v3174 = vmax.f32 %v3117, %v3149
        %v3175 = vmax.f32 %v3119, %v3151
        %v3176 = vmax.f32 %v3121, %v3153
        %v3177 = vmax.f32 %v3123, %v3155
        %v3178 = vmax.f32 %v3125, %v3157
        %v3179 = vmax.f32 %v3127, %v3159
        %v3180 = vmax.f32 %v3129, %v3161
        %v3181 = vmax.f32 %v3131, %v3163
        %v3182 = vmax.f32 %v3133, %v3165
        %v3183 = vmax.f32 %v3135, %v3167
        %v3184 = vpack.c.bf16 %v3169, %v3168
        %v3185 = vpack.c.bf16 %v3171, %v3170
        %v3186 = vpack.c.bf16 %v3173, %v3172
        %v3187 = vpack.c.bf16 %v3175, %v3174
        %v3188 = vpack.c.bf16 %v3177, %v3176
        %v3189 = vpack.c.bf16 %v3179, %v3178
        %v3190 = vpack.c.bf16 %v3181, %v3180
        %v3191 = vpack.c.bf16 %v3183, %v3182
        %v3192 = vld [vmem:[%s3] sm:$0xff]
        %v3193 = vld [vmem:[%s3 + $0x8] sm:$0xff]
        %v3194 = vld [vmem:[%s3 + $0x10] sm:$0xff]
        %v3195 = vld [vmem:[%s3 + $0x18] sm:$0xff]
        %v3196 = vld [vmem:[%s3 + $0x20] sm:$0xff]
        %v3197 = vld [vmem:[%s3 + $0x28] sm:$0xff]
        %v3198 = vld [vmem:[%s3 + $0x30] sm:$0xff]
        %v3199 = vld [vmem:[%s3 + $0x38] sm:$0xff]
        %v3200 = vld [vmem:[%s3 + $0x40] sm:$0xff]
        %v3201 = vld [vmem:[%s3 + $0x48] sm:$0xff]
        %v3202 = vld [vmem:[%s3 + $0x50] sm:$0x33]
        %s3203 = scalar_lea.vmem [#allocation3], 2
        %v3204 = vld [vmem:[%s3203] ss:$2 sm:$0xff]
        %s3205 = scalar_lea.vmem [#allocation3], 18
        %v3206 = vld [vmem:[%s3205] ss:$2 sm:$0xff]
        %s3207 = scalar_lea.vmem [#allocation3], 34
        %v3208 = vld [vmem:[%s3207] ss:$2 sm:$0xff]
        %s3209 = scalar_lea.vmem [#allocation3], 50
        %v3210 = vld [vmem:[%s3209] ss:$2 sm:$0xff]
        %s3211 = scalar_lea.vmem [#allocation3], 66
        %v3212 = vld [vmem:[%s3211] ss:$2 sm:$0xff]
        %s3213 = scalar_lea.vmem [#allocation3], 82
        %v3214 = vld [vmem:[%s3213] ss:$2 sm:$0xff]
        %s3215 = scalar_lea.vmem [#allocation3], 98
        %v3216 = vld [vmem:[%s3215] ss:$2 sm:$0xff]
        %s3217 = scalar_lea.vmem [#allocation3], 114
        %v3218 = vld [vmem:[%s3217] ss:$2 sm:$0xff]
        %s3219 = scalar_lea.vmem [#allocation3], 130
        %v3220 = vld [vmem:[%s3219] ss:$2 sm:$0xff]
        %s3221 = scalar_lea.vmem [#allocation3], 146
        %v3222 = vld [vmem:[%s3221] ss:$2 sm:$0xff]
        %s3223 = scalar_lea.vmem [#allocation3], 162
        %v3224 = vld [vmem:[%s3223] ss:$2 sm:$0xff]
        %s3225 = scalar_lea.vmem [#allocation3], 178
        %v3226 = vld [vmem:[%s3225] ss:$2 sm:$0xff]
        %s3227 = scalar_lea.vmem [#allocation3], 194
        %v3228 = vld [vmem:[%s3227] ss:$2 sm:$0xff]
        %s3229 = scalar_lea.vmem [#allocation3], 210
        %v3230 = vld [vmem:[%s3229] ss:$2 sm:$0xff]
        %s3231 = scalar_lea.vmem [#allocation3], 226
        %v3232 = vld [vmem:[%s3231] ss:$2 sm:$0xff]
        %s3233 = scalar_lea.vmem [#allocation3], 242
        %v3234 = vld [vmem:[%s3233] ss:$2 sm:$0xff]
        %s3235 = scalar_lea.vmem [#allocation3], 3
        %v3236 = vld [vmem:[%s3235] ss:$2 sm:$0xff]
        %s3237 = scalar_lea.vmem [#allocation3], 19
        %v3238 = vld [vmem:[%s3237] ss:$2 sm:$0xff]
        %s3239 = scalar_lea.vmem [#allocation3], 35
        %v3240 = vld [vmem:[%s3239] ss:$2 sm:$0xff]
        %s3241 = scalar_lea.vmem [#allocation3], 51
        %v3242 = vld [vmem:[%s3241] ss:$2 sm:$0xff]
        %s3243 = scalar_lea.vmem [#allocation3], 67
        %v3244 = vld [vmem:[%s3243] ss:$2 sm:$0xff]
        %s3245 = scalar_lea.vmem [#allocation3], 83
        %v3246 = vld [vmem:[%s3245] ss:$2 sm:$0xff]
        %s3247 = scalar_lea.vmem [#allocation3], 99
        %v3248 = vld [vmem:[%s3247] ss:$2 sm:$0xff]
        %s3249 = scalar_lea.vmem [#allocation3], 115
        %v3250 = vld [vmem:[%s3249] ss:$2 sm:$0xff]
        %s3251 = scalar_lea.vmem [#allocation3], 131
        %v3252 = vld [vmem:[%s3251] ss:$2 sm:$0xff]
        %s3253 = scalar_lea.vmem [#allocation3], 147
        %v3254 = vld [vmem:[%s3253] ss:$2 sm:$0xff]
        %s3255 = scalar_lea.vmem [#allocation3], 163
        %v3256 = vld [vmem:[%s3255] ss:$2 sm:$0xff]
        %s3257 = scalar_lea.vmem [#allocation3], 179
        %v3258 = vld [vmem:[%s3257] ss:$2 sm:$0xff]
        %s3259 = scalar_lea.vmem [#allocation3], 195
        %v3260 = vld [vmem:[%s3259] ss:$2 sm:$0xff]
        %s3261 = scalar_lea.vmem [#allocation3], 211
        %v3262 = vld [vmem:[%s3261] ss:$2 sm:$0xff]
        %s3263 = scalar_lea.vmem [#allocation3], 227
        %v3264 = vld [vmem:[%s3263] ss:$2 sm:$0xff]
        %s3265 = scalar_lea.vmem [#allocation3], 243
        %v3266 = vld [vmem:[%s3265] ss:$2 sm:$0xff]
        %v3267 = vmax.f32 %v3204, %v3236
        %v3268 = vmax.f32 %v3206, %v3238
        %v3269 = vmax.f32 %v3208, %v3240
        %v3270 = vmax.f32 %v3210, %v3242
        %v3271 = vmax.f32 %v3212, %v3244
        %v3272 = vmax.f32 %v3214, %v3246
        %v3273 = vmax.f32 %v3216, %v3248
        %v3274 = vmax.f32 %v3218, %v3250
        %v3275 = vmax.f32 %v3220, %v3252
        %v3276 = vmax.f32 %v3222, %v3254
        %v3277 = vmax.f32 %v3224, %v3256
        %v3278 = vmax.f32 %v3226, %v3258
        %v3279 = vmax.f32 %v3228, %v3260
        %v3280 = vmax.f32 %v3230, %v3262
        %v3281 = vmax.f32 %v3232, %v3264
        %v3282 = vmax.f32 %v3234, %v3266
        %v3283 = vpack.c.bf16 %v3268, %v3267
        %v3284 = vpack.c.bf16 %v3270, %v3269
        %v3285 = vpack.c.bf16 %v3272, %v3271
        %v3286 = vpack.c.bf16 %v3274, %v3273
        %v3287 = vpack.c.bf16 %v3276, %v3275
        %v3288 = vpack.c.bf16 %v3278, %v3277
        %v3289 = vpack.c.bf16 %v3280, %v3279
        %v3290 = vpack.c.bf16 %v3282, %v3281
        %s3291 = scalar_lea.vmem %s3, 88
        %v3292 = vld [vmem:[%s3291] sm:$0xff]
        %v3293 = vld [vmem:[%s3291 + $0x8] sm:$0xff]
        %v3294 = vld [vmem:[%s3291 + $0x10] sm:$0xff]
        %v3295 = vld [vmem:[%s3291 + $0x18] sm:$0xff]
        %v3296 = vld [vmem:[%s3291 + $0x20] sm:$0xff]
        %v3297 = vld [vmem:[%s3291 + $0x28] sm:$0xff]
        %v3298 = vld [vmem:[%s3291 + $0x30] sm:$0xff]
        %v3299 = vld [vmem:[%s3291 + $0x38] sm:$0xff]
        %v3300 = vld [vmem:[%s3291 + $0x40] sm:$0xff]
        %v3301 = vld [vmem:[%s3291 + $0x48] sm:$0xff]
        %v3302 = vld [vmem:[%s3291 + $0x50] sm:$0x33]
        %v3314 = vunpack.c.l.b16 %v3292
        %v3315 = vunpack.c.h.b16 %v3292
        %v3316 = vunpack.c.l.b16 %v3293
        %v3317 = vunpack.c.h.b16 %v3293
        %v3318 = vunpack.c.l.b16 %v3294
        %v3319 = vunpack.c.h.b16 %v3294
        %v3320 = vunpack.c.l.b16 %v3295
        %v3321 = vunpack.c.h.b16 %v3295
        %v3322 = vunpack.c.l.b16 %v3296
        %v3323 = vunpack.c.h.b16 %v3296
        %v3324 = vunpack.c.l.b16 %v3297
        %v3325 = vunpack.c.h.b16 %v3297
        %v3326 = vunpack.c.l.b16 %v3298
        %v3327 = vunpack.c.h.b16 %v3298
        %v3328 = vunpack.c.l.b16 %v3299
        %v3329 = vunpack.c.h.b16 %v3299
        %v3330 = vunpack.c.l.b16 %v3300
        %v3331 = vunpack.c.h.b16 %v3300
        %v3332 = vunpack.c.l.b16 %v3301
        %v3333 = vunpack.c.h.b16 %v3301
        %v3334 = vunpack.c.l.b16 %v3302
        %v3335 = vunpack.c.h.b16 %v3302
        %v3336 = vpack.c.b16 %v3316, %v3314
        %v3337 = vpack.c.b16 %v3317, %v3315
        %v3338 = vpack.c.b16 %v3320, %v3318
        %v3339 = vpack.c.b16 %v3321, %v3319
        %v3340 = vpack.c.b16 %v3324, %v3322
        %v3341 = vpack.c.b16 %v3325, %v3323
        %v3342 = vpack.c.b16 %v3328, %v3326
        %v3343 = vpack.c.b16 %v3329, %v3327
        %v3344 = vpack.c.b16 %v3332, %v3330
        %v3345 = vpack.c.b16 %v3333, %v3331
        %v3346 = vpack.c.b16 %v3334, %v3334
        %v3347 = vpack.c.b16 %v3335, %v3335
        %v3359 = vsel %vm530, %v3283, 0
        %v3362 = vsel %vm530, %v3284, 0
        %v3365 = vsel %vm530, %v3285, 0
        %v3368 = vsel %vm530, %v3286, 0
        %v3371 = vsel %vm530, %v3287, 0
        %v3374 = vsel %vm530, %v3288, 0
        %v3377 = vsel %vm530, %v3289, 0
        %v3380 = vsel %vm530, %v3290, 0
        %vm3382 = vcmask 1041408
        %v3384 = vsel %vm3382, %v3346, 0
        %v3387 = vsel %vm3382, %v3347, 0
        %3389 = vmatpush.bf16.msra.mxu0 0
        %3390 = vmatpush.bf16.msra.mxu0 0
        %3391 = vmatpush.bf16.msra.mxu0 %v3384
        %3392 = vmatpush.bf16.msra.mxu0 %v3344
        %3393 = vmatpush.bf16.msra.mxu0 %v3342
        %3394 = vmatpush.bf16.msra.mxu0 %v3340
        %3395 = vmatpush.bf16.msra.mxu0 %v3338
        %3396 = vmatpush.bf16.msra.mxu0 %v3336
        %3397 = vmatmul.bf16.gmra.mxu0 %v3359
        %v3398 = vpop.f32.mrf.mxu0
        %v3399 = vadd.f32 0.0, %v3398
        %v3400 = vpop.f32.mrf.mxu0
        %v3401 = vadd.f32 0.0, %v3400
        %3402 = vmatmul.bf16.gmra.mxu0 %v3362
        %v3403 = vpop.f32.mrf.mxu0
        %v3404 = vadd.f32 0.0, %v3403
        %v3405 = vpop.f32.mrf.mxu0
        %v3406 = vadd.f32 0.0, %v3405
        %3407 = vmatmul.bf16.gmra.mxu0 %v3365
        %v3408 = vpop.f32.mrf.mxu0
        %v3409 = vadd.f32 0.0, %v3408
        %v3410 = vpop.f32.mrf.mxu0
        %v3411 = vadd.f32 0.0, %v3410
        %3412 = vmatmul.bf16.gmra.mxu0 %v3368
        %v3413 = vpop.f32.mrf.mxu0
        %v3414 = vadd.f32 0.0, %v3413
        %v3415 = vpop.f32.mrf.mxu0
        %v3416 = vadd.f32 0.0, %v3415
        %3417 = vmatmul.bf16.gmra.mxu0 %v3371
        %v3418 = vpop.f32.mrf.mxu0
        %v3419 = vadd.f32 0.0, %v3418
        %v3420 = vpop.f32.mrf.mxu0
        %v3421 = vadd.f32 0.0, %v3420
        %3422 = vmatmul.bf16.gmra.mxu0 %v3374
        %v3423 = vpop.f32.mrf.mxu0
        %v3424 = vadd.f32 0.0, %v3423
        %v3425 = vpop.f32.mrf.mxu0
        %v3426 = vadd.f32 0.0, %v3425
        %3427 = vmatmul.bf16.gmra.mxu0 %v3377
        %v3428 = vpop.f32.mrf.mxu0
        %v3429 = vadd.f32 0.0, %v3428
        %v3430 = vpop.f32.mrf.mxu0
        %v3431 = vadd.f32 0.0, %v3430
        %3432 = vmatmul.bf16.gmra.mxu0 %v3380
        %v3433 = vpop.f32.mrf.mxu0
        %v3434 = vadd.f32 0.0, %v3433
        %v3435 = vpop.f32.mrf.mxu0
        %v3436 = vadd.f32 0.0, %v3435
        %3437 = vdwg.mxu0
        %3438 = vmatpush.bf16.msra.mxu0 0
        %3439 = vmatpush.bf16.msra.mxu0 0
        %3440 = vmatpush.bf16.msra.mxu0 %v3387
        %3441 = vmatpush.bf16.msra.mxu0 %v3345
        %3442 = vmatpush.bf16.msra.mxu0 %v3343
        %3443 = vmatpush.bf16.msra.mxu0 %v3341
        %3444 = vmatpush.bf16.msra.mxu0 %v3339
        %3445 = vmatpush.bf16.msra.mxu0 %v3337
        %3446 = vmatmul.bf16.gmra.mxu0 %v3359
        %v3447 = vpop.f32.mrf.mxu0
        %v3448 = vadd.f32 0.0, %v3447
        %v3449 = vpop.f32.mrf.mxu0
        %v3450 = vadd.f32 0.0, %v3449
        %3451 = vmatmul.bf16.gmra.mxu0 %v3362
        %v3452 = vpop.f32.mrf.mxu0
        %v3453 = vadd.f32 0.0, %v3452
        %v3454 = vpop.f32.mrf.mxu0
        %v3455 = vadd.f32 0.0, %v3454
        %3456 = vmatmul.bf16.gmra.mxu0 %v3365
        %v3457 = vpop.f32.mrf.mxu0
        %v3458 = vadd.f32 0.0, %v3457
        %v3459 = vpop.f32.mrf.mxu0
        %v3460 = vadd.f32 0.0, %v3459
        %3461 = vmatmul.bf16.gmra.mxu0 %v3368
        %v3462 = vpop.f32.mrf.mxu0
        %v3463 = vadd.f32 0.0, %v3462
        %v3464 = vpop.f32.mrf.mxu0
        %v3465 = vadd.f32 0.0, %v3464
        %3466 = vmatmul.bf16.gmra.mxu0 %v3371
        %v3467 = vpop.f32.mrf.mxu0
        %v3468 = vadd.f32 0.0, %v3467
        %v3469 = vpop.f32.mrf.mxu0
        %v3470 = vadd.f32 0.0, %v3469
        %3471 = vmatmul.bf16.gmra.mxu0 %v3374
        %v3472 = vpop.f32.mrf.mxu0
        %v3473 = vadd.f32 0.0, %v3472
        %v3474 = vpop.f32.mrf.mxu0
        %v3475 = vadd.f32 0.0, %v3474
        %3476 = vmatmul.bf16.gmra.mxu0 %v3377
        %v3477 = vpop.f32.mrf.mxu0
        %v3478 = vadd.f32 0.0, %v3477
        %v3479 = vpop.f32.mrf.mxu0
        %v3480 = vadd.f32 0.0, %v3479
        %3481 = vmatmul.bf16.gmra.mxu0 %v3380
        %v3482 = vpop.f32.mrf.mxu0
        %v3483 = vadd.f32 0.0, %v3482
        %v3484 = vpop.f32.mrf.mxu0
        %v3485 = vadd.f32 0.0, %v3484
        %3486 = vdwg.mxu0
        %v3498 = vunpack.c.l.b16 %v3192
        %v3499 = vunpack.c.h.b16 %v3192
        %v3500 = vunpack.c.l.b16 %v3193
        %v3501 = vunpack.c.h.b16 %v3193
        %v3502 = vunpack.c.l.b16 %v3194
        %v3503 = vunpack.c.h.b16 %v3194
        %v3504 = vunpack.c.l.b16 %v3195
        %v3505 = vunpack.c.h.b16 %v3195
        %v3506 = vunpack.c.l.b16 %v3196
        %v3507 = vunpack.c.h.b16 %v3196
        %v3508 = vunpack.c.l.b16 %v3197
        %v3509 = vunpack.c.h.b16 %v3197
        %v3510 = vunpack.c.l.b16 %v3198
        %v3511 = vunpack.c.h.b16 %v3198
        %v3512 = vunpack.c.l.b16 %v3199
        %v3513 = vunpack.c.h.b16 %v3199
        %v3514 = vunpack.c.l.b16 %v3200
        %v3515 = vunpack.c.h.b16 %v3200
        %v3516 = vunpack.c.l.b16 %v3201
        %v3517 = vunpack.c.h.b16 %v3201
        %v3518 = vunpack.c.l.b16 %v3202
        %v3519 = vunpack.c.h.b16 %v3202
        %v3520 = vpack.c.b16 %v3500, %v3498
        %v3521 = vpack.c.b16 %v3501, %v3499
        %v3522 = vpack.c.b16 %v3504, %v3502
        %v3523 = vpack.c.b16 %v3505, %v3503
        %v3524 = vpack.c.b16 %v3508, %v3506
        %v3525 = vpack.c.b16 %v3509, %v3507
        %v3526 = vpack.c.b16 %v3512, %v3510
        %v3527 = vpack.c.b16 %v3513, %v3511
        %v3528 = vpack.c.b16 %v3516, %v3514
        %v3529 = vpack.c.b16 %v3517, %v3515
        %v3530 = vpack.c.b16 %v3518, %v3518
        %v3531 = vpack.c.b16 %v3519, %v3519
        %v3543 = vsel %vm530, %v3184, 0
        %v3546 = vsel %vm530, %v3185, 0
        %v3549 = vsel %vm530, %v3186, 0
        %v3552 = vsel %vm530, %v3187, 0
        %v3555 = vsel %vm530, %v3188, 0
        %v3558 = vsel %vm530, %v3189, 0
        %v3561 = vsel %vm530, %v3190, 0
        %v3564 = vsel %vm530, %v3191, 0
        %v3567 = vsel %vm3382, %v3530, 0
        %v3570 = vsel %vm3382, %v3531, 0
        %3572 = vmatpush.bf16.msra.mxu0 0
        %3573 = vmatpush.bf16.msra.mxu0 0
        %3574 = vmatpush.bf16.msra.mxu0 %v3567
        %3575 = vmatpush.bf16.msra.mxu0 %v3528
        %3576 = vmatpush.bf16.msra.mxu0 %v3526
        %3577 = vmatpush.bf16.msra.mxu0 %v3524
        %3578 = vmatpush.bf16.msra.mxu0 %v3522
        %3579 = vmatpush.bf16.msra.mxu0 %v3520
        %3580 = vmatmul.bf16.gmra.mxu0 %v3543
        %v3581 = vpop.f32.mrf.mxu0
        %v3582 = vadd.f32 %v3399, %v3581
        %v3583 = vpop.f32.mrf.mxu0
        %v3584 = vadd.f32 %v3401, %v3583
        %3585 = vmatmul.bf16.gmra.mxu0 %v3546
        %v3586 = vpop.f32.mrf.mxu0
        %v3587 = vadd.f32 %v3404, %v3586
        %v3588 = vpop.f32.mrf.mxu0
        %v3589 = vadd.f32 %v3406, %v3588
        %3590 = vmatmul.bf16.gmra.mxu0 %v3549
        %v3591 = vpop.f32.mrf.mxu0
        %v3592 = vadd.f32 %v3409, %v3591
        %v3593 = vpop.f32.mrf.mxu0
        %v3594 = vadd.f32 %v3411, %v3593
        %3595 = vmatmul.bf16.gmra.mxu0 %v3552
        %v3596 = vpop.f32.mrf.mxu0
        %v3597 = vadd.f32 %v3414, %v3596
        %v3598 = vpop.f32.mrf.mxu0
        %v3599 = vadd.f32 %v3416, %v3598
        %3600 = vmatmul.bf16.gmra.mxu0 %v3555
        %v3601 = vpop.f32.mrf.mxu0
        %v3602 = vadd.f32 %v3419, %v3601
        %v3603 = vpop.f32.mrf.mxu0
        %v3604 = vadd.f32 %v3421, %v3603
        %3605 = vmatmul.bf16.gmra.mxu0 %v3558
        %v3606 = vpop.f32.mrf.mxu0
        %v3607 = vadd.f32 %v3424, %v3606
        %v3608 = vpop.f32.mrf.mxu0
        %v3609 = vadd.f32 %v3426, %v3608
        %3610 = vmatmul.bf16.gmra.mxu0 %v3561
        %v3611 = vpop.f32.mrf.mxu0
        %v3612 = vadd.f32 %v3429, %v3611
        %v3613 = vpop.f32.mrf.mxu0
        %v3614 = vadd.f32 %v3431, %v3613
        %3615 = vmatmul.bf16.gmra.mxu0 %v3564
        %v3616 = vpop.f32.mrf.mxu0
        %v3617 = vadd.f32 %v3434, %v3616
        %v3618 = vpop.f32.mrf.mxu0
        %v3619 = vadd.f32 %v3436, %v3618
        %3620 = vdwg.mxu0
        %3621 = vmatpush.bf16.msra.mxu0 0
        %3622 = vmatpush.bf16.msra.mxu0 0
        %3623 = vmatpush.bf16.msra.mxu0 %v3570
        %3624 = vmatpush.bf16.msra.mxu0 %v3529
        %3625 = vmatpush.bf16.msra.mxu0 %v3527
        %3626 = vmatpush.bf16.msra.mxu0 %v3525
        %3627 = vmatpush.bf16.msra.mxu0 %v3523
        %3628 = vmatpush.bf16.msra.mxu0 %v3521
        %3629 = vmatmul.bf16.gmra.mxu0 %v3543
        %v3630 = vpop.f32.mrf.mxu0
        %v3631 = vadd.f32 %v3448, %v3630
        %v3632 = vpop.f32.mrf.mxu0
        %v3633 = vadd.f32 %v3450, %v3632
        %3634 = vmatmul.bf16.gmra.mxu0 %v3546
        %v3635 = vpop.f32.mrf.mxu0
        %v3636 = vadd.f32 %v3453, %v3635
        %v3637 = vpop.f32.mrf.mxu0
        %v3638 = vadd.f32 %v3455, %v3637
        %3639 = vmatmul.bf16.gmra.mxu0 %v3549
        %v3640 = vpop.f32.mrf.mxu0
        %v3641 = vadd.f32 %v3458, %v3640
        %v3642 = vpop.f32.mrf.mxu0
        %v3643 = vadd.f32 %v3460, %v3642
        %3644 = vmatmul.bf16.gmra.mxu0 %v3552
        %v3645 = vpop.f32.mrf.mxu0
        %v3646 = vadd.f32 %v3463, %v3645
        %v3647 = vpop.f32.mrf.mxu0
        %v3648 = vadd.f32 %v3465, %v3647
        %3649 = vmatmul.bf16.gmra.mxu0 %v3555
        %v3650 = vpop.f32.mrf.mxu0
        %v3651 = vadd.f32 %v3468, %v3650
        %v3652 = vpop.f32.mrf.mxu0
        %v3653 = vadd.f32 %v3470, %v3652
        %3654 = vmatmul.bf16.gmra.mxu0 %v3558
        %v3655 = vpop.f32.mrf.mxu0
        %v3656 = vadd.f32 %v3473, %v3655
        %v3657 = vpop.f32.mrf.mxu0
        %v3658 = vadd.f32 %v3475, %v3657
        %3659 = vmatmul.bf16.gmra.mxu0 %v3561
        %v3660 = vpop.f32.mrf.mxu0
        %v3661 = vadd.f32 %v3478, %v3660
        %v3662 = vpop.f32.mrf.mxu0
        %v3663 = vadd.f32 %v3480, %v3662
        %3664 = vmatmul.bf16.gmra.mxu0 %v3564
        %v3665 = vpop.f32.mrf.mxu0
        %v3666 = vadd.f32 %v3483, %v3665
        %v3667 = vpop.f32.mrf.mxu0
        %v3668 = vadd.f32 %v3485, %v3667
        %3669 = vdwg.mxu0
        %s3670 = scalar_lea.vmem [#allocation3], 4
        %v3671 = vld [vmem:[%s3670] ss:$2 sm:$0xff]
        %s3672 = scalar_lea.vmem [#allocation3], 20
        %v3673 = vld [vmem:[%s3672] ss:$2 sm:$0xff]
        %s3674 = scalar_lea.vmem [#allocation3], 36
        %v3675 = vld [vmem:[%s3674] ss:$2 sm:$0xff]
        %s3676 = scalar_lea.vmem [#allocation3], 52
        %v3677 = vld [vmem:[%s3676] ss:$2 sm:$0xff]
        %s3678 = scalar_lea.vmem [#allocation3], 68
        %v3679 = vld [vmem:[%s3678] ss:$2 sm:$0xff]
        %s3680 = scalar_lea.vmem [#allocation3], 84
        %v3681 = vld [vmem:[%s3680] ss:$2 sm:$0xff]
        %s3682 = scalar_lea.vmem [#allocation3], 100
        %v3683 = vld [vmem:[%s3682] ss:$2 sm:$0xff]
        %s3684 = scalar_lea.vmem [#allocation3], 116
        %v3685 = vld [vmem:[%s3684] ss:$2 sm:$0xff]
        %s3686 = scalar_lea.vmem [#allocation3], 132
        %v3687 = vld [vmem:[%s3686] ss:$2 sm:$0xff]
        %s3688 = scalar_lea.vmem [#allocation3], 148
        %v3689 = vld [vmem:[%s3688] ss:$2 sm:$0xff]
        %s3690 = scalar_lea.vmem [#allocation3], 164
        %v3691 = vld [vmem:[%s3690] ss:$2 sm:$0xff]
        %s3692 = scalar_lea.vmem [#allocation3], 180
        %v3693 = vld [vmem:[%s3692] ss:$2 sm:$0xff]
        %s3694 = scalar_lea.vmem [#allocation3], 196
        %v3695 = vld [vmem:[%s3694] ss:$2 sm:$0xff]
        %s3696 = scalar_lea.vmem [#allocation3], 212
        %v3697 = vld [vmem:[%s3696] ss:$2 sm:$0xff]
        %s3698 = scalar_lea.vmem [#allocation3], 228
        %v3699 = vld [vmem:[%s3698] ss:$2 sm:$0xff]
        %s3700 = scalar_lea.vmem [#allocation3], 244
        %v3701 = vld [vmem:[%s3700] ss:$2 sm:$0xff]
        %s3702 = scalar_lea.vmem [#allocation3], 5
        %v3703 = vld [vmem:[%s3702] ss:$2 sm:$0xff]
        %s3704 = scalar_lea.vmem [#allocation3], 21
        %v3705 = vld [vmem:[%s3704] ss:$2 sm:$0xff]
        %s3706 = scalar_lea.vmem [#allocation3], 37
        %v3707 = vld [vmem:[%s3706] ss:$2 sm:$0xff]
        %s3708 = scalar_lea.vmem [#allocation3], 53
        %v3709 = vld [vmem:[%s3708] ss:$2 sm:$0xff]
        %s3710 = scalar_lea.vmem [#allocation3], 69
        %v3711 = vld [vmem:[%s3710] ss:$2 sm:$0xff]
        %s3712 = scalar_lea.vmem [#allocation3], 85
        %v3713 = vld [vmem:[%s3712] ss:$2 sm:$0xff]
        %s3714 = scalar_lea.vmem [#allocation3], 101
        %v3715 = vld [vmem:[%s3714] ss:$2 sm:$0xff]
        %s3716 = scalar_lea.vmem [#allocation3], 117
        %v3717 = vld [vmem:[%s3716] ss:$2 sm:$0xff]
        %s3718 = scalar_lea.vmem [#allocation3], 133
        %v3719 = vld [vmem:[%s3718] ss:$2 sm:$0xff]
        %s3720 = scalar_lea.vmem [#allocation3], 149
        %v3721 = vld [vmem:[%s3720] ss:$2 sm:$0xff]
        %s3722 = scalar_lea.vmem [#allocation3], 165
        %v3723 = vld [vmem:[%s3722] ss:$2 sm:$0xff]
        %s3724 = scalar_lea.vmem [#allocation3], 181
        %v3725 = vld [vmem:[%s3724] ss:$2 sm:$0xff]
        %s3726 = scalar_lea.vmem [#allocation3], 197
        %v3727 = vld [vmem:[%s3726] ss:$2 sm:$0xff]
        %s3728 = scalar_lea.vmem [#allocation3], 213
        %v3729 = vld [vmem:[%s3728] ss:$2 sm:$0xff]
        %s3730 = scalar_lea.vmem [#allocation3], 229
        %v3731 = vld [vmem:[%s3730] ss:$2 sm:$0xff]
        %s3732 = scalar_lea.vmem [#allocation3], 245
        %v3733 = vld [vmem:[%s3732] ss:$2 sm:$0xff]
        %v3734 = vmax.f32 %v3671, %v3703
        %v3735 = vmax.f32 %v3673, %v3705
        %v3736 = vmax.f32 %v3675, %v3707
        %v3737 = vmax.f32 %v3677, %v3709
        %v3738 = vmax.f32 %v3679, %v3711
        %v3739 = vmax.f32 %v3681, %v3713
        %v3740 = vmax.f32 %v3683, %v3715
        %v3741 = vmax.f32 %v3685, %v3717
        %v3742 = vmax.f32 %v3687, %v3719
        %v3743 = vmax.f32 %v3689, %v3721
        %v3744 = vmax.f32 %v3691, %v3723
        %v3745 = vmax.f32 %v3693, %v3725
        %v3746 = vmax.f32 %v3695, %v3727
        %v3747 = vmax.f32 %v3697, %v3729
        %v3748 = vmax.f32 %v3699, %v3731
        %v3749 = vmax.f32 %v3701, %v3733
        %v3750 = vpack.c.bf16 %v3735, %v3734
        %v3751 = vpack.c.bf16 %v3737, %v3736
        %v3752 = vpack.c.bf16 %v3739, %v3738
        %v3753 = vpack.c.bf16 %v3741, %v3740
        %v3754 = vpack.c.bf16 %v3743, %v3742
        %v3755 = vpack.c.bf16 %v3745, %v3744
        %v3756 = vpack.c.bf16 %v3747, %v3746
        %v3757 = vpack.c.bf16 %v3749, %v3748
        %s3758 = scalar_lea.vmem %s3, 176
        %v3759 = vld [vmem:[%s3758] sm:$0xff]
        %v3760 = vld [vmem:[%s3758 + $0x8] sm:$0xff]
        %v3761 = vld [vmem:[%s3758 + $0x10] sm:$0xff]
        %v3762 = vld [vmem:[%s3758 + $0x18] sm:$0xff]
        %v3763 = vld [vmem:[%s3758 + $0x20] sm:$0xff]
        %v3764 = vld [vmem:[%s3758 + $0x28] sm:$0xff]
        %v3765 = vld [vmem:[%s3758 + $0x30] sm:$0xff]
        %v3766 = vld [vmem:[%s3758 + $0x38] sm:$0xff]
        %v3767 = vld [vmem:[%s3758 + $0x40] sm:$0xff]
        %v3768 = vld [vmem:[%s3758 + $0x48] sm:$0xff]
        %v3769 = vld [vmem:[%s3758 + $0x50] sm:$0x33]
        %v3781 = vunpack.c.l.b16 %v3759
        %v3782 = vunpack.c.h.b16 %v3759
        %v3783 = vunpack.c.l.b16 %v3760
        %v3784 = vunpack.c.h.b16 %v3760
        %v3785 = vunpack.c.l.b16 %v3761
        %v3786 = vunpack.c.h.b16 %v3761
        %v3787 = vunpack.c.l.b16 %v3762
        %v3788 = vunpack.c.h.b16 %v3762
        %v3789 = vunpack.c.l.b16 %v3763
        %v3790 = vunpack.c.h.b16 %v3763
        %v3791 = vunpack.c.l.b16 %v3764
        %v3792 = vunpack.c.h.b16 %v3764
        %v3793 = vunpack.c.l.b16 %v3765
        %v3794 = vunpack.c.h.b16 %v3765
        %v3795 = vunpack.c.l.b16 %v3766
        %v3796 = vunpack.c.h.b16 %v3766
        %v3797 = vunpack.c.l.b16 %v3767
        %v3798 = vunpack.c.h.b16 %v3767
        %v3799 = vunpack.c.l.b16 %v3768
        %v3800 = vunpack.c.h.b16 %v3768
        %v3801 = vunpack.c.l.b16 %v3769
        %v3802 = vunpack.c.h.b16 %v3769
        %v3803 = vpack.c.b16 %v3783, %v3781
        %v3804 = vpack.c.b16 %v3784, %v3782
        %v3805 = vpack.c.b16 %v3787, %v3785
        %v3806 = vpack.c.b16 %v3788, %v3786
        %v3807 = vpack.c.b16 %v3791, %v3789
        %v3808 = vpack.c.b16 %v3792, %v3790
        %v3809 = vpack.c.b16 %v3795, %v3793
        %v3810 = vpack.c.b16 %v3796, %v3794
        %v3811 = vpack.c.b16 %v3799, %v3797
        %v3812 = vpack.c.b16 %v3800, %v3798
        %v3813 = vpack.c.b16 %v3801, %v3801
        %v3814 = vpack.c.b16 %v3802, %v3802
        %v3826 = vsel %vm530, %v3750, 0
        %v3829 = vsel %vm530, %v3751, 0
        %v3832 = vsel %vm530, %v3752, 0
        %v3835 = vsel %vm530, %v3753, 0
        %v3838 = vsel %vm530, %v3754, 0
        %v3841 = vsel %vm530, %v3755, 0
        %v3844 = vsel %vm530, %v3756, 0
        %v3847 = vsel %vm530, %v3757, 0
        %v3850 = vsel %vm3382, %v3813, 0
        %v3853 = vsel %vm3382, %v3814, 0
        %3855 = vmatpush.bf16.msra.mxu0 0
        %3856 = vmatpush.bf16.msra.mxu0 0
        %3857 = vmatpush.bf16.msra.mxu0 %v3850
        %3858 = vmatpush.bf16.msra.mxu0 %v3811
        %3859 = vmatpush.bf16.msra.mxu0 %v3809
        %3860 = vmatpush.bf16.msra.mxu0 %v3807
        %3861 = vmatpush.bf16.msra.mxu0 %v3805
        %3862 = vmatpush.bf16.msra.mxu0 %v3803
        %3863 = vmatmul.bf16.gmra.mxu0 %v3826
        %v3864 = vpop.f32.mrf.mxu0
        %v3865 = vadd.f32 0.0, %v3864
        %v3866 = vpop.f32.mrf.mxu0
        %v3867 = vadd.f32 0.0, %v3866
        %3868 = vmatmul.bf16.gmra.mxu0 %v3829
        %v3869 = vpop.f32.mrf.mxu0
        %v3870 = vadd.f32 0.0, %v3869
        %v3871 = vpop.f32.mrf.mxu0
        %v3872 = vadd.f32 0.0, %v3871
        %3873 = vmatmul.bf16.gmra.mxu0 %v3832
        %v3874 = vpop.f32.mrf.mxu0
        %v3875 = vadd.f32 0.0, %v3874
        %v3876 = vpop.f32.mrf.mxu0
        %v3877 = vadd.f32 0.0, %v3876
        %3878 = vmatmul.bf16.gmra.mxu0 %v3835
        %v3879 = vpop.f32.mrf.mxu0
        %v3880 = vadd.f32 0.0, %v3879
        %v3881 = vpop.f32.mrf.mxu0
        %v3882 = vadd.f32 0.0, %v3881
        %3883 = vmatmul.bf16.gmra.mxu0 %v3838
        %v3884 = vpop.f32.mrf.mxu0
        %v3885 = vadd.f32 0.0, %v3884
        %v3886 = vpop.f32.mrf.mxu0
        %v3887 = vadd.f32 0.0, %v3886
        %3888 = vmatmul.bf16.gmra.mxu0 %v3841
        %v3889 = vpop.f32.mrf.mxu0
        %v3890 = vadd.f32 0.0, %v3889
        %v3891 = vpop.f32.mrf.mxu0
        %v3892 = vadd.f32 0.0, %v3891
        %3893 = vmatmul.bf16.gmra.mxu0 %v3844
        %v3894 = vpop.f32.mrf.mxu0
        %v3895 = vadd.f32 0.0, %v3894
        %v3896 = vpop.f32.mrf.mxu0
        %v3897 = vadd.f32 0.0, %v3896
        %3898 = vmatmul.bf16.gmra.mxu0 %v3847
        %v3899 = vpop.f32.mrf.mxu0
        %v3900 = vadd.f32 0.0, %v3899
        %v3901 = vpop.f32.mrf.mxu0
        %v3902 = vadd.f32 0.0, %v3901
        %3903 = vdwg.mxu0
        %3904 = vmatpush.bf16.msra.mxu0 0
        %3905 = vmatpush.bf16.msra.mxu0 0
        %3906 = vmatpush.bf16.msra.mxu0 %v3853
        %3907 = vmatpush.bf16.msra.mxu0 %v3812
        %3908 = vmatpush.bf16.msra.mxu0 %v3810
        %3909 = vmatpush.bf16.msra.mxu0 %v3808
        %3910 = vmatpush.bf16.msra.mxu0 %v3806
        %3911 = vmatpush.bf16.msra.mxu0 %v3804
        %3912 = vmatmul.bf16.gmra.mxu0 %v3826
        %v3913 = vpop.f32.mrf.mxu0
        %v3914 = vadd.f32 0.0, %v3913
        %v3915 = vpop.f32.mrf.mxu0
        %v3916 = vadd.f32 0.0, %v3915
        %3917 = vmatmul.bf16.gmra.mxu0 %v3829
        %v3918 = vpop.f32.mrf.mxu0
        %v3919 = vadd.f32 0.0, %v3918
        %v3920 = vpop.f32.mrf.mxu0
        %v3921 = vadd.f32 0.0, %v3920
        %3922 = vmatmul.bf16.gmra.mxu0 %v3832
        %v3923 = vpop.f32.mrf.mxu0
        %v3924 = vadd.f32 0.0, %v3923
        %v3925 = vpop.f32.mrf.mxu0
        %v3926 = vadd.f32 0.0, %v3925
        %3927 = vmatmul.bf16.gmra.mxu0 %v3835
        %v3928 = vpop.f32.mrf.mxu0
        %v3929 = vadd.f32 0.0, %v3928
        %v3930 = vpop.f32.mrf.mxu0
        %v3931 = vadd.f32 0.0, %v3930
        %3932 = vmatmul.bf16.gmra.mxu0 %v3838
        %v3933 = vpop.f32.mrf.mxu0
        %v3934 = vadd.f32 0.0, %v3933
        %v3935 = vpop.f32.mrf.mxu0
        %v3936 = vadd.f32 0.0, %v3935
        %3937 = vmatmul.bf16.gmra.mxu0 %v3841
        %v3938 = vpop.f32.mrf.mxu0
        %v3939 = vadd.f32 0.0, %v3938
        %v3940 = vpop.f32.mrf.mxu0
        %v3941 = vadd.f32 0.0, %v3940
        %3942 = vmatmul.bf16.gmra.mxu0 %v3844
        %v3943 = vpop.f32.mrf.mxu0
        %v3944 = vadd.f32 0.0, %v3943
        %v3945 = vpop.f32.mrf.mxu0
        %v3946 = vadd.f32 0.0, %v3945
        %3947 = vmatmul.bf16.gmra.mxu0 %v3847
        %v3948 = vpop.f32.mrf.mxu0
        %v3949 = vadd.f32 0.0, %v3948
        %v3950 = vpop.f32.mrf.mxu0
        %v3951 = vadd.f32 0.0, %v3950
        %3952 = vdwg.mxu0
        %v3953 = vadd.f32 %v3582, %v3865
        %v3954 = vadd.f32 %v3631, %v3914
        %v3955 = vadd.f32 %v3584, %v3867
        %v3956 = vadd.f32 %v3633, %v3916
        %v3957 = vadd.f32 %v3587, %v3870
        %v3958 = vadd.f32 %v3636, %v3919
        %v3959 = vadd.f32 %v3589, %v3872
        %v3960 = vadd.f32 %v3638, %v3921
        %v3961 = vadd.f32 %v3592, %v3875
        %v3962 = vadd.f32 %v3641, %v3924
        %v3963 = vadd.f32 %v3594, %v3877
        %v3964 = vadd.f32 %v3643, %v3926
        %v3965 = vadd.f32 %v3597, %v3880
        %v3966 = vadd.f32 %v3646, %v3929
        %v3967 = vadd.f32 %v3599, %v3882
        %v3968 = vadd.f32 %v3648, %v3931
        %v3969 = vadd.f32 %v3602, %v3885
        %v3970 = vadd.f32 %v3651, %v3934
        %v3971 = vadd.f32 %v3604, %v3887
        %v3972 = vadd.f32 %v3653, %v3936
        %v3973 = vadd.f32 %v3607, %v3890
        %v3974 = vadd.f32 %v3656, %v3939
        %v3975 = vadd.f32 %v3609, %v3892
        %v3976 = vadd.f32 %v3658, %v3941
        %v3977 = vadd.f32 %v3612, %v3895
        %v3978 = vadd.f32 %v3661, %v3944
        %v3979 = vadd.f32 %v3614, %v3897
        %v3980 = vadd.f32 %v3663, %v3946
        %v3981 = vadd.f32 %v3617, %v3900
        %v3982 = vadd.f32 %v3666, %v3949
        %v3983 = vadd.f32 %v3619, %v3902
        %v3984 = vadd.f32 %v3668, %v3951
        %s3985 = scalar_lea.vmem [#allocation3], 6
        %v3986 = vld [vmem:[%s3985] ss:$2 sm:$0xff]
        %s3987 = scalar_lea.vmem [#allocation3], 22
        %v3988 = vld [vmem:[%s3987] ss:$2 sm:$0xff]
        %s3989 = scalar_lea.vmem [#allocation3], 38
        %v3990 = vld [vmem:[%s3989] ss:$2 sm:$0xff]
        %s3991 = scalar_lea.vmem [#allocation3], 54
        %v3992 = vld [vmem:[%s3991] ss:$2 sm:$0xff]
        %s3993 = scalar_lea.vmem [#allocation3], 70
        %v3994 = vld [vmem:[%s3993] ss:$2 sm:$0xff]
        %s3995 = scalar_lea.vmem [#allocation3], 86
        %v3996 = vld [vmem:[%s3995] ss:$2 sm:$0xff]
        %s3997 = scalar_lea.vmem [#allocation3], 102
        %v3998 = vld [vmem:[%s3997] ss:$2 sm:$0xff]
        %s3999 = scalar_lea.vmem [#allocation3], 118
        %v4000 = vld [vmem:[%s3999] ss:$2 sm:$0xff]
        %s4001 = scalar_lea.vmem [#allocation3], 134
        %v4002 = vld [vmem:[%s4001] ss:$2 sm:$0xff]
        %s4003 = scalar_lea.vmem [#allocation3], 150
        %v4004 = vld [vmem:[%s4003] ss:$2 sm:$0xff]
        %s4005 = scalar_lea.vmem [#allocation3], 166
        %v4006 = vld [vmem:[%s4005] ss:$2 sm:$0xff]
        %s4007 = scalar_lea.vmem [#allocation3], 182
        %v4008 = vld [vmem:[%s4007] ss:$2 sm:$0xff]
        %s4009 = scalar_lea.vmem [#allocation3], 198
        %v4010 = vld [vmem:[%s4009] ss:$2 sm:$0xff]
        %s4011 = scalar_lea.vmem [#allocation3], 214
        %v4012 = vld [vmem:[%s4011] ss:$2 sm:$0xff]
        %s4013 = scalar_lea.vmem [#allocation3], 230
        %v4014 = vld [vmem:[%s4013] ss:$2 sm:$0xff]
        %s4015 = scalar_lea.vmem [#allocation3], 246
        %v4016 = vld [vmem:[%s4015] ss:$2 sm:$0xff]
        %s4017 = scalar_lea.vmem [#allocation3], 7
        %v4018 = vld [vmem:[%s4017] ss:$2 sm:$0xff]
        %s4019 = scalar_lea.vmem [#allocation3], 23
        %v4020 = vld [vmem:[%s4019] ss:$2 sm:$0xff]
        %s4021 = scalar_lea.vmem [#allocation3], 39
        %v4022 = vld [vmem:[%s4021] ss:$2 sm:$0xff]
        %s4023 = scalar_lea.vmem [#allocation3], 55
        %v4024 = vld [vmem:[%s4023] ss:$2 sm:$0xff]
        %s4025 = scalar_lea.vmem [#allocation3], 71
        %v4026 = vld [vmem:[%s4025] ss:$2 sm:$0xff]
        %s4027 = scalar_lea.vmem [#allocation3], 87
        %v4028 = vld [vmem:[%s4027] ss:$2 sm:$0xff]
        %s4029 = scalar_lea.vmem [#allocation3], 103
        %v4030 = vld [vmem:[%s4029] ss:$2 sm:$0xff]
        %s4031 = scalar_lea.vmem [#allocation3], 119
        %v4032 = vld [vmem:[%s4031] ss:$2 sm:$0xff]
        %s4033 = scalar_lea.vmem [#allocation3], 135
        %v4034 = vld [vmem:[%s4033] ss:$2 sm:$0xff]
        %s4035 = scalar_lea.vmem [#allocation3], 151
        %v4036 = vld [vmem:[%s4035] ss:$2 sm:$0xff]
        %s4037 = scalar_lea.vmem [#allocation3], 167
        %v4038 = vld [vmem:[%s4037] ss:$2 sm:$0xff]
        %s4039 = scalar_lea.vmem [#allocation3], 183
        %v4040 = vld [vmem:[%s4039] ss:$2 sm:$0xff]
        %s4041 = scalar_lea.vmem [#allocation3], 199
        %v4042 = vld [vmem:[%s4041] ss:$2 sm:$0xff]
        %s4043 = scalar_lea.vmem [#allocation3], 215
        %v4044 = vld [vmem:[%s4043] ss:$2 sm:$0xff]
        %s4045 = scalar_lea.vmem [#allocation3], 231
        %v4046 = vld [vmem:[%s4045] ss:$2 sm:$0xff]
        %s4047 = scalar_lea.vmem [#allocation3], 247
        %v4048 = vld [vmem:[%s4047] ss:$2 sm:$0xff]
        %v4049 = vmax.f32 %v3986, %v4018
        %v4050 = vmax.f32 %v3988, %v4020
        %v4051 = vmax.f32 %v3990, %v4022
        %v4052 = vmax.f32 %v3992, %v4024
        %v4053 = vmax.f32 %v3994, %v4026
        %v4054 = vmax.f32 %v3996, %v4028
        %v4055 = vmax.f32 %v3998, %v4030
        %v4056 = vmax.f32 %v4000, %v4032
        %v4057 = vmax.f32 %v4002, %v4034
        %v4058 = vmax.f32 %v4004, %v4036
        %v4059 = vmax.f32 %v4006, %v4038
        %v4060 = vmax.f32 %v4008, %v4040
        %v4061 = vmax.f32 %v4010, %v4042
        %v4062 = vmax.f32 %v4012, %v4044
        %v4063 = vmax.f32 %v4014, %v4046
        %v4064 = vmax.f32 %v4016, %v4048
        %v4065 = vpack.c.bf16 %v4050, %v4049
        %v4066 = vpack.c.bf16 %v4052, %v4051
        %v4067 = vpack.c.bf16 %v4054, %v4053
        %v4068 = vpack.c.bf16 %v4056, %v4055
        %v4069 = vpack.c.bf16 %v4058, %v4057
        %v4070 = vpack.c.bf16 %v4060, %v4059
        %v4071 = vpack.c.bf16 %v4062, %v4061
        %v4072 = vpack.c.bf16 %v4064, %v4063
        %s4073 = scalar_lea.vmem %s3, 264
        %v4074 = vld [vmem:[%s4073] sm:$0xff]
        %v4075 = vld [vmem:[%s4073 + $0x8] sm:$0xff]
        %v4076 = vld [vmem:[%s4073 + $0x10] sm:$0xff]
        %v4077 = vld [vmem:[%s4073 + $0x18] sm:$0xff]
        %v4078 = vld [vmem:[%s4073 + $0x20] sm:$0xff]
        %v4079 = vld [vmem:[%s4073 + $0x28] sm:$0xff]
        %v4080 = vld [vmem:[%s4073 + $0x30] sm:$0xff]
        %v4081 = vld [vmem:[%s4073 + $0x38] sm:$0xff]
        %v4082 = vld [vmem:[%s4073 + $0x40] sm:$0xff]
        %v4083 = vld [vmem:[%s4073 + $0x48] sm:$0xff]
        %v4084 = vld [vmem:[%s4073 + $0x50] sm:$0x33]
        %v4096 = vunpack.c.l.b16 %v4074
        %v4097 = vunpack.c.h.b16 %v4074
        %v4098 = vunpack.c.l.b16 %v4075
        %v4099 = vunpack.c.h.b16 %v4075
        %v4100 = vunpack.c.l.b16 %v4076
        %v4101 = vunpack.c.h.b16 %v4076
        %v4102 = vunpack.c.l.b16 %v4077
        %v4103 = vunpack.c.h.b16 %v4077
        %v4104 = vunpack.c.l.b16 %v4078
        %v4105 = vunpack.c.h.b16 %v4078
        %v4106 = vunpack.c.l.b16 %v4079
        %v4107 = vunpack.c.h.b16 %v4079
        %v4108 = vunpack.c.l.b16 %v4080
        %v4109 = vunpack.c.h.b16 %v4080
        %v4110 = vunpack.c.l.b16 %v4081
        %v4111 = vunpack.c.h.b16 %v4081
        %v4112 = vunpack.c.l.b16 %v4082
        %v4113 = vunpack.c.h.b16 %v4082
        %v4114 = vunpack.c.l.b16 %v4083
        %v4115 = vunpack.c.h.b16 %v4083
        %v4116 = vunpack.c.l.b16 %v4084
        %v4117 = vunpack.c.h.b16 %v4084
        %v4118 = vpack.c.b16 %v4098, %v4096
        %v4119 = vpack.c.b16 %v4099, %v4097
        %v4120 = vpack.c.b16 %v4102, %v4100
        %v4121 = vpack.c.b16 %v4103, %v4101
        %v4122 = vpack.c.b16 %v4106, %v4104
        %v4123 = vpack.c.b16 %v4107, %v4105
        %v4124 = vpack.c.b16 %v4110, %v4108
        %v4125 = vpack.c.b16 %v4111, %v4109
        %v4126 = vpack.c.b16 %v4114, %v4112
        %v4127 = vpack.c.b16 %v4115, %v4113
        %v4128 = vpack.c.b16 %v4116, %v4116
        %v4129 = vpack.c.b16 %v4117, %v4117
        %v4141 = vsel %vm530, %v4065, 0
        %v4144 = vsel %vm530, %v4066, 0
        %v4147 = vsel %vm530, %v4067, 0
        %v4150 = vsel %vm530, %v4068, 0
        %v4153 = vsel %vm530, %v4069, 0
        %v4156 = vsel %vm530, %v4070, 0
        %v4159 = vsel %vm530, %v4071, 0
        %v4162 = vsel %vm530, %v4072, 0
        %v4165 = vsel %vm3382, %v4128, 0
        %v4168 = vsel %vm3382, %v4129, 0
        %4170 = vmatpush.bf16.msra.mxu0 0
        %4171 = vmatpush.bf16.msra.mxu0 0
        %4172 = vmatpush.bf16.msra.mxu0 %v4165
        %4173 = vmatpush.bf16.msra.mxu0 %v4126
        %4174 = vmatpush.bf16.msra.mxu0 %v4124
        %4175 = vmatpush.bf16.msra.mxu0 %v4122
        %4176 = vmatpush.bf16.msra.mxu0 %v4120
        %4177 = vmatpush.bf16.msra.mxu0 %v4118
        %4178 = vmatmul.bf16.gmra.mxu0 %v4141
        %v4179 = vpop.f32.mrf.mxu0
        %v4180 = vadd.f32 0.0, %v4179
        %v4181 = vpop.f32.mrf.mxu0
        %v4182 = vadd.f32 0.0, %v4181
        %4183 = vmatmul.bf16.gmra.mxu0 %v4144
        %v4184 = vpop.f32.mrf.mxu0
        %v4185 = vadd.f32 0.0, %v4184
        %v4186 = vpop.f32.mrf.mxu0
        %v4187 = vadd.f32 0.0, %v4186
        %4188 = vmatmul.bf16.gmra.mxu0 %v4147
        %v4189 = vpop.f32.mrf.mxu0
        %v4190 = vadd.f32 0.0, %v4189
        %v4191 = vpop.f32.mrf.mxu0
        %v4192 = vadd.f32 0.0, %v4191
        %4193 = vmatmul.bf16.gmra.mxu0 %v4150
        %v4194 = vpop.f32.mrf.mxu0
        %v4195 = vadd.f32 0.0, %v4194
        %v4196 = vpop.f32.mrf.mxu0
        %v4197 = vadd.f32 0.0, %v4196
        %4198 = vmatmul.bf16.gmra.mxu0 %v4153
        %v4199 = vpop.f32.mrf.mxu0
        %v4200 = vadd.f32 0.0, %v4199
        %v4201 = vpop.f32.mrf.mxu0
        %v4202 = vadd.f32 0.0, %v4201
        %4203 = vmatmul.bf16.gmra.mxu0 %v4156
        %v4204 = vpop.f32.mrf.mxu0
        %v4205 = vadd.f32 0.0, %v4204
        %v4206 = vpop.f32.mrf.mxu0
        %v4207 = vadd.f32 0.0, %v4206
        %4208 = vmatmul.bf16.gmra.mxu0 %v4159
        %v4209 = vpop.f32.mrf.mxu0
        %v4210 = vadd.f32 0.0, %v4209
        %v4211 = vpop.f32.mrf.mxu0
        %v4212 = vadd.f32 0.0, %v4211
        %4213 = vmatmul.bf16.gmra.mxu0 %v4162
        %v4214 = vpop.f32.mrf.mxu0
        %v4215 = vadd.f32 0.0, %v4214
        %v4216 = vpop.f32.mrf.mxu0
        %v4217 = vadd.f32 0.0, %v4216
        %4218 = vdwg.mxu0
        %4219 = vmatpush.bf16.msra.mxu0 0
        %4220 = vmatpush.bf16.msra.mxu0 0
        %4221 = vmatpush.bf16.msra.mxu0 %v4168
        %4222 = vmatpush.bf16.msra.mxu0 %v4127
        %4223 = vmatpush.bf16.msra.mxu0 %v4125
        %4224 = vmatpush.bf16.msra.mxu0 %v4123
        %4225 = vmatpush.bf16.msra.mxu0 %v4121
        %4226 = vmatpush.bf16.msra.mxu0 %v4119
        %4227 = vmatmul.bf16.gmra.mxu0 %v4141
        %v4228 = vpop.f32.mrf.mxu0
        %v4229 = vadd.f32 0.0, %v4228
        %v4230 = vpop.f32.mrf.mxu0
        %v4231 = vadd.f32 0.0, %v4230
        %4232 = vmatmul.bf16.gmra.mxu0 %v4144
        %v4233 = vpop.f32.mrf.mxu0
        %v4234 = vadd.f32 0.0, %v4233
        %v4235 = vpop.f32.mrf.mxu0
        %v4236 = vadd.f32 0.0, %v4235
        %4237 = vmatmul.bf16.gmra.mxu0 %v4147
        %v4238 = vpop.f32.mrf.mxu0
        %v4239 = vadd.f32 0.0, %v4238
        %v4240 = vpop.f32.mrf.mxu0
        %v4241 = vadd.f32 0.0, %v4240
        %4242 = vmatmul.bf16.gmra.mxu0 %v4150
        %v4243 = vpop.f32.mrf.mxu0
        %v4244 = vadd.f32 0.0, %v4243
        %v4245 = vpop.f32.mrf.mxu0
        %v4246 = vadd.f32 0.0, %v4245
        %4247 = vmatmul.bf16.gmra.mxu0 %v4153
        %v4248 = vpop.f32.mrf.mxu0
        %v4249 = vadd.f32 0.0, %v4248
        %v4250 = vpop.f32.mrf.mxu0
        %v4251 = vadd.f32 0.0, %v4250
        %4252 = vmatmul.bf16.gmra.mxu0 %v4156
        %v4253 = vpop.f32.mrf.mxu0
        %v4254 = vadd.f32 0.0, %v4253
        %v4255 = vpop.f32.mrf.mxu0
        %v4256 = vadd.f32 0.0, %v4255
        %4257 = vmatmul.bf16.gmra.mxu0 %v4159
        %v4258 = vpop.f32.mrf.mxu0
        %v4259 = vadd.f32 0.0, %v4258
        %v4260 = vpop.f32.mrf.mxu0
        %v4261 = vadd.f32 0.0, %v4260
        %4262 = vmatmul.bf16.gmra.mxu0 %v4162
        %v4263 = vpop.f32.mrf.mxu0
        %v4264 = vadd.f32 0.0, %v4263
        %v4265 = vpop.f32.mrf.mxu0
        %v4266 = vadd.f32 0.0, %v4265
        %4267 = vdwg.mxu0
        %v4268 = vadd.f32 %v3953, %v4180
        %v4269 = vadd.f32 %v3954, %v4229
        %v4270 = vadd.f32 %v3955, %v4182
        %v4271 = vadd.f32 %v3956, %v4231
        %v4272 = vadd.f32 %v3957, %v4185
        %v4273 = vadd.f32 %v3958, %v4234
        %v4274 = vadd.f32 %v3959, %v4187
        %v4275 = vadd.f32 %v3960, %v4236
        %v4276 = vadd.f32 %v3961, %v4190
        %v4277 = vadd.f32 %v3962, %v4239
        %v4278 = vadd.f32 %v3963, %v4192
        %v4279 = vadd.f32 %v3964, %v4241
        %v4280 = vadd.f32 %v3965, %v4195
        %v4281 = vadd.f32 %v3966, %v4244
        %v4282 = vadd.f32 %v3967, %v4197
        %v4283 = vadd.f32 %v3968, %v4246
        %v4284 = vadd.f32 %v3969, %v4200
        %v4285 = vadd.f32 %v3970, %v4249
        %v4286 = vadd.f32 %v3971, %v4202
        %v4287 = vadd.f32 %v3972, %v4251
        %v4288 = vadd.f32 %v3973, %v4205
        %v4289 = vadd.f32 %v3974, %v4254
        %v4290 = vadd.f32 %v3975, %v4207
        %v4291 = vadd.f32 %v3976, %v4256
        %v4292 = vadd.f32 %v3977, %v4210
        %v4293 = vadd.f32 %v3978, %v4259
        %v4294 = vadd.f32 %v3979, %v4212
        %v4295 = vadd.f32 %v3980, %v4261
        %v4296 = vadd.f32 %v3981, %v4215
        %v4297 = vadd.f32 %v3982, %v4264
        %v4298 = vadd.f32 %v3983, %v4217
        %v4299 = vadd.f32 %v3984, %v4266
        %s4300 = scalar_lea.vmem [#allocation3], 8
        %v4301 = vld [vmem:[%s4300] ss:$2 sm:$0xff]
        %s4302 = scalar_lea.vmem [#allocation3], 24
        %v4303 = vld [vmem:[%s4302] ss:$2 sm:$0xff]
        %s4304 = scalar_lea.vmem [#allocation3], 40
        %v4305 = vld [vmem:[%s4304] ss:$2 sm:$0xff]
        %s4306 = scalar_lea.vmem [#allocation3], 56
        %v4307 = vld [vmem:[%s4306] ss:$2 sm:$0xff]
        %s4308 = scalar_lea.vmem [#allocation3], 72
        %v4309 = vld [vmem:[%s4308] ss:$2 sm:$0xff]
        %s4310 = scalar_lea.vmem [#allocation3], 88
        %v4311 = vld [vmem:[%s4310] ss:$2 sm:$0xff]
        %s4312 = scalar_lea.vmem [#allocation3], 104
        %v4313 = vld [vmem:[%s4312] ss:$2 sm:$0xff]
        %s4314 = scalar_lea.vmem [#allocation3], 120
        %v4315 = vld [vmem:[%s4314] ss:$2 sm:$0xff]
        %s4316 = scalar_lea.vmem [#allocation3], 136
        %v4317 = vld [vmem:[%s4316] ss:$2 sm:$0xff]
        %s4318 = scalar_lea.vmem [#allocation3], 152
        %v4319 = vld [vmem:[%s4318] ss:$2 sm:$0xff]
        %s4320 = scalar_lea.vmem [#allocation3], 168
        %v4321 = vld [vmem:[%s4320] ss:$2 sm:$0xff]
        %s4322 = scalar_lea.vmem [#allocation3], 184
        %v4323 = vld [vmem:[%s4322] ss:$2 sm:$0xff]
        %s4324 = scalar_lea.vmem [#allocation3], 200
        %v4325 = vld [vmem:[%s4324] ss:$2 sm:$0xff]
        %s4326 = scalar_lea.vmem [#allocation3], 216
        %v4327 = vld [vmem:[%s4326] ss:$2 sm:$0xff]
        %s4328 = scalar_lea.vmem [#allocation3], 232
        %v4329 = vld [vmem:[%s4328] ss:$2 sm:$0xff]
        %s4330 = scalar_lea.vmem [#allocation3], 248
        %v4331 = vld [vmem:[%s4330] ss:$2 sm:$0xff]
        %s4332 = scalar_lea.vmem [#allocation3], 9
        %v4333 = vld [vmem:[%s4332] ss:$2 sm:$0xff]
        %s4334 = scalar_lea.vmem [#allocation3], 25
        %v4335 = vld [vmem:[%s4334] ss:$2 sm:$0xff]
        %s4336 = scalar_lea.vmem [#allocation3], 41
        %v4337 = vld [vmem:[%s4336] ss:$2 sm:$0xff]
        %s4338 = scalar_lea.vmem [#allocation3], 57
        %v4339 = vld [vmem:[%s4338] ss:$2 sm:$0xff]
        %s4340 = scalar_lea.vmem [#allocation3], 73
        %v4341 = vld [vmem:[%s4340] ss:$2 sm:$0xff]
        %s4342 = scalar_lea.vmem [#allocation3], 89
        %v4343 = vld [vmem:[%s4342] ss:$2 sm:$0xff]
        %s4344 = scalar_lea.vmem [#allocation3], 105
        %v4345 = vld [vmem:[%s4344] ss:$2 sm:$0xff]
        %s4346 = scalar_lea.vmem [#allocation3], 121
        %v4347 = vld [vmem:[%s4346] ss:$2 sm:$0xff]
        %s4348 = scalar_lea.vmem [#allocation3], 137
        %v4349 = vld [vmem:[%s4348] ss:$2 sm:$0xff]
        %s4350 = scalar_lea.vmem [#allocation3], 153
        %v4351 = vld [vmem:[%s4350] ss:$2 sm:$0xff]
        %s4352 = scalar_lea.vmem [#allocation3], 169
        %v4353 = vld [vmem:[%s4352] ss:$2 sm:$0xff]
        %s4354 = scalar_lea.vmem [#allocation3], 185
        %v4355 = vld [vmem:[%s4354] ss:$2 sm:$0xff]
        %s4356 = scalar_lea.vmem [#allocation3], 201
        %v4357 = vld [vmem:[%s4356] ss:$2 sm:$0xff]
        %s4358 = scalar_lea.vmem [#allocation3], 217
        %v4359 = vld [vmem:[%s4358] ss:$2 sm:$0xff]
        %s4360 = scalar_lea.vmem [#allocation3], 233
        %v4361 = vld [vmem:[%s4360] ss:$2 sm:$0xff]
        %s4362 = scalar_lea.vmem [#allocation3], 249
        %v4363 = vld [vmem:[%s4362] ss:$2 sm:$0xff]
        %v4364 = vmax.f32 %v4301, %v4333
        %v4365 = vmax.f32 %v4303, %v4335
        %v4366 = vmax.f32 %v4305, %v4337
        %v4367 = vmax.f32 %v4307, %v4339
        %v4368 = vmax.f32 %v4309, %v4341
        %v4369 = vmax.f32 %v4311, %v4343
        %v4370 = vmax.f32 %v4313, %v4345
        %v4371 = vmax.f32 %v4315, %v4347
        %v4372 = vmax.f32 %v4317, %v4349
        %v4373 = vmax.f32 %v4319, %v4351
        %v4374 = vmax.f32 %v4321, %v4353
        %v4375 = vmax.f32 %v4323, %v4355
        %v4376 = vmax.f32 %v4325, %v4357
        %v4377 = vmax.f32 %v4327, %v4359
        %v4378 = vmax.f32 %v4329, %v4361
        %v4379 = vmax.f32 %v4331, %v4363
        %v4380 = vpack.c.bf16 %v4365, %v4364
        %v4381 = vpack.c.bf16 %v4367, %v4366
        %v4382 = vpack.c.bf16 %v4369, %v4368
        %v4383 = vpack.c.bf16 %v4371, %v4370
        %v4384 = vpack.c.bf16 %v4373, %v4372
        %v4385 = vpack.c.bf16 %v4375, %v4374
        %v4386 = vpack.c.bf16 %v4377, %v4376
        %v4387 = vpack.c.bf16 %v4379, %v4378
        %s4388 = scalar_lea.vmem %s3, 352
        %v4389 = vld [vmem:[%s4388] sm:$0xff]
        %v4390 = vld [vmem:[%s4388 + $0x8] sm:$0xff]
        %v4391 = vld [vmem:[%s4388 + $0x10] sm:$0xff]
        %v4392 = vld [vmem:[%s4388 + $0x18] sm:$0xff]
        %v4393 = vld [vmem:[%s4388 + $0x20] sm:$0xff]
        %v4394 = vld [vmem:[%s4388 + $0x28] sm:$0xff]
        %v4395 = vld [vmem:[%s4388 + $0x30] sm:$0xff]
        %v4396 = vld [vmem:[%s4388 + $0x38] sm:$0xff]
        %v4397 = vld [vmem:[%s4388 + $0x40] sm:$0xff]
        %v4398 = vld [vmem:[%s4388 + $0x48] sm:$0xff]
        %v4399 = vld [vmem:[%s4388 + $0x50] sm:$0x33]
        %v4411 = vunpack.c.l.b16 %v4389
        %v4412 = vunpack.c.h.b16 %v4389
        %v4413 = vunpack.c.l.b16 %v4390
        %v4414 = vunpack.c.h.b16 %v4390
        %v4415 = vunpack.c.l.b16 %v4391
        %v4416 = vunpack.c.h.b16 %v4391
        %v4417 = vunpack.c.l.b16 %v4392
        %v4418 = vunpack.c.h.b16 %v4392
        %v4419 = vunpack.c.l.b16 %v4393
        %v4420 = vunpack.c.h.b16 %v4393
        %v4421 = vunpack.c.l.b16 %v4394
        %v4422 = vunpack.c.h.b16 %v4394
        %v4423 = vunpack.c.l.b16 %v4395
        %v4424 = vunpack.c.h.b16 %v4395
        %v4425 = vunpack.c.l.b16 %v4396
        %v4426 = vunpack.c.h.b16 %v4396
        %v4427 = vunpack.c.l.b16 %v4397
        %v4428 = vunpack.c.h.b16 %v4397
        %v4429 = vunpack.c.l.b16 %v4398
        %v4430 = vunpack.c.h.b16 %v4398
        %v4431 = vunpack.c.l.b16 %v4399
        %v4432 = vunpack.c.h.b16 %v4399
        %v4433 = vpack.c.b16 %v4413, %v4411
        %v4434 = vpack.c.b16 %v4414, %v4412
        %v4435 = vpack.c.b16 %v4417, %v4415
        %v4436 = vpack.c.b16 %v4418, %v4416
        %v4437 = vpack.c.b16 %v4421, %v4419
        %v4438 = vpack.c.b16 %v4422, %v4420
        %v4439 = vpack.c.b16 %v4425, %v4423
        %v4440 = vpack.c.b16 %v4426, %v4424
        %v4441 = vpack.c.b16 %v4429, %v4427
        %v4442 = vpack.c.b16 %v4430, %v4428
        %v4443 = vpack.c.b16 %v4431, %v4431
        %v4444 = vpack.c.b16 %v4432, %v4432
        %v4456 = vsel %vm530, %v4380, 0
        %v4459 = vsel %vm530, %v4381, 0
        %v4462 = vsel %vm530, %v4382, 0
        %v4465 = vsel %vm530, %v4383, 0
        %v4468 = vsel %vm530, %v4384, 0
        %v4471 = vsel %vm530, %v4385, 0
        %v4474 = vsel %vm530, %v4386, 0
        %v4477 = vsel %vm530, %v4387, 0
        %v4480 = vsel %vm3382, %v4443, 0
        %v4483 = vsel %vm3382, %v4444, 0
        %4485 = vmatpush.bf16.msra.mxu0 0
        %4486 = vmatpush.bf16.msra.mxu0 0
        %4487 = vmatpush.bf16.msra.mxu0 %v4480
        %4488 = vmatpush.bf16.msra.mxu0 %v4441
        %4489 = vmatpush.bf16.msra.mxu0 %v4439
        %4490 = vmatpush.bf16.msra.mxu0 %v4437
        %4491 = vmatpush.bf16.msra.mxu0 %v4435
        %4492 = vmatpush.bf16.msra.mxu0 %v4433
        %4493 = vmatmul.bf16.gmra.mxu0 %v4456
        %v4494 = vpop.f32.mrf.mxu0
        %v4495 = vadd.f32 0.0, %v4494
        %v4496 = vpop.f32.mrf.mxu0
        %v4497 = vadd.f32 0.0, %v4496
        %4498 = vmatmul.bf16.gmra.mxu0 %v4459
        %v4499 = vpop.f32.mrf.mxu0
        %v4500 = vadd.f32 0.0, %v4499
        %v4501 = vpop.f32.mrf.mxu0
        %v4502 = vadd.f32 0.0, %v4501
        %4503 = vmatmul.bf16.gmra.mxu0 %v4462
        %v4504 = vpop.f32.mrf.mxu0
        %v4505 = vadd.f32 0.0, %v4504
        %v4506 = vpop.f32.mrf.mxu0
        %v4507 = vadd.f32 0.0, %v4506
        %4508 = vmatmul.bf16.gmra.mxu0 %v4465
        %v4509 = vpop.f32.mrf.mxu0
        %v4510 = vadd.f32 0.0, %v4509
        %v4511 = vpop.f32.mrf.mxu0
        %v4512 = vadd.f32 0.0, %v4511
        %4513 = vmatmul.bf16.gmra.mxu0 %v4468
        %v4514 = vpop.f32.mrf.mxu0
        %v4515 = vadd.f32 0.0, %v4514
        %v4516 = vpop.f32.mrf.mxu0
        %v4517 = vadd.f32 0.0, %v4516
        %4518 = vmatmul.bf16.gmra.mxu0 %v4471
        %v4519 = vpop.f32.mrf.mxu0
        %v4520 = vadd.f32 0.0, %v4519
        %v4521 = vpop.f32.mrf.mxu0
        %v4522 = vadd.f32 0.0, %v4521
        %4523 = vmatmul.bf16.gmra.mxu0 %v4474
        %v4524 = vpop.f32.mrf.mxu0
        %v4525 = vadd.f32 0.0, %v4524
        %v4526 = vpop.f32.mrf.mxu0
        %v4527 = vadd.f32 0.0, %v4526
        %4528 = vmatmul.bf16.gmra.mxu0 %v4477
        %v4529 = vpop.f32.mrf.mxu0
        %v4530 = vadd.f32 0.0, %v4529
        %v4531 = vpop.f32.mrf.mxu0
        %v4532 = vadd.f32 0.0, %v4531
        %4533 = vdwg.mxu0
        %4534 = vmatpush.bf16.msra.mxu0 0
        %4535 = vmatpush.bf16.msra.mxu0 0
        %4536 = vmatpush.bf16.msra.mxu0 %v4483
        %4537 = vmatpush.bf16.msra.mxu0 %v4442
        %4538 = vmatpush.bf16.msra.mxu0 %v4440
        %4539 = vmatpush.bf16.msra.mxu0 %v4438
        %4540 = vmatpush.bf16.msra.mxu0 %v4436
        %4541 = vmatpush.bf16.msra.mxu0 %v4434
        %4542 = vmatmul.bf16.gmra.mxu0 %v4456
        %v4543 = vpop.f32.mrf.mxu0
        %v4544 = vadd.f32 0.0, %v4543
        %v4545 = vpop.f32.mrf.mxu0
        %v4546 = vadd.f32 0.0, %v4545
        %4547 = vmatmul.bf16.gmra.mxu0 %v4459
        %v4548 = vpop.f32.mrf.mxu0
        %v4549 = vadd.f32 0.0, %v4548
        %v4550 = vpop.f32.mrf.mxu0
        %v4551 = vadd.f32 0.0, %v4550
        %4552 = vmatmul.bf16.gmra.mxu0 %v4462
        %v4553 = vpop.f32.mrf.mxu0
        %v4554 = vadd.f32 0.0, %v4553
        %v4555 = vpop.f32.mrf.mxu0
        %v4556 = vadd.f32 0.0, %v4555
        %4557 = vmatmul.bf16.gmra.mxu0 %v4465
        %v4558 = vpop.f32.mrf.mxu0
        %v4559 = vadd.f32 0.0, %v4558
        %v4560 = vpop.f32.mrf.mxu0
        %v4561 = vadd.f32 0.0, %v4560
        %4562 = vmatmul.bf16.gmra.mxu0 %v4468
        %v4563 = vpop.f32.mrf.mxu0
        %v4564 = vadd.f32 0.0, %v4563
        %v4565 = vpop.f32.mrf.mxu0
        %v4566 = vadd.f32 0.0, %v4565
        %4567 = vmatmul.bf16.gmra.mxu0 %v4471
        %v4568 = vpop.f32.mrf.mxu0
        %v4569 = vadd.f32 0.0, %v4568
        %v4570 = vpop.f32.mrf.mxu0
        %v4571 = vadd.f32 0.0, %v4570
        %4572 = vmatmul.bf16.gmra.mxu0 %v4474
        %v4573 = vpop.f32.mrf.mxu0
        %v4574 = vadd.f32 0.0, %v4573
        %v4575 = vpop.f32.mrf.mxu0
        %v4576 = vadd.f32 0.0, %v4575
        %4577 = vmatmul.bf16.gmra.mxu0 %v4477
        %v4578 = vpop.f32.mrf.mxu0
        %v4579 = vadd.f32 0.0, %v4578
        %v4580 = vpop.f32.mrf.mxu0
        %v4581 = vadd.f32 0.0, %v4580
        %4582 = vdwg.mxu0
        %v4583 = vadd.f32 %v4268, %v4495
        %v4584 = vadd.f32 %v4269, %v4544
        %v4585 = vadd.f32 %v4270, %v4497
        %v4586 = vadd.f32 %v4271, %v4546
        %v4587 = vadd.f32 %v4272, %v4500
        %v4588 = vadd.f32 %v4273, %v4549
        %v4589 = vadd.f32 %v4274, %v4502
        %v4590 = vadd.f32 %v4275, %v4551
        %v4591 = vadd.f32 %v4276, %v4505
        %v4592 = vadd.f32 %v4277, %v4554
        %v4593 = vadd.f32 %v4278, %v4507
        %v4594 = vadd.f32 %v4279, %v4556
        %v4595 = vadd.f32 %v4280, %v4510
        %v4596 = vadd.f32 %v4281, %v4559
        %v4597 = vadd.f32 %v4282, %v4512
        %v4598 = vadd.f32 %v4283, %v4561
        %v4599 = vadd.f32 %v4284, %v4515
        %v4600 = vadd.f32 %v4285, %v4564
        %v4601 = vadd.f32 %v4286, %v4517
        %v4602 = vadd.f32 %v4287, %v4566
        %v4603 = vadd.f32 %v4288, %v4520
        %v4604 = vadd.f32 %v4289, %v4569
        %v4605 = vadd.f32 %v4290, %v4522
        %v4606 = vadd.f32 %v4291, %v4571
        %v4607 = vadd.f32 %v4292, %v4525
        %v4608 = vadd.f32 %v4293, %v4574
        %v4609 = vadd.f32 %v4294, %v4527
        %v4610 = vadd.f32 %v4295, %v4576
        %v4611 = vadd.f32 %v4296, %v4530
        %v4612 = vadd.f32 %v4297, %v4579
        %v4613 = vadd.f32 %v4298, %v4532
        %v4614 = vadd.f32 %v4299, %v4581
        %v4615 = vld [vmem:[%s4] sm:$0x3]
        %v4617 = vperm.slane %v4615, 0
        %v4618 = vperm.slane %v4615, 1
        %v4621 = vadd.f32 %v4583, %v4617
        %v4622 = vadd.f32 %v4584, %v4618
        %v4623 = vadd.f32 %v4585, %v4617
        %v4624 = vadd.f32 %v4586, %v4618
        %v4625 = vadd.f32 %v4587, %v4617
        %v4626 = vadd.f32 %v4588, %v4618
        %v4627 = vadd.f32 %v4589, %v4617
        %v4628 = vadd.f32 %v4590, %v4618
        %v4629 = vadd.f32 %v4591, %v4617
        %v4630 = vadd.f32 %v4592, %v4618
        %v4631 = vadd.f32 %v4593, %v4617
        %v4632 = vadd.f32 %v4594, %v4618
        %v4633 = vadd.f32 %v4595, %v4617
        %v4634 = vadd.f32 %v4596, %v4618
        %v4635 = vadd.f32 %v4597, %v4617
        %v4636 = vadd.f32 %v4598, %v4618
        %v4637 = vadd.f32 %v4599, %v4617
        %v4638 = vadd.f32 %v4600, %v4618
        %v4639 = vadd.f32 %v4601, %v4617
        %v4640 = vadd.f32 %v4602, %v4618
        %v4641 = vadd.f32 %v4603, %v4617
        %v4642 = vadd.f32 %v4604, %v4618
        %v4643 = vadd.f32 %v4605, %v4617
        %v4644 = vadd.f32 %v4606, %v4618
        %v4645 = vadd.f32 %v4607, %v4617
        %v4646 = vadd.f32 %v4608, %v4618
        %v4647 = vadd.f32 %v4609, %v4617
        %v4648 = vadd.f32 %v4610, %v4618
        %v4649 = vadd.f32 %v4611, %v4617
        %v4650 = vadd.f32 %v4612, %v4618
        %v4651 = vadd.f32 %v4613, %v4617
        %v4652 = vadd.f32 %v4614, %v4618
        %v4653 = vmax.f32 %v4621, 0.0
        %v4654 = vmax.f32 %v4622, 0.0
        %v4655 = vmax.f32 %v4623, 0.0
        %v4656 = vmax.f32 %v4624, 0.0
        %v4657 = vmax.f32 %v4625, 0.0
        %v4658 = vmax.f32 %v4626, 0.0
        %v4659 = vmax.f32 %v4627, 0.0
        %v4660 = vmax.f32 %v4628, 0.0
        %v4661 = vmax.f32 %v4629, 0.0
        %v4662 = vmax.f32 %v4630, 0.0
        %v4663 = vmax.f32 %v4631, 0.0
        %v4664 = vmax.f32 %v4632, 0.0
        %v4665 = vmax.f32 %v4633, 0.0
        %v4666 = vmax.f32 %v4634, 0.0
        %v4667 = vmax.f32 %v4635, 0.0
        %v4668 = vmax.f32 %v4636, 0.0
        %v4669 = vmax.f32 %v4637, 0.0
        %v4670 = vmax.f32 %v4638, 0.0
        %v4671 = vmax.f32 %v4639, 0.0
        %v4672 = vmax.f32 %v4640, 0.0
        %v4673 = vmax.f32 %v4641, 0.0
        %v4674 = vmax.f32 %v4642, 0.0
        %v4675 = vmax.f32 %v4643, 0.0
        %v4676 = vmax.f32 %v4644, 0.0
        %v4677 = vmax.f32 %v4645, 0.0
        %v4678 = vmax.f32 %v4646, 0.0
        %v4679 = vmax.f32 %v4647, 0.0
        %v4680 = vmax.f32 %v4648, 0.0
        %v4681 = vmax.f32 %v4649, 0.0
        %v4682 = vmax.f32 %v4650, 0.0
        %v4683 = vmax.f32 %v4651, 0.0
        %v4684 = vmax.f32 %v4652, 0.0
        %4717 = vrot.lane.b32.xlu0 %v4653, 112
        %v4718 = vpop.permute.xlu0 %4717
        %4719 = vrot.lane.b32.xlu0 %v4654, 112
        %v4720 = vpop.permute.xlu0 %4719
        %4721 = vrot.lane.b32.xlu0 %v4655, 112
        %v4722 = vpop.permute.xlu0 %4721
        %4723 = vrot.lane.b32.xlu0 %v4656, 112
        %v4724 = vpop.permute.xlu0 %4723
        %4725 = vrot.lane.b32.xlu0 %v4657, 112
        %v4726 = vpop.permute.xlu0 %4725
        %4727 = vrot.lane.b32.xlu0 %v4658, 112
        %v4728 = vpop.permute.xlu0 %4727
        %4729 = vrot.lane.b32.xlu0 %v4659, 112
        %v4730 = vpop.permute.xlu0 %4729
        %4731 = vrot.lane.b32.xlu0 %v4660, 112
        %v4732 = vpop.permute.xlu0 %4731
        %4733 = vrot.lane.b32.xlu0 %v4661, 112
        %v4734 = vpop.permute.xlu0 %4733
        %4735 = vrot.lane.b32.xlu0 %v4662, 112
        %v4736 = vpop.permute.xlu0 %4735
        %4737 = vrot.lane.b32.xlu0 %v4663, 112
        %v4738 = vpop.permute.xlu0 %4737
        %4739 = vrot.lane.b32.xlu0 %v4664, 112
        %v4740 = vpop.permute.xlu0 %4739
        %4741 = vrot.lane.b32.xlu0 %v4665, 112
        %v4742 = vpop.permute.xlu0 %4741
        %4743 = vrot.lane.b32.xlu0 %v4666, 112
        %v4744 = vpop.permute.xlu0 %4743
        %4745 = vrot.lane.b32.xlu0 %v4667, 112
        %v4746 = vpop.permute.xlu0 %4745
        %4747 = vrot.lane.b32.xlu0 %v4668, 112
        %v4748 = vpop.permute.xlu0 %4747
        %4749 = vrot.lane.b32.xlu0 %v4669, 112
        %v4750 = vpop.permute.xlu0 %4749
        %4751 = vrot.lane.b32.xlu0 %v4670, 112
        %v4752 = vpop.permute.xlu0 %4751
        %4753 = vrot.lane.b32.xlu0 %v4671, 112
        %v4754 = vpop.permute.xlu0 %4753
        %4755 = vrot.lane.b32.xlu0 %v4672, 112
        %v4756 = vpop.permute.xlu0 %4755
        %4757 = vrot.lane.b32.xlu0 %v4673, 112
        %v4758 = vpop.permute.xlu0 %4757
        %4759 = vrot.lane.b32.xlu0 %v4674, 112
        %v4760 = vpop.permute.xlu0 %4759
        %4761 = vrot.lane.b32.xlu0 %v4675, 112
        %v4762 = vpop.permute.xlu0 %4761
        %4763 = vrot.lane.b32.xlu0 %v4676, 112
        %v4764 = vpop.permute.xlu0 %4763
        %4765 = vrot.lane.b32.xlu0 %v4677, 112
        %v4766 = vpop.permute.xlu0 %4765
        %4767 = vrot.lane.b32.xlu0 %v4678, 112
        %v4768 = vpop.permute.xlu0 %4767
        %4769 = vrot.lane.b32.xlu0 %v4679, 112
        %v4770 = vpop.permute.xlu0 %4769
        %4771 = vrot.lane.b32.xlu0 %v4680, 112
        %v4772 = vpop.permute.xlu0 %4771
        %4773 = vrot.lane.b32.xlu0 %v4681, 112
        %v4774 = vpop.permute.xlu0 %4773
        %4775 = vrot.lane.b32.xlu0 %v4682, 112
        %v4776 = vpop.permute.xlu0 %4775
        %4777 = vrot.lane.b32.xlu0 %v4683, 112
        %v4778 = vpop.permute.xlu0 %4777
        %4779 = vrot.lane.b32.xlu0 %v4684, 112
        %v4780 = vpop.permute.xlu0 %4779
        %vm4781 = vcmask 916480
        %v4782 = vsel %vm4781, %v4718, %v4720
        %v4783 = vsel %vm4781, %v4722, %v4724
        %v4784 = vsel %vm4781, %v4726, %v4728
        %v4785 = vsel %vm4781, %v4730, %v4732
        %v4786 = vsel %vm4781, %v4734, %v4736
        %v4787 = vsel %vm4781, %v4738, %v4740
        %v4788 = vsel %vm4781, %v4742, %v4744
        %v4789 = vsel %vm4781, %v4746, %v4748
        %v4790 = vsel %vm4781, %v4750, %v4752
        %v4791 = vsel %vm4781, %v4754, %v4756
        %v4792 = vsel %vm4781, %v4758, %v4760
        %v4793 = vsel %vm4781, %v4762, %v4764
        %v4794 = vsel %vm4781, %v4766, %v4768
        %v4795 = vsel %vm4781, %v4770, %v4772
        %v4796 = vsel %vm4781, %v4774, %v4776
        %v4797 = vsel %vm4781, %v4778, %v4780
        %v4830 = vmax.f32 %v4653, %v4782
        %v4831 = vmax.f32 %v4654, %v4720
        %v4832 = vmax.f32 %v4655, %v4783
        %v4833 = vmax.f32 %v4656, %v4724
        %v4834 = vmax.f32 %v4657, %v4784
        %v4835 = vmax.f32 %v4658, %v4728
        %v4836 = vmax.f32 %v4659, %v4785
        %v4837 = vmax.f32 %v4660, %v4732
        %v4838 = vmax.f32 %v4661, %v4786
        %v4839 = vmax.f32 %v4662, %v4736
        %v4840 = vmax.f32 %v4663, %v4787
        %v4841 = vmax.f32 %v4664, %v4740
        %v4842 = vmax.f32 %v4665, %v4788
        %v4843 = vmax.f32 %v4666, %v4744
        %v4844 = vmax.f32 %v4667, %v4789
        %v4845 = vmax.f32 %v4668, %v4748
        %v4846 = vmax.f32 %v4669, %v4790
        %v4847 = vmax.f32 %v4670, %v4752
        %v4848 = vmax.f32 %v4671, %v4791
        %v4849 = vmax.f32 %v4672, %v4756
        %v4850 = vmax.f32 %v4673, %v4792
        %v4851 = vmax.f32 %v4674, %v4760
        %v4852 = vmax.f32 %v4675, %v4793
        %v4853 = vmax.f32 %v4676, %v4764
        %v4854 = vmax.f32 %v4677, %v4794
        %v4855 = vmax.f32 %v4678, %v4768
        %v4856 = vmax.f32 %v4679, %v4795
        %v4857 = vmax.f32 %v4680, %v4772
        %v4858 = vmax.f32 %v4681, %v4796
        %v4859 = vmax.f32 %v4682, %v4776
        %v4860 = vmax.f32 %v4683, %v4797
        %v4861 = vmax.f32 %v4684, %v4780
        %v4862 = vpack.c.bf16 %v4832, %v4830
        %v4863 = vpack.c.bf16 %v4833, %v4831
        %v4864 = vpack.c.bf16 %v4836, %v4834
        %v4865 = vpack.c.bf16 %v4837, %v4835
        %v4866 = vpack.c.bf16 %v4840, %v4838
        %v4867 = vpack.c.bf16 %v4841, %v4839
        %v4868 = vpack.c.bf16 %v4844, %v4842
        %v4869 = vpack.c.bf16 %v4845, %v4843
        %v4870 = vpack.c.bf16 %v4848, %v4846
        %v4871 = vpack.c.bf16 %v4849, %v4847
        %v4872 = vpack.c.bf16 %v4852, %v4850
        %v4873 = vpack.c.bf16 %v4853, %v4851
        %v4874 = vpack.c.bf16 %v4856, %v4854
        %v4875 = vpack.c.bf16 %v4857, %v4855
        %v4876 = vpack.c.bf16 %v4860, %v4858
        %v4877 = vpack.c.bf16 %v4861, %v4859
        %v4878 = vld [vmem:[%s6] sm:$0xf]
        %v4879 = vld [vmem:[%s6 + $0x4] sm:$0xf]
        %v4880 = vld [vmem:[%s6 + $0x8] sm:$0xf]
        %v4881 = vld [vmem:[%s6 + $0xc] sm:$0xf]
        %v4882 = vld [vmem:[%s6 + $0x10] sm:$0xf]
        %v4883 = vld [vmem:[%s6 + $0x14] sm:$0xf]
        %v4884 = vld [vmem:[%s6 + $0x18] sm:$0xf]
        %v4885 = vld [vmem:[%s6 + $0x1c] sm:$0xf]
        %v4886 = vld [vmem:[%s6 + $0x20] sm:$0xf]
        %v4887 = vld [vmem:[%s6 + $0x24] sm:$0xf]
        %v4888 = vld [vmem:[%s6 + $0x28] sm:$0xf]
        %v4889 = vld [vmem:[%s6 + $0x2c] sm:$0xf]
        %v4890 = vld [vmem:[%s6 + $0x30] sm:$0xf]
        %v4891 = vld [vmem:[%s6 + $0x34] sm:$0xf]
        %v4892 = vld [vmem:[%s6 + $0x38] sm:$0xf]
        %v4893 = vld [vmem:[%s6 + $0x3c] sm:$0xf]
        %v4894 = vld [vmem:[%s6 + $0x40] sm:$0xf]
        %v4895 = vld [vmem:[%s6 + $0x44] sm:$0xf]
        %v4914 = vunpack.c.l.b16 %v4878
        %v4915 = vunpack.c.l.b16 %v4879
        %v4916 = vunpack.c.l.b16 %v4880
        %v4917 = vunpack.c.l.b16 %v4881
        %v4918 = vunpack.c.l.b16 %v4882
        %v4919 = vunpack.c.l.b16 %v4883
        %v4920 = vunpack.c.l.b16 %v4884
        %v4921 = vunpack.c.l.b16 %v4885
        %v4922 = vunpack.c.l.b16 %v4886
        %v4923 = vunpack.c.l.b16 %v4887
        %v4924 = vunpack.c.l.b16 %v4888
        %v4925 = vunpack.c.l.b16 %v4889
        %v4926 = vunpack.c.l.b16 %v4890
        %v4927 = vunpack.c.l.b16 %v4891
        %v4928 = vunpack.c.l.b16 %v4892
        %v4929 = vunpack.c.l.b16 %v4893
        %v4930 = vunpack.c.l.b16 %v4894
        %v4931 = vunpack.c.l.b16 %v4895
        %v4932 = vpack.c.b16 %v4915, %v4914
        %v4933 = vpack.c.b16 %v4917, %v4916
        %v4934 = vpack.c.b16 %v4919, %v4918
        %v4935 = vpack.c.b16 %v4921, %v4920
        %v4936 = vpack.c.b16 %v4923, %v4922
        %v4937 = vpack.c.b16 %v4925, %v4924
        %v4938 = vpack.c.b16 %v4927, %v4926
        %v4939 = vpack.c.b16 %v4929, %v4928
        %v4940 = vpack.c.b16 %v4931, %v4930
        %vm4950 = vcmask 130048
        %v4952 = vsel %vm4950, %v4863, 0
        %v4955 = vsel %vm4950, %v4865, 0
        %v4958 = vsel %vm4950, %v4867, 0
        %v4961 = vsel %vm4950, %v4869, 0
        %v4964 = vsel %vm4950, %v4871, 0
        %v4967 = vsel %vm4950, %v4873, 0
        %v4970 = vsel %vm4950, %v4875, 0
        %v4973 = vsel %vm4950, %v4877, 0
        %4975 = vmatpush.bf16.msra.mxu0 %v4939
        %4976 = vmatpush.bf16.msra.mxu0 %v4938
        %4977 = vmatpush.bf16.msra.mxu0 %v4937
        %4978 = vmatpush.bf16.msra.mxu0 %v4936
        %4979 = vmatpush.bf16.msra.mxu0 %v4935
        %4980 = vmatpush.bf16.msra.mxu0 %v4934
        %4981 = vmatpush.bf16.msra.mxu0 %v4933
        %4982 = vmatpush.bf16.msra.mxu0 %v4932
        %4983 = vmatmul.bf16.gmra.mxu0 %v4862
        %v4984 = vpop.f32.mrf.mxu0
        %v4985 = vadd.f32 0.0, %v4984
        %v4986 = vpop.f32.mrf.mxu0
        %v4987 = vadd.f32 0.0, %v4986
        %4988 = vmatmul.bf16.gmra.mxu0 %v4864
        %v4989 = vpop.f32.mrf.mxu0
        %v4990 = vadd.f32 0.0, %v4989
        %v4991 = vpop.f32.mrf.mxu0
        %v4992 = vadd.f32 0.0, %v4991
        %4993 = vmatmul.bf16.gmra.mxu0 %v4866
        %v4994 = vpop.f32.mrf.mxu0
        %v4995 = vadd.f32 0.0, %v4994
        %v4996 = vpop.f32.mrf.mxu0
        %v4997 = vadd.f32 0.0, %v4996
        %4998 = vmatmul.bf16.gmra.mxu0 %v4868
        %v4999 = vpop.f32.mrf.mxu0
        %v5000 = vadd.f32 0.0, %v4999
        %v5001 = vpop.f32.mrf.mxu0
        %v5002 = vadd.f32 0.0, %v5001
        %5003 = vmatmul.bf16.gmra.mxu0 %v4870
        %v5004 = vpop.f32.mrf.mxu0
        %v5005 = vadd.f32 0.0, %v5004
        %v5006 = vpop.f32.mrf.mxu0
        %v5007 = vadd.f32 0.0, %v5006
        %5008 = vmatmul.bf16.gmra.mxu0 %v4872
        %v5009 = vpop.f32.mrf.mxu0
        %v5010 = vadd.f32 0.0, %v5009
        %v5011 = vpop.f32.mrf.mxu0
        %v5012 = vadd.f32 0.0, %v5011
        %5013 = vmatmul.bf16.gmra.mxu0 %v4874
        %v5014 = vpop.f32.mrf.mxu0
        %v5015 = vadd.f32 0.0, %v5014
        %v5016 = vpop.f32.mrf.mxu0
        %v5017 = vadd.f32 0.0, %v5016
        %5018 = vmatmul.bf16.gmra.mxu0 %v4876
        %v5019 = vpop.f32.mrf.mxu0
        %v5020 = vadd.f32 0.0, %v5019
        %v5021 = vpop.f32.mrf.mxu0
        %v5022 = vadd.f32 0.0, %v5021
        %5023 = vdwg.mxu0
        %5024 = vmatpush.bf16.msra.mxu0 0
        %5025 = vmatpush.bf16.msra.mxu0 0
        %5026 = vmatpush.bf16.msra.mxu0 0
        %5027 = vmatpush.bf16.msra.mxu0 0
        %5028 = vmatpush.bf16.msra.mxu0 0
        %5029 = vmatpush.bf16.msra.mxu0 0
        %5030 = vmatpush.bf16.msra.mxu0 0
        %5031 = vmatpush.bf16.msra.mxu0 %v4940
        %5032 = vmatmul.bf16.gmra.mxu0 %v4952
        %v5033 = vpop.f32.mrf.mxu0
        %v5034 = vadd.f32 %v4985, %v5033
        %v5035 = vpop.f32.mrf.mxu0
        %v5036 = vadd.f32 %v4987, %v5035
        %5037 = vmatmul.bf16.gmra.mxu0 %v4955
        %v5038 = vpop.f32.mrf.mxu0
        %v5039 = vadd.f32 %v4990, %v5038
        %v5040 = vpop.f32.mrf.mxu0
        %v5041 = vadd.f32 %v4992, %v5040
        %5042 = vmatmul.bf16.gmra.mxu0 %v4958
        %v5043 = vpop.f32.mrf.mxu0
        %v5044 = vadd.f32 %v4995, %v5043
        %v5045 = vpop.f32.mrf.mxu0
        %v5046 = vadd.f32 %v4997, %v5045
        %5047 = vmatmul.bf16.gmra.mxu0 %v4961
        %v5048 = vpop.f32.mrf.mxu0
        %v5049 = vadd.f32 %v5000, %v5048
        %v5050 = vpop.f32.mrf.mxu0
        %v5051 = vadd.f32 %v5002, %v5050
        %5052 = vmatmul.bf16.gmra.mxu0 %v4964
        %v5053 = vpop.f32.mrf.mxu0
        %v5054 = vadd.f32 %v5005, %v5053
        %v5055 = vpop.f32.mrf.mxu0
        %v5056 = vadd.f32 %v5007, %v5055
        %5057 = vmatmul.bf16.gmra.mxu0 %v4967
        %v5058 = vpop.f32.mrf.mxu0
        %v5059 = vadd.f32 %v5010, %v5058
        %v5060 = vpop.f32.mrf.mxu0
        %v5061 = vadd.f32 %v5012, %v5060
        %5062 = vmatmul.bf16.gmra.mxu0 %v4970
        %v5063 = vpop.f32.mrf.mxu0
        %v5064 = vadd.f32 %v5015, %v5063
        %v5065 = vpop.f32.mrf.mxu0
        %v5066 = vadd.f32 %v5017, %v5065
        %5067 = vmatmul.bf16.gmra.mxu0 %v4973
        %v5068 = vpop.f32.mrf.mxu0
        %v5069 = vadd.f32 %v5020, %v5068
        %v5070 = vpop.f32.mrf.mxu0
        %v5071 = vadd.f32 %v5022, %v5070
        %5072 = vdwg.mxu0
        %vm5073 = vcmask 654336
        %5074 = vst.msk [vmem:[#allocation4] sm:$0xff] %vm5073, %v5034
        %5075 = vst.msk [vmem:[#allocation4 + $0x8] sm:$0xff] %vm5073, %v5036
        %5076 = vst.msk [vmem:[#allocation4 + $0x10] sm:$0xff] %vm5073, %v5039
        %5077 = vst.msk [vmem:[#allocation4 + $0x18] sm:$0xff] %vm5073, %v5041
        %5078 = vst.msk [vmem:[#allocation4 + $0x20] sm:$0xff] %vm5073, %v5044
        %5079 = vst.msk [vmem:[#allocation4 + $0x28] sm:$0xff] %vm5073, %v5046
        %5080 = vst.msk [vmem:[#allocation4 + $0x30] sm:$0xff] %vm5073, %v5049
        %5081 = vst.msk [vmem:[#allocation4 + $0x38] sm:$0xff] %vm5073, %v5051
        %5082 = vst.msk [vmem:[#allocation4 + $0x40] sm:$0xff] %vm5073, %v5054
        %5083 = vst.msk [vmem:[#allocation4 + $0x48] sm:$0xff] %vm5073, %v5056
        %5084 = vst.msk [vmem:[#allocation4 + $0x50] sm:$0xff] %vm5073, %v5059
        %5085 = vst.msk [vmem:[#allocation4 + $0x58] sm:$0xff] %vm5073, %v5061
        %5086 = vst.msk [vmem:[#allocation4 + $0x60] sm:$0xff] %vm5073, %v5064
        %5087 = vst.msk [vmem:[#allocation4 + $0x68] sm:$0xff] %vm5073, %v5066
        %5088 = vst.msk [vmem:[#allocation4 + $0x70] sm:$0xff] %vm5073, %v5069
        %5089 = vst.msk [vmem:[#allocation4 + $0x78] sm:$0xff] %vm5073, %v5071
        %v5090 = vld [vmem:[#allocation4] ss:$16 sm:$0x3]
        %v5091 = vld [vmem:[#allocation4] ss:$16 sm:$0xc]
        %v5092 = vor.u32 %v5090, %v5091
        %v5093 = vld [vmem:[#allocation4] ss:$16 sm:$0x30]
        %v5094 = vor.u32 %v5092, %v5093
        %v5095 = vld [vmem:[#allocation4] ss:$16 sm:$0xc0]
        %v5096 = vor.u32 %v5094, %v5095
        %s5097 = scalar_lea.vmem [#allocation4], 1
        %v5098 = vld [vmem:[%s5097] ss:$16 sm:$0x3]
        %v5099 = vld [vmem:[%s5097] ss:$16 sm:$0xc]
        %v5100 = vor.u32 %v5098, %v5099
        %v5101 = vld [vmem:[%s5097] ss:$16 sm:$0x30]
        %v5102 = vor.u32 %v5100, %v5101
        %v5103 = vld [vmem:[%s5097] ss:$16 sm:$0xc0]
        %v5104 = vor.u32 %v5102, %v5103
        %v5105 = vmax.f32 %v5096, %v5104
        %v5106 = vpack.c.bf16 %v5105, %v5105
        %v5107 = vld [vmem:[%s7] sm:$0xf]
        %v5108 = vld [vmem:[%s7 + $0x4] sm:$0xf]
        %v5109 = vld [vmem:[%s7 + $0x8] sm:$0xf]
        %v5110 = vld [vmem:[%s7 + $0xc] sm:$0xf]
        %v5111 = vld [vmem:[%s7 + $0x10] sm:$0xf]
        %v5112 = vld [vmem:[%s7 + $0x14] sm:$0xf]
        %v5113 = vld [vmem:[%s7 + $0x18] sm:$0xf]
        %v5114 = vld [vmem:[%s7 + $0x1c] sm:$0xf]
        %v5115 = vld [vmem:[%s7 + $0x20] sm:$0xf]
        %v5116 = vld [vmem:[%s7 + $0x24] sm:$0xf]
        %s5117 = scalar_lea.vmem [#allocation4], 2
        %v5118 = vld [vmem:[%s5117] ss:$16 sm:$0x3]
        %v5119 = vld [vmem:[%s5117] ss:$16 sm:$0xc]
        %v5120 = vor.u32 %v5118, %v5119
        %v5121 = vld [vmem:[%s5117] ss:$16 sm:$0x30]
        %v5122 = vor.u32 %v5120, %v5121
        %v5123 = vld [vmem:[%s5117] ss:$16 sm:$0xc0]
        %v5124 = vor.u32 %v5122, %v5123
        %s5125 = scalar_lea.vmem [#allocation4], 3
        %v5126 = vld [vmem:[%s5125] ss:$16 sm:$0x3]
        %v5127 = vld [vmem:[%s5125] ss:$16 sm:$0xc]
        %v5128 = vor.u32 %v5126, %v5127
        %v5129 = vld [vmem:[%s5125] ss:$16 sm:$0x30]
        %v5130 = vor.u32 %v5128, %v5129
        %v5131 = vld [vmem:[%s5125] ss:$16 sm:$0xc0]
        %v5132 = vor.u32 %v5130, %v5131
        %v5133 = vmax.f32 %v5124, %v5132
        %v5134 = vpack.c.bf16 %v5133, %v5133
        %s5135 = scalar_lea.vmem %s7, 40
        %v5136 = vld [vmem:[%s5135] sm:$0xf]
        %v5137 = vld [vmem:[%s5135 + $0x4] sm:$0xf]
        %v5138 = vld [vmem:[%s5135 + $0x8] sm:$0xf]
        %v5139 = vld [vmem:[%s5135 + $0xc] sm:$0xf]
        %v5140 = vld [vmem:[%s5135 + $0x10] sm:$0xf]
        %v5141 = vld [vmem:[%s5135 + $0x14] sm:$0xf]
        %v5142 = vld [vmem:[%s5135 + $0x18] sm:$0xf]
        %v5143 = vld [vmem:[%s5135 + $0x1c] sm:$0xf]
        %v5144 = vld [vmem:[%s5135 + $0x20] sm:$0xf]
        %v5145 = vld [vmem:[%s5135 + $0x24] sm:$0xf]
        %v5156 = vunpack.c.l.b16 %v5136
        %v5157 = vunpack.c.l.b16 %v5137
        %v5158 = vunpack.c.l.b16 %v5138
        %v5159 = vunpack.c.l.b16 %v5139
        %v5160 = vunpack.c.l.b16 %v5140
        %v5161 = vunpack.c.l.b16 %v5141
        %v5162 = vunpack.c.l.b16 %v5142
        %v5163 = vunpack.c.l.b16 %v5143
        %v5164 = vunpack.c.l.b16 %v5144
        %v5165 = vunpack.c.l.b16 %v5145
        %v5166 = vpack.c.b16 %v5157, %v5156
        %v5167 = vpack.c.b16 %v5159, %v5158
        %v5168 = vpack.c.b16 %v5161, %v5160
        %v5169 = vpack.c.b16 %v5163, %v5162
        %v5170 = vpack.c.b16 %v5165, %v5164
        %v5177 = vsel %vm5073, %v5134, 0
        %5179 = vmatpush.bf16.msra.mxu0 0
        %5180 = vmatpush.bf16.msra.mxu0 0
        %5181 = vmatpush.bf16.msra.mxu0 0
        %5182 = vmatpush.bf16.msra.mxu0 %v5170
        %5183 = vmatpush.bf16.msra.mxu0 %v5169
        %5184 = vmatpush.bf16.msra.mxu0 %v5168
        %5185 = vmatpush.bf16.msra.mxu0 %v5167
        %5186 = vmatpush.bf16.msra.mxu0 %v5166
        %5187 = vmatmul.bf16.gmra.mxu0 %v5177
        %v5188 = vpop.f32.mrf.mxu0
        %v5189 = vadd.f32 0.0, %v5188
        %v5190 = vpop.f32.mrf.mxu0
        %5191 = vdwg.mxu0
        %v5202 = vunpack.c.l.b16 %v5107
        %v5203 = vunpack.c.l.b16 %v5108
        %v5204 = vunpack.c.l.b16 %v5109
        %v5205 = vunpack.c.l.b16 %v5110
        %v5206 = vunpack.c.l.b16 %v5111
        %v5207 = vunpack.c.l.b16 %v5112
        %v5208 = vunpack.c.l.b16 %v5113
        %v5209 = vunpack.c.l.b16 %v5114
        %v5210 = vunpack.c.l.b16 %v5115
        %v5211 = vunpack.c.l.b16 %v5116
        %v5212 = vpack.c.b16 %v5203, %v5202
        %v5213 = vpack.c.b16 %v5205, %v5204
        %v5214 = vpack.c.b16 %v5207, %v5206
        %v5215 = vpack.c.b16 %v5209, %v5208
        %v5216 = vpack.c.b16 %v5211, %v5210
        %v5223 = vsel %vm5073, %v5106, 0
        %5225 = vmatpush.bf16.msra.mxu0 0
        %5226 = vmatpush.bf16.msra.mxu0 0
        %5227 = vmatpush.bf16.msra.mxu0 0
        %5228 = vmatpush.bf16.msra.mxu0 %v5216
        %5229 = vmatpush.bf16.msra.mxu0 %v5215
        %5230 = vmatpush.bf16.msra.mxu0 %v5214
        %5231 = vmatpush.bf16.msra.mxu0 %v5213
        %5232 = vmatpush.bf16.msra.mxu0 %v5212
        %5233 = vmatmul.bf16.gmra.mxu0 %v5223
        %v5234 = vpop.f32.mrf.mxu0
        %v5235 = vadd.f32 %v5189, %v5234
        %v5236 = vpop.f32.mrf.mxu0
        %5237 = vdwg.mxu0
        %s5238 = scalar_lea.vmem [#allocation4], 4
        %v5239 = vld [vmem:[%s5238] ss:$16 sm:$0x3]
        %v5240 = vld [vmem:[%s5238] ss:$16 sm:$0xc]
        %v5241 = vor.u32 %v5239, %v5240
        %v5242 = vld [vmem:[%s5238] ss:$16 sm:$0x30]
        %v5243 = vor.u32 %v5241, %v5242
        %v5244 = vld [vmem:[%s5238] ss:$16 sm:$0xc0]
        %v5245 = vor.u32 %v5243, %v5244
        %s5246 = scalar_lea.vmem [#allocation4], 5
        %v5247 = vld [vmem:[%s5246] ss:$16 sm:$0x3]
        %v5248 = vld [vmem:[%s5246] ss:$16 sm:$0xc]
        %v5249 = vor.u32 %v5247, %v5248
        %v5250 = vld [vmem:[%s5246] ss:$16 sm:$0x30]
        %v5251 = vor.u32 %v5249, %v5250
        %v5252 = vld [vmem:[%s5246] ss:$16 sm:$0xc0]
        %v5253 = vor.u32 %v5251, %v5252
        %v5254 = vmax.f32 %v5245, %v5253
        %v5255 = vpack.c.bf16 %v5254, %v5254
        %s5256 = scalar_lea.vmem %s7, 80
        %v5257 = vld [vmem:[%s5256] sm:$0xf]
        %v5258 = vld [vmem:[%s5256 + $0x4] sm:$0xf]
        %v5259 = vld [vmem:[%s5256 + $0x8] sm:$0xf]
        %v5260 = vld [vmem:[%s5256 + $0xc] sm:$0xf]
        %v5261 = vld [vmem:[%s5256 + $0x10] sm:$0xf]
        %v5262 = vld [vmem:[%s5256 + $0x14] sm:$0xf]
        %v5263 = vld [vmem:[%s5256 + $0x18] sm:$0xf]
        %v5264 = vld [vmem:[%s5256 + $0x1c] sm:$0xf]
        %v5265 = vld [vmem:[%s5256 + $0x20] sm:$0xf]
        %v5266 = vld [vmem:[%s5256 + $0x24] sm:$0xf]
        %v5277 = vunpack.c.l.b16 %v5257
        %v5278 = vunpack.c.l.b16 %v5258
        %v5279 = vunpack.c.l.b16 %v5259
        %v5280 = vunpack.c.l.b16 %v5260
        %v5281 = vunpack.c.l.b16 %v5261
        %v5282 = vunpack.c.l.b16 %v5262
        %v5283 = vunpack.c.l.b16 %v5263
        %v5284 = vunpack.c.l.b16 %v5264
        %v5285 = vunpack.c.l.b16 %v5265
        %v5286 = vunpack.c.l.b16 %v5266
        %v5287 = vpack.c.b16 %v5278, %v5277
        %v5288 = vpack.c.b16 %v5280, %v5279
        %v5289 = vpack.c.b16 %v5282, %v5281
        %v5290 = vpack.c.b16 %v5284, %v5283
        %v5291 = vpack.c.b16 %v5286, %v5285
        %v5298 = vsel %vm5073, %v5255, 0
        %5300 = vmatpush.bf16.msra.mxu0 0
        %5301 = vmatpush.bf16.msra.mxu0 0
        %5302 = vmatpush.bf16.msra.mxu0 0
        %5303 = vmatpush.bf16.msra.mxu0 %v5291
        %5304 = vmatpush.bf16.msra.mxu0 %v5290
        %5305 = vmatpush.bf16.msra.mxu0 %v5289
        %5306 = vmatpush.bf16.msra.mxu0 %v5288
        %5307 = vmatpush.bf16.msra.mxu0 %v5287
        %5308 = vmatmul.bf16.gmra.mxu0 %v5298
        %v5309 = vpop.f32.mrf.mxu0
        %v5310 = vadd.f32 0.0, %v5309
        %v5311 = vpop.f32.mrf.mxu0
        %5312 = vdwg.mxu0
        %v5313 = vadd.f32 %v5235, %v5310
        %s5314 = scalar_lea.vmem [#allocation4], 6
        %v5315 = vld [vmem:[%s5314] ss:$16 sm:$0x3]
        %v5316 = vld [vmem:[%s5314] ss:$16 sm:$0xc]
        %v5317 = vor.u32 %v5315, %v5316
        %v5318 = vld [vmem:[%s5314] ss:$16 sm:$0x30]
        %v5319 = vor.u32 %v5317, %v5318
        %v5320 = vld [vmem:[%s5314] ss:$16 sm:$0xc0]
        %v5321 = vor.u32 %v5319, %v5320
        %s5322 = scalar_lea.vmem [#allocation4], 7
        %v5323 = vld [vmem:[%s5322] ss:$16 sm:$0x3]
        %v5324 = vld [vmem:[%s5322] ss:$16 sm:$0xc]
        %v5325 = vor.u32 %v5323, %v5324
        %v5326 = vld [vmem:[%s5322] ss:$16 sm:$0x30]
        %v5327 = vor.u32 %v5325, %v5326
        %v5328 = vld [vmem:[%s5322] ss:$16 sm:$0xc0]
        %v5329 = vor.u32 %v5327, %v5328
        %v5330 = vmax.f32 %v5321, %v5329
        %v5331 = vpack.c.bf16 %v5330, %v5330
        %s5332 = scalar_lea.vmem %s7, 120
        %v5333 = vld [vmem:[%s5332] sm:$0xf]
        %v5334 = vld [vmem:[%s5332 + $0x4] sm:$0xf]
        %v5335 = vld [vmem:[%s5332 + $0x8] sm:$0xf]
        %v5336 = vld [vmem:[%s5332 + $0xc] sm:$0xf]
        %v5337 = vld [vmem:[%s5332 + $0x10] sm:$0xf]
        %v5338 = vld [vmem:[%s5332 + $0x14] sm:$0xf]
        %v5339 = vld [vmem:[%s5332 + $0x18] sm:$0xf]
        %v5340 = vld [vmem:[%s5332 + $0x1c] sm:$0xf]
        %v5341 = vld [vmem:[%s5332 + $0x20] sm:$0xf]
        %v5342 = vld [vmem:[%s5332 + $0x24] sm:$0xf]
        %v5353 = vunpack.c.l.b16 %v5333
        %v5354 = vunpack.c.l.b16 %v5334
        %v5355 = vunpack.c.l.b16 %v5335
        %v5356 = vunpack.c.l.b16 %v5336
        %v5357 = vunpack.c.l.b16 %v5337
        %v5358 = vunpack.c.l.b16 %v5338
        %v5359 = vunpack.c.l.b16 %v5339
        %v5360 = vunpack.c.l.b16 %v5340
        %v5361 = vunpack.c.l.b16 %v5341
        %v5362 = vunpack.c.l.b16 %v5342
        %v5363 = vpack.c.b16 %v5354, %v5353
        %v5364 = vpack.c.b16 %v5356, %v5355
        %v5365 = vpack.c.b16 %v5358, %v5357
        %v5366 = vpack.c.b16 %v5360, %v5359
        %v5367 = vpack.c.b16 %v5362, %v5361
        %v5374 = vsel %vm5073, %v5331, 0
        %5376 = vmatpush.bf16.msra.mxu0 0
        %5377 = vmatpush.bf16.msra.mxu0 0
        %5378 = vmatpush.bf16.msra.mxu0 0
        %5379 = vmatpush.bf16.msra.mxu0 %v5367
        %5380 = vmatpush.bf16.msra.mxu0 %v5366
        %5381 = vmatpush.bf16.msra.mxu0 %v5365
        %5382 = vmatpush.bf16.msra.mxu0 %v5364
        %5383 = vmatpush.bf16.msra.mxu0 %v5363
        %5384 = vmatmul.bf16.gmra.mxu0 %v5374
        %v5385 = vpop.f32.mrf.mxu0
        %v5386 = vadd.f32 0.0, %v5385
        %v5387 = vpop.f32.mrf.mxu0
        %5388 = vdwg.mxu0
        %v5389 = vadd.f32 %v5313, %v5386
        %s5390 = scalar_lea.vmem [#allocation4], 8
        %v5391 = vld [vmem:[%s5390] ss:$16 sm:$0x3]
        %v5392 = vld [vmem:[%s5390] ss:$16 sm:$0xc]
        %v5393 = vor.u32 %v5391, %v5392
        %v5394 = vld [vmem:[%s5390] ss:$16 sm:$0x30]
        %v5395 = vor.u32 %v5393, %v5394
        %v5396 = vld [vmem:[%s5390] ss:$16 sm:$0xc0]
        %v5397 = vor.u32 %v5395, %v5396
        %s5398 = scalar_lea.vmem [#allocation4], 9
        %v5399 = vld [vmem:[%s5398] ss:$16 sm:$0x3]
        %v5400 = vld [vmem:[%s5398] ss:$16 sm:$0xc]
        %v5401 = vor.u32 %v5399, %v5400
        %v5402 = vld [vmem:[%s5398] ss:$16 sm:$0x30]
        %v5403 = vor.u32 %v5401, %v5402
        %v5404 = vld [vmem:[%s5398] ss:$16 sm:$0xc0]
        %v5405 = vor.u32 %v5403, %v5404
        %v5406 = vmax.f32 %v5397, %v5405
        %v5407 = vpack.c.bf16 %v5406, %v5406
        %s5408 = scalar_lea.vmem %s7, 160
        %v5409 = vld [vmem:[%s5408] sm:$0xf]
        %v5410 = vld [vmem:[%s5408 + $0x4] sm:$0xf]
        %v5411 = vld [vmem:[%s5408 + $0x8] sm:$0xf]
        %v5412 = vld [vmem:[%s5408 + $0xc] sm:$0xf]
        %v5413 = vld [vmem:[%s5408 + $0x10] sm:$0xf]
        %v5414 = vld [vmem:[%s5408 + $0x14] sm:$0xf]
        %v5415 = vld [vmem:[%s5408 + $0x18] sm:$0xf]
        %v5416 = vld [vmem:[%s5408 + $0x1c] sm:$0xf]
        %v5417 = vld [vmem:[%s5408 + $0x20] sm:$0xf]
        %v5418 = vld [vmem:[%s5408 + $0x24] sm:$0xf]
        %v5429 = vunpack.c.l.b16 %v5409
        %v5430 = vunpack.c.l.b16 %v5410
        %v5431 = vunpack.c.l.b16 %v5411
        %v5432 = vunpack.c.l.b16 %v5412
        %v5433 = vunpack.c.l.b16 %v5413
        %v5434 = vunpack.c.l.b16 %v5414
        %v5435 = vunpack.c.l.b16 %v5415
        %v5436 = vunpack.c.l.b16 %v5416
        %v5437 = vunpack.c.l.b16 %v5417
        %v5438 = vunpack.c.l.b16 %v5418
        %v5439 = vpack.c.b16 %v5430, %v5429
        %v5440 = vpack.c.b16 %v5432, %v5431
        %v5441 = vpack.c.b16 %v5434, %v5433
        %v5442 = vpack.c.b16 %v5436, %v5435
        %v5443 = vpack.c.b16 %v5438, %v5437
        %v5450 = vsel %vm5073, %v5407, 0
        %5452 = vmatpush.bf16.msra.mxu0 0
        %5453 = vmatpush.bf16.msra.mxu0 0
        %5454 = vmatpush.bf16.msra.mxu0 0
        %5455 = vmatpush.bf16.msra.mxu0 %v5443
        %5456 = vmatpush.bf16.msra.mxu0 %v5442
        %5457 = vmatpush.bf16.msra.mxu0 %v5441
        %5458 = vmatpush.bf16.msra.mxu0 %v5440
        %5459 = vmatpush.bf16.msra.mxu0 %v5439
        %5460 = vmatmul.bf16.gmra.mxu0 %v5450
        %v5461 = vpop.f32.mrf.mxu0
        %v5462 = vadd.f32 0.0, %v5461
        %v5463 = vpop.f32.mrf.mxu0
        %5464 = vdwg.mxu0
        %v5465 = vadd.f32 %v5389, %v5462
        %v5466 = vld [vmem:[%s8] sm:$0x1]
        %v5468 = vperm.slane %v5466, 0
        %v5470 = vadd.f32 %v5465, %v5468
        %v5471 = vmax.f32 %v5470, 0.0
        %v5472 = vpack.c.bf16 %v5471, %v5471
        %v5473 = vld [vmem:[%s9] sm:$0xf]
        %v5474 = vld [vmem:[%s9 + $0x4] sm:$0xf]
        %v5475 = vld [vmem:[%s9 + $0x8] sm:$0xf]
        %v5476 = vld [vmem:[%s9 + $0xc] sm:$0xf]
        %v5477 = vld [vmem:[%s9 + $0x10] sm:$0xf]
        %v5478 = vld [vmem:[%s9 + $0x14] sm:$0xf]
        %v5479 = vld [vmem:[%s9 + $0x18] sm:$0xf]
        %v5480 = vld [vmem:[%s9 + $0x1c] sm:$0xf]
        %v5481 = vld [vmem:[%s9 + $0x20] sm:$0xf]
        %v5482 = vld [vmem:[%s9 + $0x24] sm:$0xf]
        %v5483 = vld [vmem:[%s9 + $0x28] sm:$0xf]
        %v5484 = vld [vmem:[%s9 + $0x2c] sm:$0xf]
        %v5485 = vld [vmem:[%s9 + $0x30] sm:$0xf]
        %v5486 = vld [vmem:[%s9 + $0x34] sm:$0xf]
        %v5487 = vld [vmem:[%s9 + $0x38] sm:$0xf]
        %v5488 = vld [vmem:[%s10] sm:$0x1]
        %v5490 = vperm.slane %v5488, 0
        %v5507 = vunpack.c.l.b16 %v5473
        %v5508 = vunpack.c.l.b16 %v5474
        %v5509 = vunpack.c.l.b16 %v5475
        %v5510 = vunpack.c.l.b16 %v5476
        %v5511 = vunpack.c.l.b16 %v5477
        %v5512 = vunpack.c.l.b16 %v5478
        %v5513 = vunpack.c.l.b16 %v5479
        %v5514 = vunpack.c.l.b16 %v5480
        %v5515 = vunpack.c.l.b16 %v5481
        %v5516 = vunpack.c.l.b16 %v5482
        %v5517 = vunpack.c.l.b16 %v5483
        %v5518 = vunpack.c.l.b16 %v5484
        %v5519 = vunpack.c.l.b16 %v5485
        %v5520 = vunpack.c.l.b16 %v5486
        %v5521 = vunpack.c.l.b16 %v5487
        %v5522 = vpack.c.b16 %v5508, %v5507
        %v5523 = vpack.c.b16 %v5510, %v5509
        %v5524 = vpack.c.b16 %v5512, %v5511
        %v5525 = vpack.c.b16 %v5514, %v5513
        %v5526 = vpack.c.b16 %v5516, %v5515
        %v5527 = vpack.c.b16 %v5518, %v5517
        %v5528 = vpack.c.b16 %v5520, %v5519
        %v5529 = vpack.c.b16 %v5521, %v5521
        %vm5537 = vcmask 982016
        %v5539 = vsel %vm5537, %v5472, 0
        %vm5541 = vcmask 1043456
        %v5543 = vsel %vm5541, %v5529, 0
        %5545 = vmatpush.bf16.msra.mxu0 %v5543
        %5546 = vmatpush.bf16.msra.mxu0 %v5528
        %5547 = vmatpush.bf16.msra.mxu0 %v5527
        %5548 = vmatpush.bf16.msra.mxu0 %v5526
        %5549 = vmatpush.bf16.msra.mxu0 %v5525
        %5550 = vmatpush.bf16.msra.mxu0 %v5524
        %5551 = vmatpush.bf16.msra.mxu0 %v5523
        %5552 = vmatpush.bf16.msra.mxu0 %v5522
        %5553 = vmatmul.bf16.gmra.mxu0 %v5539
        %v5554 = vpop.f32.mrf.mxu0
        %v5555 = vadd.f32 %v5490, %v5554
        %v5556 = vpop.f32.mrf.mxu0
        %5557 = vdwg.mxu0
        %v5558 = vmax.f32 %v5555, 0.0
        %v5559 = vpack.c.bf16 %v5558, %v5558
        %v5560 = vld [vmem:[%s11] sm:$0xf]
        %v5561 = vld [vmem:[%s11 + $0x4] sm:$0xf]
        %v5562 = vld [vmem:[%s11 + $0x8] sm:$0xf]
        %v5563 = vld [vmem:[%s11 + $0xc] sm:$0xf]
        %v5564 = vld [vmem:[%s11 + $0x10] sm:$0xf]
        %v5565 = vld [vmem:[%s11 + $0x14] sm:$0xf]
        %v5566 = vld [vmem:[%s11 + $0x18] sm:$0xf]
        %v5567 = vld [vmem:[%s11 + $0x1c] sm:$0xf]
        %v5568 = vld [vmem:[%s11 + $0x20] sm:$0xf]
        %v5569 = vld [vmem:[%s11 + $0x24] sm:$0xf]
        %v5570 = vld [vmem:[%s11 + $0x28] sm:$0x3]
        %v5571 = vld [vmem:[%s12] sm:$0x1]
        %v5573 = vperm.slane %v5571, 0
        %v5586 = vunpack.c.l.b16 %v5560
        %v5587 = vunpack.c.l.b16 %v5561
        %v5588 = vunpack.c.l.b16 %v5562
        %v5589 = vunpack.c.l.b16 %v5563
        %v5590 = vunpack.c.l.b16 %v5564
        %v5591 = vunpack.c.l.b16 %v5565
        %v5592 = vunpack.c.l.b16 %v5566
        %v5593 = vunpack.c.l.b16 %v5567
        %v5594 = vunpack.c.l.b16 %v5568
        %v5595 = vunpack.c.l.b16 %v5569
        %v5596 = vunpack.c.l.b16 %v5570
        %v5597 = vpack.c.b16 %v5587, %v5586
        %v5598 = vpack.c.b16 %v5589, %v5588
        %v5599 = vpack.c.b16 %v5591, %v5590
        %v5600 = vpack.c.b16 %v5593, %v5592
        %v5601 = vpack.c.b16 %v5595, %v5594
        %v5602 = vpack.c.b16 %v5596, %v5596
        %v5609 = vsel %vm530, %v5559, 0
        %v5612 = vsel %vm3382, %v5602, 0
        %5614 = vmatpush.bf16.msra.mxu0 0
        %5615 = vmatpush.bf16.msra.mxu0 0
        %5616 = vmatpush.bf16.msra.mxu0 %v5612
        %5617 = vmatpush.bf16.msra.mxu0 %v5601
        %5618 = vmatpush.bf16.msra.mxu0 %v5600
        %5619 = vmatpush.bf16.msra.mxu0 %v5599
        %5620 = vmatpush.bf16.msra.mxu0 %v5598
        %5621 = vmatpush.bf16.msra.mxu0 %v5597
        %5622 = vmatmul.bf16.gmra.mxu0 %v5609
        %v5623 = vpop.f32.mrf.mxu0
        %v5624 = vadd.f32 %v5573, %v5623
        %v5625 = vpop.f32.mrf.mxu0
        %5626 = vdwg.mxu0
        %5627 = vmax.xlane.f32.xlu0 %v5624
        %v5628 = vpop.xlane.xlu0 %5627
        %v5629 = vsub.f32 %v5624, %v5628
        %v5630 = vmul.f32 %v5629, 1.442695
        %v5631 = vpow.pop %v5630
        %5632 = vadd.xlane.f32.xlu0 %v5631
        %v5633 = vpop.xlane.xlu0 %5632
        %v5634 = vrcp.pop %v5633
        %v5635 = vmul.f32 %v5631, %v5634
        %5636 = vst [vmem:[%s436] sm:$0xff] %v5635
        %s5637 = sand.u32 %s313, 1
        %s5638 = scalar_lea.sflag [#allocation6], %s5637
        %s5639 = sand.u32 %s313, 1
        %s5640 = smul.addr %s5639, 8
        %s5641 = scalar_lea.vmem [#allocation5], %s5640
        // Predicated region
        $region73: #{tpu_custom_call.1} parent=71 // pred_check
          %p5642 = pneg %p323
        $region74: #{tpu_custom_call.1} parent=71 // pred_check_branch
          %5644 = sbr.rel (%p5642) target = $region76
        $region75: #{tpu_custom_call.1} parent=71 // pred_region
          %5646 = vsyncadd %s5638, 0
          %s5647 = smul.addr %s27, 8
          %s5648 = scalar_lea.hbm %s13, %s5647
          %s5650 = sshll.u32 %s5641, 4
          %s5651 = int_to_ptr.vmem [resolvable:$true] %s5650
          %s5652 = sshll.u32 %s5648, 4
          %s5653 = int_to_ptr.hbm [resolvable:$true] %s5652
          %5655 = dma.vmem_to_hbm [thread:$0]  %s5651, 128, %s5653, %s5638
        $region76: #{tpu_custom_call.1} parent=71 // pred_fallthru
          _
      $region72: #{tpu_custom_call.1} parent=5 // pred_fallthru
        _
      %p5656 = scmp.le.s32.totalorder 2, %s22
      // Predicated region
      $region77: #{tpu_custom_call.1} parent=5 // pred_check
        %p5657 = pneg %p5656
      $region78: #{tpu_custom_call.1} parent=5 // pred_check_branch
        %5659 = sbr.rel (%p5657) target = $region80
      $region79: #{tpu_custom_call.1} parent=5 // pred_region
        %s5660 = ssub.s32 %s22, 2
        // Predicated region
        $region81: #{tpu_custom_call.1} parent=79 // pred_check
          %p5661 = pneg %p329
        $region82: #{tpu_custom_call.1} parent=79 // pred_check_branch
          %5663 = sbr.rel (%p5661) target = $region84
        $region83: #{tpu_custom_call.1} parent=79 // pred_region
          %s5664 = sand.u32 %s314, 1
          %s5665 = scalar_lea.sflag [#allocation6], %s5664
          %s5666 = sand.u32 %s314, 1
          %s5667 = smul.addr %s5666, 8
          %s5668 = scalar_lea.vmem [#allocation5], %s5667
          %5670 = dma.done %s5665, 128
        $region84: #{tpu_custom_call.1} parent=79 // pred_fallthru
          _
      $region80: #{tpu_custom_call.1} parent=5 // pred_fallthru
        _
    $region6: #{tpu_custom_call.1} parent=1 // loop_footer
      %s26 = sadd.s32 1, %s22
    $region7: #{tpu_custom_call.1} parent=1 // loop_footer_branch
      %21 = sbr.rel target = $region3
    $region8: #{tpu_custom_call.1} parent=1 // loop_exit
      _
    %5671 = vsyncpa [#allocation6], 1
    %s5672 = scalar_lea.sflag [#allocation6], 1
    %5673 = vsyncpa %s5672, 1

</llo_original>
